<compile_context>
chip_gen: v6e
topology: v6e:2x2x1
jax: 0.10.0
libtpu: 0.0.40
codegen_flags: <defaults>
</compile_context>

<pallas_src>
import math
import jax
import jax.numpy as jnp
from jax.experimental import pallas as pl
from jax.experimental.pallas import tpu as pltpu

# Model hyper-parameters.
HIDDEN = 32            # hidden_size
NUM_EDGE_TYPES = 3     # num_edge_types
NUM_STEPS = 3          # num_steps
BATCH = 32             # graphs in the example batch
NUM_NODES = 8          # nodes per graph
GRAPHS_PER_GROUP = 16  # graphs per grid step -> 16*8 = 128 matmul rows per step


def _ggnn_kernel(nf_ref, adj_ref, w_ref, out_ref):
    """One graph-group per grid step.

    nf_ref  : (GN, H)      node features of GRAPHS_PER_GROUP graphs, row-major
    adj_ref : (E, GN, GN)  per-edge-type block-diagonal adjacency of the group
    w_ref   : (R, 4H)      packed weight/bias slab (see pack_params layout)
    out_ref : (GN, H)
    """
    H = HIDDEN
    E = NUM_EDGE_TYPES
    GN = nf_ref.shape[0]

    nf = nf_ref[...]

    # --- unpack the weight slab with static, sublane-aligned row slices ----------
    w_gru = w_ref[0:2 * H, :]              # (2H, 4H)  fused GRU gate weights
    ew    = w_ref[2 * H:3 * H, :E * H]     # (H, E*H)  edge Linear weights
    w1    = w_ref[3 * H:5 * H, :H]         # (2H, H)   out Linear(2H->H)
    w2    = w_ref[5 * H:6 * H, :H]         # (H, H)    out Linear(H->H)
    # Bias broadcasts hoisted out of the (unrolled) step loop.
    b_rz = jnp.broadcast_to(w_ref[6 * H:6 * H + 1, :2 * H], (GN, 2 * H))
    b_in = jnp.broadcast_to(w_ref[6 * H + 1:6 * H + 2, :H], (GN, H))
    b_hn = jnp.broadcast_to(w_ref[6 * H + 2:6 * H + 3, :H], (GN, H))
    b1   = jnp.broadcast_to(w_ref[6 * H + 3:6 * H + 4, :H], (GN, H))
    b2   = jnp.broadcast_to(w_ref[6 * H + 4:6 * H + 5, :H], (GN, H))

    h = nf
    for _step in range(NUM_STEPS):
        # --- message passing: one wide edge-weight dot, then per-edge-type
        #     adjacency dots accumulated directly (no sublane restack of hw) -------
        hw = jnp.dot(h, ew, preferred_element_type=jnp.float32)          # (GN, E*H)
        m = jnp.dot(adj_ref[0], hw[:, 0:H], preferred_element_type=jnp.float32)
        for e in range(1, E):
            m = m + jnp.dot(adj_ref[e], hw[:, e * H:(e + 1) * H],
                            preferred_element_type=jnp.float32)          # (GN, H)

        # --- GRUCell(input=m, hidden=h): single fused (GN, 2H) @ (2H, 4H) dot.
        #     Output columns: [r_pre | z_pre | gi_n | gh_n], r/z already summed. ---
        g = jnp.dot(jnp.concatenate([m, h], axis=1), w_gru,
                    preferred_element_type=jnp.float32)                  # (GN, 4H)
        rz = jax.nn.sigmoid(g[:, :2 * H] + b_rz)
        r = rz[:, :H]
        z = rz[:, H:2 * H]
        n = jnp.tanh(g[:, 2 * H:3 * H] + b_in + r * (g[:, 3 * H:4 * H] + b_hn))
        h = (1.0 - z) * n + z * h

    # --- out_layer: Linear(2H->H) + ReLU + Linear(H->H) --------------------------
    cat = jnp.concatenate([nf, h], axis=1)                               # (GN, 2H)
    y = jnp.maximum(jnp.dot(cat, w1, preferred_element_type=jnp.float32) + b1, 0.0)
    out_ref[...] = jnp.dot(y, w2, preferred_element_type=jnp.float32) + b2
    # TODO(synk): output last dim is H=32 (<128 lanes) -> masked store; revisit a
    # lane-packed multi-graph output layout only if the store ever becomes binding.


def ggnn_forward(node_features, edge_matrix, slab, graphs_per_group=GRAPHS_PER_GROUP):
    """node_features (B, N, H) f32, edge_matrix (B, E, N, N) f32, slab = pack_params()."""
    B, N, H = node_features.shape
    E = edge_matrix.shape[1]

    # Pad the batch to a whole number of graph-groups (zero graphs are inert).
    G = graphs_per_group
    Bp = ((B + G - 1) // G) * G
    if Bp != B:
        node_features = jnp.pad(node_features, ((0, Bp - B), (0, 0), (0, 0)))
        edge_matrix = jnp.pad(edge_matrix, ((0, Bp - B), (0, 0), (0, 0), (0, 0)))
    n_groups = Bp // G
    GN = G * N                              # matmul rows per grid step (128 at defaults)

    # Fold each group's graphs into one row-major node-feature slab.
    nf = node_features.reshape(n_groups, GN, H)

    # Per-group, per-edge-type block-diagonal adjacency:
    #   a_bd[grp, e, gi*N + i, gj*N + j] = (gi == gj) * edge_matrix[grp*G + gi, e, i, j]
    # Adjacency bytes stay linear in batch size; each grid step only DMAs its group.
    em = edge_matrix.reshape(n_groups, G, E, N, N)
    em = jnp.transpose(em, (0, 2, 1, 3, 4))                    # (ngrp, E, G, N, N)
    eye = jnp.eye(G, dtype=em.dtype)
    a_bd = (eye[None, None, :, None, :, None] *
            em[:, :, :, :, None, :]).reshape(n_groups, E, GN, GN)

    R, L = slab.shape

    out = pl.pallas_call(
        _ggnn_kernel,
        out_shape=jax.ShapeDtypeStruct((n_groups, GN, H), jnp.float32),
        grid_spec=pl.GridSpec(
            grid=(n_groups,),
            in_specs=[
                pl.BlockSpec((None, GN, H), lambda g: (g, 0, 0)),
                pl.BlockSpec((None, E, GN, GN), lambda g: (g, 0, 0, 0)),
                pl.BlockSpec((R, L), lambda g: (0, 0)),   # weight slab, resident
            ],
            out_specs=pl.BlockSpec((None, GN, H), lambda g: (g, 0, 0)),
        ),
        compiler_params=pltpu.CompilerParams(
            # Graph-groups are independent -> shards across both TensorCores on v7x.
            dimension_semantics=("parallel",)),
    )(nf, a_bd, slab)

    return out.reshape(Bp, N, H)[:B]


# --------------------------------------------------------------------------------
# Parameters: raw (per-gate / per-edge, pre-transposed for x @ W) + packed slab.
# --------------------------------------------------------------------------------
def init_params(key, hidden, num_edge_types):
    s = 1.0 / math.sqrt(hidden)
    ks = jax.random.split(key, 10)
    u = lambda k, shape: jax.random.uniform(k, shape, jnp.float32, minval=-s, maxval=s)
    return {
        "ew": u(ks[0], (num_edge_types, hidden, hidden)),   # x @ ew[e]
        "wih": u(ks[1], (3, hidden, hidden)),               # GRU gates (r, z, n), x @ W
        "whh": u(ks[2], (3, hidden, hidden)),
        "bih": u(ks[3], (3, hidden)),
        "bhh": u(ks[4], (3, hidden)),
        "w1a": u(ks[5], (hidden, hidden)),                  # Linear(2H->H): nf block
        "w1b": u(ks[6], (hidden, hidden)),                  # Linear(2H->H): h block
        "b1": u(ks[7], (hidden,)),
        "w2": u(ks[8], (hidden, hidden)),
        "b2": u(ks[9], (hidden,)),
    }


def pack_params(p):
    """Pack all weights/biases into one (R, 4H) f32 slab (single DMA, static slices).

    Row layout (H = hidden):
      [0,  2H) : W_gru (2H, 4H) = [[wih_r wih_z wih_n 0], [whh_r whh_z 0 whh_n]]
      [2H, 3H) : EW    (H, E*H) edge Linear weights, concat over edge type
      [3H, 5H) : W1    (2H, H)  out Linear(2H->H), rows = [nf block ; h block]
      [5H, 6H) : W2    (H, H)   out Linear(H->H)
      6H       : b_rz  (1, 2H)  combined r/z biases (bih + bhh)
      6H+1..+4 : b_in, b_hn, b1, b2  (1, H) each; rows padded to a multiple of 8.
    """
    E, H = p["ew"].shape[0], p["ew"].shape[1]
    lanes = 4 * H
    zeros_h = jnp.zeros((H, H), jnp.float32)
    w_gru = jnp.concatenate([
        jnp.concatenate([p["wih"][0], p["wih"][1], p["wih"][2], zeros_h], axis=1),
        jnp.concatenate([p["whh"][0], p["whh"][1], zeros_h, p["whh"][2]], axis=1),
    ], axis=0)                                                        # (2H, 4H)
    ew = jnp.concatenate([p["ew"][e] for e in range(E)], axis=1)      # (H, E*H)
    w1 = jnp.concatenate([p["w1a"], p["w1b"]], axis=0)                # (2H, H)
    b_rz = jnp.concatenate([p["bih"][0] + p["bhh"][0],
                            p["bih"][1] + p["bhh"][1]])[None, :]      # (1, 2H)

    def pad_lanes(x):
        return jnp.pad(x, ((0, 0), (0, lanes - x.shape[1])))

    rows = [pad_lanes(x) for x in
            (w_gru, ew, w1, p["w2"], b_rz,
             p["bih"][2][None, :], p["bhh"][2][None, :],
             p["b1"][None, :], p["b2"][None, :])]
    slab = jnp.concatenate(rows, axis=0)
    slab = jnp.pad(slab, ((0, (-slab.shape[0]) % 8), (0, 0)))         # sublane-align rows
    return slab


def ggnn_reference(node_features, edge_matrix, p):
    """Pure-JAX reference mirroring the PyTorch forward semantics (raw params)."""
    hi = jax.lax.Precision.HIGHEST
    h = node_features
    for _ in range(NUM_STEPS):
        m = jnp.zeros_like(h)
        for e in range(NUM_EDGE_TYPES):
            hw = jnp.einsum("bnh,hk->bnk", h, p["ew"][e], precision=hi)
            m = m + jnp.einsum("bij,bjk->bik", edge_matrix[:, e], hw, precision=hi)
        gi = [jnp.einsum("bnh,hk->bnk", m, p["wih"][g], precision=hi) + p["bih"][g]
              for g in range(3)]
        gh = [jnp.einsum("bnh,hk->bnk", h, p["whh"][g], precision=hi) + p["bhh"][g]
              for g in range(3)]
        r = jax.nn.sigmoid(gi[0] + gh[0])
        z = jax.nn.sigmoid(gi[1] + gh[1])
        n = jnp.tanh(gi[2] + r * gh[2])
        h = (1.0 - z) * n + z * h
    y = (jnp.einsum("bnh,hk->bnk", node_features, p["w1a"], precision=hi)
         + jnp.einsum("bnh,hk->bnk", h, p["w1b"], precision=hi) + p["b1"])
    y = jnp.maximum(y, 0.0)
    return jnp.einsum("bnh,hk->bnk", y, p["w2"], precision=hi) + p["b2"]


if __name__ == "__main__":
    key = jax.random.PRNGKey(0)
    k_nf, k_adj, k_par = jax.random.split(key, 3)

    B, N, H, E = BATCH, NUM_NODES, HIDDEN, NUM_EDGE_TYPES
    node_features = jax.random.normal(k_nf, (B, N, H), jnp.float32)
    # Adjacency: random 0/1 edges per edge type (dst, src), dense float32.
    edge_matrix = (jax.random.uniform(k_adj, (B, E, N, N)) < 0.3).astype(jnp.float32)

    params = init_params(k_par, H, E)
    slab = pack_params(params)

    out = ggnn_forward(node_features, edge_matrix, slab)
    out = jax.block_until_ready(out)

    ref = jax.block_until_ready(ggnn_reference(node_features, edge_matrix, params))
    assert out.shape == (B, N, H)
    max_err = jnp.max(jnp.abs(out - ref))
    assert jnp.allclose(out, ref, atol=2e-3, rtol=2e-3), f"max err {max_err}"

    print("KERNEL_OK")
</pallas_src>

<mosaic_0001>
module attributes {stable_mosaic.version = 11 : i64} {
  func.func @_ggnn_kernel(%arg0: i32, %arg1: memref<1x128x32xf32, #tpu.memory_space<vmem>>, %arg2: memref<1x3x128x128xf32, #tpu.memory_space<vmem>>, %arg3: memref<200x128xf32, #tpu.memory_space<vmem>>, %arg4: memref<1x128x32xf32, #tpu.memory_space<vmem>>) attributes {dimension_semantics = [#tpu.dimension_semantics<parallel>], iteration_bounds = array<i64: 2>, scalar_prefetch = 0 : i64, scratch_operands = 0 : i64, tpu.core_type = #tpu.core_type<tc>, window_params = [{transform_indices = @transform_0, window_bounds = array<i64: 1, 128, 32>}, {transform_indices = @transform_1, window_bounds = array<i64: 1, 3, 128, 128>}, {pipeline_mode = #tpu.pipeline_mode<synchronous>, transform_indices = @transform_2, window_bounds = array<i64: 200, 128>}, {transform_indices = @transform_3, window_bounds = array<i64: 1, 128, 32>}]} {
    %c0 = arith.constant 0 : index
    %c0_0 = arith.constant 0 : index
    %c0_1 = arith.constant 0 : index
    %0 = vector.load %arg1[%c0, %c0_0, %c0_1] : memref<1x128x32xf32, #tpu.memory_space<vmem>>, vector<1x128x32xf32>
    %1 = vector.shape_cast %0 : vector<1x128x32xf32> to vector<128x32xf32>
    %c0_2 = arith.constant 0 : index
    %c0_3 = arith.constant 0 : index
    %2 = vector.load %arg3[%c0_2, %c0_3] : memref<200x128xf32, #tpu.memory_space<vmem>>, vector<64x128xf32>
    %c64 = arith.constant 64 : index
    %c0_4 = arith.constant 0 : index
    %3 = vector.load %arg3[%c64, %c0_4] : memref<200x128xf32, #tpu.memory_space<vmem>>, vector<32x96xf32>
    %c96 = arith.constant 96 : index
    %c0_5 = arith.constant 0 : index
    %4 = vector.load %arg3[%c96, %c0_5] : memref<200x128xf32, #tpu.memory_space<vmem>>, vector<64x32xf32>
    %c160 = arith.constant 160 : index
    %c0_6 = arith.constant 0 : index
    %5 = vector.load %arg3[%c160, %c0_6] : memref<200x128xf32, #tpu.memory_space<vmem>>, vector<32x32xf32>
    %c192 = arith.constant 192 : index
    %c0_7 = arith.constant 0 : index
    %6 = vector.load %arg3[%c192, %c0_7] : memref<200x128xf32, #tpu.memory_space<vmem>>, vector<1x64xf32>
    %7 = vector.shape_cast %6 : vector<1x64xf32> to vector<1x64xf32>
    %8 = vector.broadcast %7 : vector<1x64xf32> to vector<128x64xf32>
    %c193 = arith.constant 193 : index
    %c0_8 = arith.constant 0 : index
    %9 = vector.load %arg3[%c193, %c0_8] : memref<200x128xf32, #tpu.memory_space<vmem>>, vector<1x32xf32>
    %10 = vector.shape_cast %9 : vector<1x32xf32> to vector<1x32xf32>
    %11 = vector.broadcast %10 : vector<1x32xf32> to vector<128x32xf32>
    %c194 = arith.constant 194 : index
    %c0_9 = arith.constant 0 : index
    %12 = vector.load %arg3[%c194, %c0_9] : memref<200x128xf32, #tpu.memory_space<vmem>>, vector<1x32xf32>
    %13 = vector.shape_cast %12 : vector<1x32xf32> to vector<1x32xf32>
    %14 = vector.broadcast %13 : vector<1x32xf32> to vector<128x32xf32>
    %c195 = arith.constant 195 : index
    %c0_10 = arith.constant 0 : index
    %15 = vector.load %arg3[%c195, %c0_10] : memref<200x128xf32, #tpu.memory_space<vmem>>, vector<1x32xf32>
    %16 = vector.shape_cast %15 : vector<1x32xf32> to vector<1x32xf32>
    %17 = vector.broadcast %16 : vector<1x32xf32> to vector<128x32xf32>
    %c196 = arith.constant 196 : index
    %c0_11 = arith.constant 0 : index
    %18 = vector.load %arg3[%c196, %c0_11] : memref<200x128xf32, #tpu.memory_space<vmem>>, vector<1x32xf32>
    %19 = vector.shape_cast %18 : vector<1x32xf32> to vector<1x32xf32>
    %20 = vector.broadcast %19 : vector<1x32xf32> to vector<128x32xf32>
    %cst = arith.constant dense<0.000000e+00> : vector<128x96xf32>
    %21 = tpu.matmul %1, %3, %cst {dimension_numbers = #tpu.dot_dimension_numbers<[1], [0], [0], [1], [0, 0, 1, 1], [], []>} : vector<128x32xf32>, vector<32x96xf32>, vector<128x96xf32> -> vector<128x96xf32>
    %c0_12 = arith.constant 0 : index
    %c0_13 = arith.constant 0 : index
    %c0_14 = arith.constant 0 : index
    %c0_15 = arith.constant 0 : index
    %22 = vector.load %arg2[%c0_12, %c0_13, %c0_14, %c0_15] : memref<1x3x128x128xf32, #tpu.memory_space<vmem>>, vector<1x1x128x128xf32>
    %23 = vector.shape_cast %22 : vector<1x1x128x128xf32> to vector<128x128xf32>
    %24 = vector.extract_strided_slice %21 {offsets = [0, 0], sizes = [128, 32], strides = [1, 1]} : vector<128x96xf32> to vector<128x32xf32>
    %cst_16 = arith.constant dense<0.000000e+00> : vector<128x32xf32>
    %25 = tpu.matmul %23, %24, %cst_16 {dimension_numbers = #tpu.dot_dimension_numbers<[1], [0], [0], [1], [0, 0, 1, 1], [], []>} : vector<128x128xf32>, vector<128x32xf32>, vector<128x32xf32> -> vector<128x32xf32>
    %c0_17 = arith.constant 0 : index
    %c1 = arith.constant 1 : index
    %c0_18 = arith.constant 0 : index
    %c0_19 = arith.constant 0 : index
    %26 = vector.load %arg2[%c0_17, %c1, %c0_18, %c0_19] : memref<1x3x128x128xf32, #tpu.memory_space<vmem>>, vector<1x1x128x128xf32>
    %27 = vector.shape_cast %26 : vector<1x1x128x128xf32> to vector<128x128xf32>
    %28 = vector.extract_strided_slice %21 {offsets = [0, 32], sizes = [128, 32], strides = [1, 1]} : vector<128x96xf32> to vector<128x32xf32>
    %cst_20 = arith.constant dense<0.000000e+00> : vector<128x32xf32>
    %29 = tpu.matmul %27, %28, %cst_20 {dimension_numbers = #tpu.dot_dimension_numbers<[1], [0], [0], [1], [0, 0, 1, 1], [], []>} : vector<128x128xf32>, vector<128x32xf32>, vector<128x32xf32> -> vector<128x32xf32>
    %30 = arith.addf %25, %29 : vector<128x32xf32>
    %c0_21 = arith.constant 0 : index
    %c2 = arith.constant 2 : index
    %c0_22 = arith.constant 0 : index
    %c0_23 = arith.constant 0 : index
    %31 = vector.load %arg2[%c0_21, %c2, %c0_22, %c0_23] : memref<1x3x128x128xf32, #tpu.memory_space<vmem>>, vector<1x1x128x128xf32>
    %32 = vector.shape_cast %31 : vector<1x1x128x128xf32> to vector<128x128xf32>
    %33 = vector.extract_strided_slice %21 {offsets = [0, 64], sizes = [128, 32], strides = [1, 1]} : vector<128x96xf32> to vector<128x32xf32>
    %cst_24 = arith.constant dense<0.000000e+00> : vector<128x32xf32>
    %34 = tpu.matmul %32, %33, %cst_24 {dimension_numbers = #tpu.dot_dimension_numbers<[1], [0], [0], [1], [0, 0, 1, 1], [], []>} : vector<128x128xf32>, vector<128x32xf32>, vector<128x32xf32> -> vector<128x32xf32>
    %35 = arith.addf %30, %34 : vector<128x32xf32>
    %36 = tpu.concatenate %35, %1 in 1 : vector<128x32xf32>, vector<128x32xf32> -> vector<128x64xf32>
    %cst_25 = arith.constant dense<0.000000e+00> : vector<128x128xf32>
    %37 = tpu.matmul %36, %2, %cst_25 {dimension_numbers = #tpu.dot_dimension_numbers<[1], [0], [0], [1], [0, 0, 1, 1], [], []>} : vector<128x64xf32>, vector<64x128xf32>, vector<128x128xf32> -> vector<128x128xf32>
    %38 = vector.extract_strided_slice %37 {offsets = [0, 0], sizes = [128, 64], strides = [1, 1]} : vector<128x128xf32> to vector<128x64xf32>
    %39 = arith.addf %38, %8 : vector<128x64xf32>
    %40 = arith.negf %39 : vector<128x64xf32>
    %41 = math.exp %40 : vector<128x64xf32>
    %cst_26 = arith.constant 1.000000e+00 : f32
    %42 = vector.broadcast %cst_26 : f32 to vector<128x64xf32>
    %43 = arith.addf %42, %41 : vector<128x64xf32>
    %44 = arith.divf %42, %43 : vector<128x64xf32>
    %45 = vector.extract_strided_slice %44 {offsets = [0, 0], sizes = [128, 32], strides = [1, 1]} : vector<128x64xf32> to vector<128x32xf32>
    %46 = vector.extract_strided_slice %44 {offsets = [0, 32], sizes = [128, 32], strides = [1, 1]} : vector<128x64xf32> to vector<128x32xf32>
    %47 = vector.extract_strided_slice %37 {offsets = [0, 64], sizes = [128, 32], strides = [1, 1]} : vector<128x128xf32> to vector<128x32xf32>
    %48 = arith.addf %47, %11 : vector<128x32xf32>
    %49 = vector.extract_strided_slice %37 {offsets = [0, 96], sizes = [128, 32], strides = [1, 1]} : vector<128x128xf32> to vector<128x32xf32>
    %50 = arith.addf %49, %14 : vector<128x32xf32>
    %51 = arith.mulf %45, %50 : vector<128x32xf32>
    %52 = arith.addf %48, %51 : vector<128x32xf32>
    %53 = math.tanh %52 : vector<128x32xf32>
    %cst_27 = arith.constant 1.000000e+00 : f32
    %54 = vector.broadcast %cst_27 : f32 to vector<128x32xf32>
    %55 = arith.subf %54, %46 : vector<128x32xf32>
    %56 = arith.mulf %55, %53 : vector<128x32xf32>
    %57 = arith.mulf %46, %1 : vector<128x32xf32>
    %58 = arith.addf %56, %57 : vector<128x32xf32>
    %cst_28 = arith.constant dense<0.000000e+00> : vector<128x96xf32>
    %59 = tpu.matmul %58, %3, %cst_28 {dimension_numbers = #tpu.dot_dimension_numbers<[1], [0], [0], [1], [0, 0, 1, 1], [], []>} : vector<128x32xf32>, vector<32x96xf32>, vector<128x96xf32> -> vector<128x96xf32>
    %c0_29 = arith.constant 0 : index
    %c0_30 = arith.constant 0 : index
    %c0_31 = arith.constant 0 : index
    %c0_32 = arith.constant 0 : index
    %60 = vector.load %arg2[%c0_29, %c0_30, %c0_31, %c0_32] : memref<1x3x128x128xf32, #tpu.memory_space<vmem>>, vector<1x1x128x128xf32>
    %61 = vector.shape_cast %60 : vector<1x1x128x128xf32> to vector<128x128xf32>
    %62 = vector.extract_strided_slice %59 {offsets = [0, 0], sizes = [128, 32], strides = [1, 1]} : vector<128x96xf32> to vector<128x32xf32>
    %cst_33 = arith.constant dense<0.000000e+00> : vector<128x32xf32>
    %63 = tpu.matmul %61, %62, %cst_33 {dimension_numbers = #tpu.dot_dimension_numbers<[1], [0], [0], [1], [0, 0, 1, 1], [], []>} : vector<128x128xf32>, vector<128x32xf32>, vector<128x32xf32> -> vector<128x32xf32>
    %c0_34 = arith.constant 0 : index
    %c1_35 = arith.constant 1 : index
    %c0_36 = arith.constant 0 : index
    %c0_37 = arith.constant 0 : index
    %64 = vector.load %arg2[%c0_34, %c1_35, %c0_36, %c0_37] : memref<1x3x128x128xf32, #tpu.memory_space<vmem>>, vector<1x1x128x128xf32>
    %65 = vector.shape_cast %64 : vector<1x1x128x128xf32> to vector<128x128xf32>
    %66 = vector.extract_strided_slice %59 {offsets = [0, 32], sizes = [128, 32], strides = [1, 1]} : vector<128x96xf32> to vector<128x32xf32>
    %cst_38 = arith.constant dense<0.000000e+00> : vector<128x32xf32>
    %67 = tpu.matmul %65, %66, %cst_38 {dimension_numbers = #tpu.dot_dimension_numbers<[1], [0], [0], [1], [0, 0, 1, 1], [], []>} : vector<128x128xf32>, vector<128x32xf32>, vector<128x32xf32> -> vector<128x32xf32>
    %68 = arith.addf %63, %67 : vector<128x32xf32>
    %c0_39 = arith.constant 0 : index
    %c2_40 = arith.constant 2 : index
    %c0_41 = arith.constant 0 : index
    %c0_42 = arith.constant 0 : index
    %69 = vector.load %arg2[%c0_39, %c2_40, %c0_41, %c0_42] : memref<1x3x128x128xf32, #tpu.memory_space<vmem>>, vector<1x1x128x128xf32>
    %70 = vector.shape_cast %69 : vector<1x1x128x128xf32> to vector<128x128xf32>
    %71 = vector.extract_strided_slice %59 {offsets = [0, 64], sizes = [128, 32], strides = [1, 1]} : vector<128x96xf32> to vector<128x32xf32>
    %cst_43 = arith.constant dense<0.000000e+00> : vector<128x32xf32>
    %72 = tpu.matmul %70, %71, %cst_43 {dimension_numbers = #tpu.dot_dimension_numbers<[1], [0], [0], [1], [0, 0, 1, 1], [], []>} : vector<128x128xf32>, vector<128x32xf32>, vector<128x32xf32> -> vector<128x32xf32>
    %73 = arith.addf %68, %72 : vector<128x32xf32>
    %74 = tpu.concatenate %73, %58 in 1 : vector<128x32xf32>, vector<128x32xf32> -> vector<128x64xf32>
    %cst_44 = arith.constant dense<0.000000e+00> : vector<128x128xf32>
    %75 = tpu.matmul %74, %2, %cst_44 {dimension_numbers = #tpu.dot_dimension_numbers<[1], [0], [0], [1], [0, 0, 1, 1], [], []>} : vector<128x64xf32>, vector<64x128xf32>, vector<128x128xf32> -> vector<128x128xf32>
    %76 = vector.extract_strided_slice %75 {offsets = [0, 0], sizes = [128, 64], strides = [1, 1]} : vector<128x128xf32> to vector<128x64xf32>
    %77 = arith.addf %76, %8 : vector<128x64xf32>
    %78 = arith.negf %77 : vector<128x64xf32>
    %79 = math.exp %78 : vector<128x64xf32>
    %cst_45 = arith.constant 1.000000e+00 : f32
    %80 = vector.broadcast %cst_45 : f32 to vector<128x64xf32>
    %81 = arith.addf %80, %79 : vector<128x64xf32>
    %82 = arith.divf %80, %81 : vector<128x64xf32>
    %83 = vector.extract_strided_slice %82 {offsets = [0, 0], sizes = [128, 32], strides = [1, 1]} : vector<128x64xf32> to vector<128x32xf32>
    %84 = vector.extract_strided_slice %82 {offsets = [0, 32], sizes = [128, 32], strides = [1, 1]} : vector<128x64xf32> to vector<128x32xf32>
    %85 = vector.extract_strided_slice %75 {offsets = [0, 64], sizes = [128, 32], strides = [1, 1]} : vector<128x128xf32> to vector<128x32xf32>
    %86 = arith.addf %85, %11 : vector<128x32xf32>
    %87 = vector.extract_strided_slice %75 {offsets = [0, 96], sizes = [128, 32], strides = [1, 1]} : vector<128x128xf32> to vector<128x32xf32>
    %88 = arith.addf %87, %14 : vector<128x32xf32>
    %89 = arith.mulf %83, %88 : vector<128x32xf32>
    %90 = arith.addf %86, %89 : vector<128x32xf32>
    %91 = math.tanh %90 : vector<128x32xf32>
    %cst_46 = arith.constant 1.000000e+00 : f32
    %92 = vector.broadcast %cst_46 : f32 to vector<128x32xf32>
    %93 = arith.subf %92, %84 : vector<128x32xf32>
    %94 = arith.mulf %93, %91 : vector<128x32xf32>
    %95 = arith.mulf %84, %58 : vector<128x32xf32>
    %96 = arith.addf %94, %95 : vector<128x32xf32>
    %cst_47 = arith.constant dense<0.000000e+00> : vector<128x96xf32>
    %97 = tpu.matmul %96, %3, %cst_47 {dimension_numbers = #tpu.dot_dimension_numbers<[1], [0], [0], [1], [0, 0, 1, 1], [], []>} : vector<128x32xf32>, vector<32x96xf32>, vector<128x96xf32> -> vector<128x96xf32>
    %c0_48 = arith.constant 0 : index
    %c0_49 = arith.constant 0 : index
    %c0_50 = arith.constant 0 : index
    %c0_51 = arith.constant 0 : index
    %98 = vector.load %arg2[%c0_48, %c0_49, %c0_50, %c0_51] : memref<1x3x128x128xf32, #tpu.memory_space<vmem>>, vector<1x1x128x128xf32>
    %99 = vector.shape_cast %98 : vector<1x1x128x128xf32> to vector<128x128xf32>
    %100 = vector.extract_strided_slice %97 {offsets = [0, 0], sizes = [128, 32], strides = [1, 1]} : vector<128x96xf32> to vector<128x32xf32>
    %cst_52 = arith.constant dense<0.000000e+00> : vector<128x32xf32>
    %101 = tpu.matmul %99, %100, %cst_52 {dimension_numbers = #tpu.dot_dimension_numbers<[1], [0], [0], [1], [0, 0, 1, 1], [], []>} : vector<128x128xf32>, vector<128x32xf32>, vector<128x32xf32> -> vector<128x32xf32>
    %c0_53 = arith.constant 0 : index
    %c1_54 = arith.constant 1 : index
    %c0_55 = arith.constant 0 : index
    %c0_56 = arith.constant 0 : index
    %102 = vector.load %arg2[%c0_53, %c1_54, %c0_55, %c0_56] : memref<1x3x128x128xf32, #tpu.memory_space<vmem>>, vector<1x1x128x128xf32>
    %103 = vector.shape_cast %102 : vector<1x1x128x128xf32> to vector<128x128xf32>
    %104 = vector.extract_strided_slice %97 {offsets = [0, 32], sizes = [128, 32], strides = [1, 1]} : vector<128x96xf32> to vector<128x32xf32>
    %cst_57 = arith.constant dense<0.000000e+00> : vector<128x32xf32>
    %105 = tpu.matmul %103, %104, %cst_57 {dimension_numbers = #tpu.dot_dimension_numbers<[1], [0], [0], [1], [0, 0, 1, 1], [], []>} : vector<128x128xf32>, vector<128x32xf32>, vector<128x32xf32> -> vector<128x32xf32>
    %106 = arith.addf %101, %105 : vector<128x32xf32>
    %c0_58 = arith.constant 0 : index
    %c2_59 = arith.constant 2 : index
    %c0_60 = arith.constant 0 : index
    %c0_61 = arith.constant 0 : index
    %107 = vector.load %arg2[%c0_58, %c2_59, %c0_60, %c0_61] : memref<1x3x128x128xf32, #tpu.memory_space<vmem>>, vector<1x1x128x128xf32>
    %108 = vector.shape_cast %107 : vector<1x1x128x128xf32> to vector<128x128xf32>
    %109 = vector.extract_strided_slice %97 {offsets = [0, 64], sizes = [128, 32], strides = [1, 1]} : vector<128x96xf32> to vector<128x32xf32>
    %cst_62 = arith.constant dense<0.000000e+00> : vector<128x32xf32>
    %110 = tpu.matmul %108, %109, %cst_62 {dimension_numbers = #tpu.dot_dimension_numbers<[1], [0], [0], [1], [0, 0, 1, 1], [], []>} : vector<128x128xf32>, vector<128x32xf32>, vector<128x32xf32> -> vector<128x32xf32>
    %111 = arith.addf %106, %110 : vector<128x32xf32>
    %112 = tpu.concatenate %111, %96 in 1 : vector<128x32xf32>, vector<128x32xf32> -> vector<128x64xf32>
    %cst_63 = arith.constant dense<0.000000e+00> : vector<128x128xf32>
    %113 = tpu.matmul %112, %2, %cst_63 {dimension_numbers = #tpu.dot_dimension_numbers<[1], [0], [0], [1], [0, 0, 1, 1], [], []>} : vector<128x64xf32>, vector<64x128xf32>, vector<128x128xf32> -> vector<128x128xf32>
    %114 = vector.extract_strided_slice %113 {offsets = [0, 0], sizes = [128, 64], strides = [1, 1]} : vector<128x128xf32> to vector<128x64xf32>
    %115 = arith.addf %114, %8 : vector<128x64xf32>
    %116 = arith.negf %115 : vector<128x64xf32>
    %117 = math.exp %116 : vector<128x64xf32>
    %cst_64 = arith.constant 1.000000e+00 : f32
    %118 = vector.broadcast %cst_64 : f32 to vector<128x64xf32>
    %119 = arith.addf %118, %117 : vector<128x64xf32>
    %120 = arith.divf %118, %119 : vector<128x64xf32>
    %121 = vector.extract_strided_slice %120 {offsets = [0, 0], sizes = [128, 32], strides = [1, 1]} : vector<128x64xf32> to vector<128x32xf32>
    %122 = vector.extract_strided_slice %120 {offsets = [0, 32], sizes = [128, 32], strides = [1, 1]} : vector<128x64xf32> to vector<128x32xf32>
    %123 = vector.extract_strided_slice %113 {offsets = [0, 64], sizes = [128, 32], strides = [1, 1]} : vector<128x128xf32> to vector<128x32xf32>
    %124 = arith.addf %123, %11 : vector<128x32xf32>
    %125 = vector.extract_strided_slice %113 {offsets = [0, 96], sizes = [128, 32], strides = [1, 1]} : vector<128x128xf32> to vector<128x32xf32>
    %126 = arith.addf %125, %14 : vector<128x32xf32>
    %127 = arith.mulf %121, %126 : vector<128x32xf32>
    %128 = arith.addf %124, %127 : vector<128x32xf32>
    %129 = math.tanh %128 : vector<128x32xf32>
    %cst_65 = arith.constant 1.000000e+00 : f32
    %130 = vector.broadcast %cst_65 : f32 to vector<128x32xf32>
    %131 = arith.subf %130, %122 : vector<128x32xf32>
    %132 = arith.mulf %131, %129 : vector<128x32xf32>
    %133 = arith.mulf %122, %96 : vector<128x32xf32>
    %134 = arith.addf %132, %133 : vector<128x32xf32>
    %135 = tpu.concatenate %1, %134 in 1 : vector<128x32xf32>, vector<128x32xf32> -> vector<128x64xf32>
    %cst_66 = arith.constant dense<0.000000e+00> : vector<128x32xf32>
    %136 = tpu.matmul %135, %4, %cst_66 {dimension_numbers = #tpu.dot_dimension_numbers<[1], [0], [0], [1], [0, 0, 1, 1], [], []>} : vector<128x64xf32>, vector<64x32xf32>, vector<128x32xf32> -> vector<128x32xf32>
    %137 = arith.addf %136, %17 : vector<128x32xf32>
    %cst_67 = arith.constant 0.000000e+00 : f32
    %138 = vector.broadcast %cst_67 : f32 to vector<128x32xf32>
    %139 = arith.maximumf %137, %138 : vector<128x32xf32>
    %cst_68 = arith.constant dense<0.000000e+00> : vector<128x32xf32>
    %140 = tpu.matmul %139, %5, %cst_68 {dimension_numbers = #tpu.dot_dimension_numbers<[1], [0], [0], [1], [0, 0, 1, 1], [], []>} : vector<128x32xf32>, vector<32x32xf32>, vector<128x32xf32> -> vector<128x32xf32>
    %141 = arith.addf %140, %20 : vector<128x32xf32>
    %c0_69 = arith.constant 0 : index
    %c0_70 = arith.constant 0 : index
    %c0_71 = arith.constant 0 : index
    %142 = vector.load %arg4[%c0_69, %c0_70, %c0_71] : memref<1x128x32xf32, #tpu.memory_space<vmem>>, vector<1x128x32xf32>
    %143 = vector.shape_cast %142 : vector<1x128x32xf32> to vector<128x32xf32>
    %144 = vector.shape_cast %141 : vector<128x32xf32> to vector<1x128x32xf32>
    tpu.vector_store %arg4[%c0_69, %c0_70, %c0_71], %144 {strides = array<i32>} : memref<1x128x32xf32, #tpu.memory_space<vmem>>, vector<1x128x32xf32>,
    return
  }
  func.func @transform_0(%arg0: i32) -> (i32, i32, i32) {
    %c0_i32 = arith.constant 0 : i32
    %c0_i32_0 = arith.constant 0 : i32
    %c0_i32_1 = arith.constant 0 : i32
    return %arg0, %c0_i32, %c0_i32_0 : i32, i32, i32
  }
  func.func @transform_1(%arg0: i32) -> (i32, i32, i32, i32) {
    %c0_i32 = arith.constant 0 : i32
    %c0_i32_0 = arith.constant 0 : i32
    %c0_i32_1 = arith.constant 0 : i32
    %c0_i32_2 = arith.constant 0 : i32
    return %arg0, %c0_i32, %c0_i32_0, %c0_i32_1 : i32, i32, i32, i32
  }
  func.func @transform_2(%arg0: i32) -> (i32, i32) {
    %c0_i32 = arith.constant 0 : i32
    %c0_i32_0 = arith.constant 0 : i32
    %c0_i32_1 = arith.constant 0 : i32
    return %c0_i32, %c0_i32_0 : i32, i32
  }
  func.func @transform_3(%arg0: i32) -> (i32, i32, i32) {
    %c0_i32 = arith.constant 0 : i32
    %c0_i32_0 = arith.constant 0 : i32
    %c0_i32_1 = arith.constant 0 : i32
    return %arg0, %c0_i32, %c0_i32_0 : i32, i32, i32
  }
}

</mosaic_0001>

<llo_original>
// kernel: tpu_custom_call.1
$region0: #{tpu_custom_call.1}
  #allocation0 [shape = 'u32[]', space=smem, size = 0x4, offset = 0x4, fixed_abs, tag = 'smem constant byte address 0x4 - core index']
  #allocation1 [shape = 'u32[144,128]{1,0:T(1,128)}', space=vmem, size = 0x12000, scoped, tag = 'internal scratch']
  %s0 = inlined_call_operand.vmem [shape: f32[2,128,32], index: 0, kind: input, shape index: {}]
  %s1 = inlined_call_operand.hbm [shape: f32[2,3,128,128], index: 1, kind: input, shape index: {}]
  %s2 = inlined_call_operand.vmem [shape: f32[200,128], index: 2, kind: input, shape index: {}]
  %s3 = inlined_call_operand.vmem [shape: f32[2,128,32], index: 3, kind: output, shape index: {}]
  %s4 = sld [smem:[#allocation0]]
  $region49: #{tpu_custom_call.1} parent=0
    _
  %s6 = ssub.s32 1, %s4
  %s7 = scalar_select 0, %s6, %s4
  $region1: #{tpu_custom_call.1} parent=0
    #allocation2 [shape = 'u8[393216]{0}', space=vmem, size = 0x60000, scoped, tag = 'input window, operand 1']
    #allocation3 [shape = 's32[2]{0}', space=sflag, size = 0x8, scoped, tag = 'scoped memory for tpu_custom_call.1']
    %8 = vsyncpa [#allocation3], 0
    %s9 = scalar_lea.sflag [#allocation3], 1
    %10 = vsyncpa %s9, 0
    loop: start=0, step=1, limit=4
    $region2: #{tpu_custom_call.1} parent=1 // loop_pre_header
      _
    $region3: #{tpu_custom_call.1} parent=1 // loop_header
      %s12 = sphi 0, %s16
      %p13 = scmp.ge.s32.totalorder %s12, 4
      %s22 = sphi 0, %s24
      %s25 = sphi 0, %s22
      %s26 = sphi 0, %s25
      %s42 = sphi 0, %s26
      %s48 = sphi 0, %s50
      %s51 = sphi 0, %s48
      %s52 = sphi 0, %s51
      %s68 = sphi 0, %s52
      %s72 = sphi 0, %s72
      %s74 = sphi 0, %s72
      %s75 = sphi 0, %s74
      %s89 = sphi 0, %s75
      %s95 = sphi 0, %s97
      %s98 = sphi 0, %s95
      %s99 = sphi 0, %s98
      %s115 = sphi 0, %s99
    $region4: #{tpu_custom_call.1} parent=1 // loop_header_branch
      %15 = sbr.rel (%p13) target = $region8
    $region5: #{tpu_custom_call.1} parent=1 // loop_body
      %s17 = ssub.s32 %s12, 1
      %s18 = ssub.s32 %s12, 2
      %s19 = sadd.s32 %s12, 1
      %s20 = ssub.s32 %s12, %s19
      %p21 = scmp.eq.s32.totalorder %s20, 0
      %s23 = sadd.s32 %s22, 1
      %s24 = scalar_select %p21, %s22, %s23
      %p27 = pneg %p21
      %p28 = scmp.eq.s32.totalorder %s12, 1
      %p29 = por %p27, %p28
      %p30 = scmp.ne.s32.totalorder %s22, %s25
      %p31 = scmp.eq.s32.totalorder %s12, 0
      %p32 = por %p30, %p31
      %p33 = scmp.ne.s32.totalorder %s22, %s25
      %p34 = scmp.eq.s32.totalorder %s17, 1
      %p35 = por %p33, %p34
      %p36 = scmp.ne.s32.totalorder %s25, %s26
      %p37 = scmp.eq.s32.totalorder %s17, 0
      %p38 = por %p36, %p37
      %p39 = scmp.ne.s32.totalorder %s25, %s26
      %p40 = scmp.eq.s32.totalorder %s18, 1
      %p41 = por %p39, %p40
      %p43 = scmp.ne.s32.totalorder %s26, %s42
      %p44 = scmp.eq.s32.totalorder %s18, 0
      %p45 = por %p43, %p44
      %s46 = ssub.s32 %s12, %s19
      %p47 = scmp.eq.s32.totalorder %s46, 0
      %s49 = sadd.s32 %s48, 1
      %s50 = scalar_select %p47, %s48, %s49
      %p53 = pneg %p47
      %p54 = scmp.eq.s32.totalorder %s12, 1
      %p55 = por %p53, %p54
      %p56 = scmp.ne.s32.totalorder %s48, %s51
      %p57 = scmp.eq.s32.totalorder %s12, 0
      %p58 = por %p56, %p57
      %p59 = scmp.ne.s32.totalorder %s48, %s51
      %p60 = scmp.eq.s32.totalorder %s17, 1
      %p61 = por %p59, %p60
      %p62 = scmp.ne.s32.totalorder %s51, %s52
      %p63 = scmp.eq.s32.totalorder %s17, 0
      %p64 = por %p62, %p63
      %p65 = scmp.ne.s32.totalorder %s51, %s52
      %p66 = scmp.eq.s32.totalorder %s18, 1
      %p67 = por %p65, %p66
      %p69 = scmp.ne.s32.totalorder %s52, %s68
      %p70 = scmp.eq.s32.totalorder %s18, 0
      %p71 = por %p69, %p70
      %s73 = sadd.s32 %s72, 1
      %p76 = scmp.eq.s32.totalorder %s12, 1
      %p77 = scmp.ne.s32.totalorder %s72, %s74
      %p78 = scmp.eq.s32.totalorder %s12, 0
      %p79 = por %p77, %p78
      %p80 = scmp.ne.s32.totalorder %s72, %s74
      %p81 = scmp.eq.s32.totalorder %s17, 1
      %p82 = por %p80, %p81
      %p83 = scmp.ne.s32.totalorder %s74, %s75
      %p84 = scmp.eq.s32.totalorder %s17, 0
      %p85 = por %p83, %p84
      %p86 = scmp.ne.s32.totalorder %s74, %s75
      %p87 = scmp.eq.s32.totalorder %s18, 1
      %p88 = por %p86, %p87
      %p90 = scmp.ne.s32.totalorder %s75, %s89
      %p91 = scmp.eq.s32.totalorder %s18, 0
      %p92 = por %p90, %p91
      %s93 = ssub.s32 %s12, %s19
      %p94 = scmp.eq.s32.totalorder %s93, 0
      %s96 = sadd.s32 %s95, 1
      %s97 = scalar_select %p94, %s95, %s96
      %p100 = pneg %p94
      %p101 = scmp.eq.s32.totalorder %s12, 1
      %p102 = por %p100, %p101
      %p103 = scmp.ne.s32.totalorder %s95, %s98
      %p104 = scmp.eq.s32.totalorder %s12, 0
      %p105 = por %p103, %p104
      %p106 = scmp.ne.s32.totalorder %s95, %s98
      %p107 = scmp.eq.s32.totalorder %s17, 1
      %p108 = por %p106, %p107
      %p109 = scmp.ne.s32.totalorder %s98, %s99
      %p110 = scmp.eq.s32.totalorder %s17, 0
      %p111 = por %p109, %p110
      %p112 = scmp.ne.s32.totalorder %s98, %s99
      %p113 = scmp.eq.s32.totalorder %s18, 1
      %p114 = por %p112, %p113
      %p116 = scmp.ne.s32.totalorder %s99, %s115
      %p117 = scmp.eq.s32.totalorder %s18, 0
      %p118 = por %p116, %p117
      %p119 = scmp.le.s32.totalorder 1, %s12
      %p120 = scmp.lt.s32.totalorder %s12, 3
      %p121 = pnand %p119, %p120
      %p122 = pneg %p121
      // Predicated region
      $region9: #{tpu_custom_call.1} parent=5 // pred_check
        _
      $region10: #{tpu_custom_call.1} parent=5 // pred_check_branch
        %124 = sbr.rel (%p121) target = $region12
      $region11: #{tpu_custom_call.1} parent=5 // pred_region
        %s125 = ssub.s32 %s12, 1
        // Predicated region
        $region13: #{tpu_custom_call.1} parent=11 // pred_check
          %p126 = pneg %p85
        $region14: #{tpu_custom_call.1} parent=11 // pred_check_branch
          %128 = sbr.rel (%p126) target = $region16
        $region15: #{tpu_custom_call.1} parent=11 // pred_region
          _
        $region16: #{tpu_custom_call.1} parent=11 // pred_fallthru
          _
      $region12: #{tpu_custom_call.1} parent=5 // pred_fallthru
        _
      %p129 = scmp.lt.s32.totalorder %s12, 2
      // Predicated region
      $region17: #{tpu_custom_call.1} parent=5 // pred_check
        %p130 = pneg %p129
      $region18: #{tpu_custom_call.1} parent=5 // pred_check_branch
        %132 = sbr.rel (%p130) target = $region20
      $region19: #{tpu_custom_call.1} parent=5 // pred_region
        // Predicated region
        $region21: #{tpu_custom_call.1} parent=19 // pred_check
          %p133 = pneg %p32
        $region22: #{tpu_custom_call.1} parent=19 // pred_check_branch
          %135 = sbr.rel (%p133) target = $region24
        $region23: #{tpu_custom_call.1} parent=19 // pred_region
          %p136 = scmp.lt.s32.totalorder %s12, 1
          %s137 = scalar_select %p136, %s12, 1
          %s138 = smul.addr %s137, 16
          %s139 = smul.addr %s138, 8
          %s140 = scalar_lea.vmem %s0, %s139
        $region24: #{tpu_custom_call.1} parent=19 // pred_fallthru
          _
        // Predicated region
        $region25: #{tpu_custom_call.1} parent=19 // pred_check
          %p141 = pneg %p58
        $region26: #{tpu_custom_call.1} parent=19 // pred_check_branch
          %143 = sbr.rel (%p141) target = $region28
        $region27: #{tpu_custom_call.1} parent=19 // pred_region
          %s144 = sand.u32 %s48, 1
          %s145 = scalar_lea.sflag [#allocation3], %s144
          %s146 = sand.u32 %s48, 1
          %s147 = smul.addr %s146, 384
          %s148 = scalar_lea.vmem [#allocation2], %s147
          %s150 = ssub.s32 6144, 6144
          %151 = vsyncadd %s145, %s150
          %s152 = smul.addr %s12, 48
          %s153 = smul.addr %s152, 128
          %s154 = scalar_lea.hbm %s1, %s153
          %s155 = sshll.u32 %s148, 4
          %s156 = int_to_ptr.vmem [resolvable:$true] %s155
          %161 = dma.hbm_to_vmem [thread:$0]  %s154, 6144, %s156, %s145, 128, 128, 8
        $region28: #{tpu_custom_call.1} parent=19 // pred_fallthru
          _
      $region20: #{tpu_custom_call.1} parent=5 // pred_fallthru
        _
      %p162 = scmp.le.s32.totalorder 1, %s12
      %p163 = scmp.lt.s32.totalorder %s12, 3
      %p164 = pnand %p162, %p163
      %p165 = pneg %p164
      // Predicated region
      $region29: #{tpu_custom_call.1} parent=5 // pred_check
        _
      $region30: #{tpu_custom_call.1} parent=5 // pred_check_branch
        %167 = sbr.rel (%p164) target = $region32
      $region31: #{tpu_custom_call.1} parent=5 // pred_region
        %s168 = ssub.s32 %s12, 1
        %s169 = sand.u32 %s51, 1
        %s170 = scalar_lea.sflag [#allocation3], %s169
        %s171 = sand.u32 %s51, 1
        %s172 = smul.addr %s171, 384
        %s173 = scalar_lea.vmem [#allocation2], %s172
        // Predicated region
        $region33: #{tpu_custom_call.1} parent=31 // pred_check
          %p174 = pneg %p64
        $region34: #{tpu_custom_call.1} parent=31 // pred_check_branch
          %176 = sbr.rel (%p174) target = $region36
        $region35: #{tpu_custom_call.1} parent=31 // pred_region
          %177 = dma.done %s170, 6144
        $region36: #{tpu_custom_call.1} parent=31 // pred_fallthru
          _
        %p178 = scmp.lt.s32.totalorder %s17, 1
        %s179 = scalar_select %p178, %s17, 1
        %s180 = smul.addr %s179, 16
        %s181 = smul.addr %s180, 8
        %s182 = scalar_lea.vmem %s0, %s181
        %p183 = pneg %p38
        %p184 = pneg %p35
        %s185 = sand.u32 %s51, 1
        %s186 = scalar_lea.sflag [#allocation3], %s185
        %s187 = sand.u32 %s51, 1
        %s188 = smul.addr %s187, 384
        %s189 = scalar_lea.vmem [#allocation2], %s188
        %p190 = pneg %p64
        %p191 = pneg %p61
        %p192 = pneg %p85
        %p193 = pneg %p82
        %p194 = pneg %p111
        %p195 = pneg %p108
        %p196 = scmp.lt.s32.totalorder %s17, 1
        %s197 = scalar_select %p196, %s17, 1
        %s198 = smul.addr %s197, 16
        %s199 = smul.addr %s198, 8
        %s200 = scalar_lea.vmem %s3, %s199
        %p201 = scmp.lt.s32.totalorder %s17, 1
        %s202 = scalar_select %p201, %s17, 1
        %s203 = smul.addr %s202, 16
        %s204 = smul.addr %s203, 8
        %s205 = scalar_lea.vmem %s0, %s204
        %p206 = scmp.lt.s32.totalorder %s17, 1
        %s207 = scalar_select %p206, %s17, 1
        %s208 = smul.addr %s207, 16
        %s209 = smul.addr %s208, 8
        %s210 = scalar_lea.vmem %s3, %s209
        %v211 = vld [vmem:[%s205] sm:$0xff]
        %v212 = vld [vmem:[%s205 + $0x8] sm:$0xff]
        %v213 = vld [vmem:[%s205 + $0x10] sm:$0xff]
        %v214 = vld [vmem:[%s205 + $0x18] sm:$0xff]
        %v215 = vld [vmem:[%s205 + $0x20] sm:$0xff]
        %v216 = vld [vmem:[%s205 + $0x28] sm:$0xff]
        %v217 = vld [vmem:[%s205 + $0x30] sm:$0xff]
        %v218 = vld [vmem:[%s205 + $0x38] sm:$0xff]
        %v219 = vld [vmem:[%s205 + $0x40] sm:$0xff]
        %v220 = vld [vmem:[%s205 + $0x48] sm:$0xff]
        %v221 = vld [vmem:[%s205 + $0x50] sm:$0xff]
        %v222 = vld [vmem:[%s205 + $0x58] sm:$0xff]
        %v223 = vld [vmem:[%s205 + $0x60] sm:$0xff]
        %v224 = vld [vmem:[%s205 + $0x68] sm:$0xff]
        %v225 = vld [vmem:[%s205 + $0x70] sm:$0xff]
        %v226 = vld [vmem:[%s205 + $0x78] sm:$0xff]
        %v227 = vld [vmem:[%s2] sm:$0xff]
        %v228 = vld [vmem:[%s2 + $0x8] sm:$0xff]
        %v229 = vld [vmem:[%s2 + $0x10] sm:$0xff]
        %v230 = vld [vmem:[%s2 + $0x18] sm:$0xff]
        %v231 = vld [vmem:[%s2 + $0x20] sm:$0xff]
        %v232 = vld [vmem:[%s2 + $0x28] sm:$0xff]
        %v233 = vld [vmem:[%s2 + $0x30] sm:$0xff]
        %v234 = vld [vmem:[%s2 + $0x38] sm:$0xff]
        %v235 = vld [vmem:[%s2 + $0x40] sm:$0xff]
        %v236 = vld [vmem:[%s2 + $0x48] sm:$0xff]
        %v237 = vld [vmem:[%s2 + $0x50] sm:$0xff]
        %v238 = vld [vmem:[%s2 + $0x58] sm:$0xff]
        %v239 = vld [vmem:[%s2 + $0x60] sm:$0xff]
        %v240 = vld [vmem:[%s2 + $0x68] sm:$0xff]
        %v241 = vld [vmem:[%s2 + $0x70] sm:$0xff]
        %v242 = vld [vmem:[%s2 + $0x78] sm:$0xff]
        %v243 = vld [vmem:[%s2 + $0x80] sm:$0xff]
        %v244 = vld [vmem:[%s2 + $0x88] sm:$0xff]
        %v245 = vld [vmem:[%s2 + $0x90] sm:$0xff]
        %v246 = vld [vmem:[%s2 + $0x98] sm:$0xff]
        %v247 = vld [vmem:[%s2 + $0xa0] sm:$0xff]
        %v248 = vld [vmem:[%s2 + $0xa8] sm:$0xff]
        %v249 = vld [vmem:[%s2 + $0xb0] sm:$0xff]
        %v250 = vld [vmem:[%s2 + $0xb8] sm:$0xff]
        %v251 = vld [vmem:[%s2 + $0xc0] sm:$0x1]
        %v252 = vlaneseq
        %v253 = vshrl.u32 %v252, 7
        %v254 = vsub.s32 0, %v253
        %v255 = vrot.slane %v251, %v254
        %v256 = vld [vmem:[%s2 + $0xc1] sm:$0x1]
        %v257 = vlaneseq
        %v258 = vshrl.u32 %v257, 7
        %v259 = vsub.s32 0, %v258
        %v260 = vrot.slane %v256, %v259
        %v261 = vld [vmem:[%s2 + $0xc2] sm:$0x1]
        %v262 = vlaneseq
        %v263 = vshrl.u32 %v262, 7
        %v264 = vsub.s32 0, %v263
        %v265 = vrot.slane %v261, %v264
        %v266 = vld [vmem:[%s2 + $0xc3] sm:$0x1]
        %v267 = vlaneseq
        %v268 = vshrl.u32 %v267, 7
        %v269 = vsub.s32 0, %v268
        %v270 = vrot.slane %v266, %v269
        %v271 = vld [vmem:[%s2 + $0xc4] sm:$0x1]
        %v272 = vlaneseq
        %v273 = vshrl.u32 %v272, 7
        %v274 = vsub.s32 0, %v273
        %v275 = vrot.slane %v271, %v274
        %vm276 = vcmask 261120
        %v278 = vsel %vm276, %v211, 0
        %v281 = vsel %vm276, %v212, 0
        %v284 = vsel %vm276, %v213, 0
        %v287 = vsel %vm276, %v214, 0
        %v290 = vsel %vm276, %v215, 0
        %v293 = vsel %vm276, %v216, 0
        %v296 = vsel %vm276, %v217, 0
        %v299 = vsel %vm276, %v218, 0
        %v302 = vsel %vm276, %v219, 0
        %v305 = vsel %vm276, %v220, 0
        %v308 = vsel %vm276, %v221, 0
        %v311 = vsel %vm276, %v222, 0
        %v314 = vsel %vm276, %v223, 0
        %v317 = vsel %vm276, %v224, 0
        %v320 = vsel %vm276, %v225, 0
        %v323 = vsel %vm276, %v226, 0
        %325 = vmatprep.subr.mxu0 0.0
        %326 = vmatpush1.msra.mxu0 0.0
        %327 = vmatprep.subr.mxu0 0.0
        %328 = vmatpush1.msra.mxu0 0.0
        %329 = vmatprep.subr.mxu0 0.0
        %330 = vmatpush1.msra.mxu0 0.0
        %331 = vmatprep.subr.mxu0 0.0
        %332 = vmatpush1.msra.mxu0 0.0
        %333 = vmatprep.subr.mxu0 0.0
        %334 = vmatpush1.msra.mxu0 0.0
        %335 = vmatprep.subr.mxu0 0.0
        %336 = vmatpush1.msra.mxu0 0.0
        %337 = vmatprep.subr.mxu0 0.0
        %338 = vmatpush1.msra.mxu0 0.0
        %339 = vmatprep.subr.mxu0 0.0
        %340 = vmatpush1.msra.mxu0 0.0
        %341 = vmatprep.subr.mxu0 0.0
        %342 = vmatpush1.msra.mxu0 0.0
        %343 = vmatprep.subr.mxu0 0.0
        %344 = vmatpush1.msra.mxu0 0.0
        %345 = vmatprep.subr.mxu0 0.0
        %346 = vmatpush1.msra.mxu0 0.0
        %347 = vmatprep.subr.mxu0 0.0
        %348 = vmatpush1.msra.mxu0 0.0
        %349 = vmatprep.subr.mxu0 0.0
        %350 = vmatpush1.msra.mxu0 %v238
        %351 = vmatprep.subr.mxu0 0.0
        %352 = vmatpush1.msra.mxu0 %v237
        %353 = vmatprep.subr.mxu0 0.0
        %354 = vmatpush1.msra.mxu0 %v236
        %355 = vmatprep.subr.mxu0 0.0
        %356 = vmatpush1.msra.mxu0 %v235
        %357 = vmatprep.subr.mxu0 0.0
        %358 = vmatpush2.msra.mxu0 0.0
        %359 = vmatprep.subr.mxu0 0.0
        %360 = vmatpush2.msra.mxu0 0.0
        %361 = vmatprep.subr.mxu0 0.0
        %362 = vmatpush2.msra.mxu0 0.0
        %363 = vmatprep.subr.mxu0 0.0
        %364 = vmatpush2.msra.mxu0 0.0
        %365 = vmatprep.subr.mxu0 0.0
        %366 = vmatpush2.msra.mxu0 0.0
        %367 = vmatprep.subr.mxu0 0.0
        %368 = vmatpush2.msra.mxu0 0.0
        %369 = vmatprep.subr.mxu0 0.0
        %370 = vmatpush2.msra.mxu0 0.0
        %371 = vmatprep.subr.mxu0 0.0
        %372 = vmatpush2.msra.mxu0 0.0
        %373 = vmatprep.subr.mxu0 0.0
        %374 = vmatpush2.msra.mxu0 0.0
        %375 = vmatprep.subr.mxu0 0.0
        %376 = vmatpush2.msra.mxu0 0.0
        %377 = vmatprep.subr.mxu0 0.0
        %378 = vmatpush2.msra.mxu0 0.0
        %379 = vmatprep.subr.mxu0 0.0
        %380 = vmatpush2.msra.mxu0 0.0
        %381 = vmatprep.subr.mxu0 0.0
        %382 = vmatpush2.msra.mxu0 0.0
        %383 = vmatprep.subr.mxu0 0.0
        %384 = vmatpush2.msra.mxu0 0.0
        %385 = vmatprep.subr.mxu0 0.0
        %386 = vmatpush2.msra.mxu0 0.0
        %387 = vmatprep.subr.mxu0 0.0
        %388 = vmatpush2.msra.mxu0 0.0
        %389 = vmatprep.mubr.f32.mxu0 0.0
        %390 = vmatmul.mubr.f32.gmra.mxu0 %v278
        %v391 = vpop.f32.mrf.mxu0
        %v392 = vadd.f32 0.0, %v391
        %v393 = vpop.f32.mrf.mxu0
        %394 = vmatprep.mubr.f32.mxu0 0.0
        %395 = vmatmul.mubr.f32.gmra.mxu0 %v281
        %v396 = vpop.f32.mrf.mxu0
        %v397 = vadd.f32 0.0, %v396
        %v398 = vpop.f32.mrf.mxu0
        %399 = vmatprep.mubr.f32.mxu0 0.0
        %400 = vmatmul.mubr.f32.gmra.mxu0 %v284
        %v401 = vpop.f32.mrf.mxu0
        %v402 = vadd.f32 0.0, %v401
        %v403 = vpop.f32.mrf.mxu0
        %404 = vmatprep.mubr.f32.mxu0 0.0
        %405 = vmatmul.mubr.f32.gmra.mxu0 %v287
        %v406 = vpop.f32.mrf.mxu0
        %v407 = vadd.f32 0.0, %v406
        %v408 = vpop.f32.mrf.mxu0
        %409 = vmatprep.mubr.f32.mxu0 0.0
        %410 = vmatmul.mubr.f32.gmra.mxu0 %v290
        %v411 = vpop.f32.mrf.mxu0
        %v412 = vadd.f32 0.0, %v411
        %v413 = vpop.f32.mrf.mxu0
        %414 = vmatprep.mubr.f32.mxu0 0.0
        %415 = vmatmul.mubr.f32.gmra.mxu0 %v293
        %v416 = vpop.f32.mrf.mxu0
        %v417 = vadd.f32 0.0, %v416
        %v418 = vpop.f32.mrf.mxu0
        %419 = vmatprep.mubr.f32.mxu0 0.0
        %420 = vmatmul.mubr.f32.gmra.mxu0 %v296
        %v421 = vpop.f32.mrf.mxu0
        %v422 = vadd.f32 0.0, %v421
        %v423 = vpop.f32.mrf.mxu0
        %424 = vmatprep.mubr.f32.mxu0 0.0
        %425 = vmatmul.mubr.f32.gmra.mxu0 %v299
        %v426 = vpop.f32.mrf.mxu0
        %v427 = vadd.f32 0.0, %v426
        %v428 = vpop.f32.mrf.mxu0
        %429 = vmatprep.mubr.f32.mxu0 0.0
        %430 = vmatmul.mubr.f32.gmra.mxu0 %v302
        %v431 = vpop.f32.mrf.mxu0
        %v432 = vadd.f32 0.0, %v431
        %v433 = vpop.f32.mrf.mxu0
        %434 = vmatprep.mubr.f32.mxu0 0.0
        %435 = vmatmul.mubr.f32.gmra.mxu0 %v305
        %v436 = vpop.f32.mrf.mxu0
        %v437 = vadd.f32 0.0, %v436
        %v438 = vpop.f32.mrf.mxu0
        %439 = vmatprep.mubr.f32.mxu0 0.0
        %440 = vmatmul.mubr.f32.gmra.mxu0 %v308
        %v441 = vpop.f32.mrf.mxu0
        %v442 = vadd.f32 0.0, %v441
        %v443 = vpop.f32.mrf.mxu0
        %444 = vmatprep.mubr.f32.mxu0 0.0
        %445 = vmatmul.mubr.f32.gmra.mxu0 %v311
        %v446 = vpop.f32.mrf.mxu0
        %v447 = vadd.f32 0.0, %v446
        %v448 = vpop.f32.mrf.mxu0
        %449 = vmatprep.mubr.f32.mxu0 0.0
        %450 = vmatmul.mubr.f32.gmra.mxu0 %v314
        %v451 = vpop.f32.mrf.mxu0
        %v452 = vadd.f32 0.0, %v451
        %v453 = vpop.f32.mrf.mxu0
        %454 = vmatprep.mubr.f32.mxu0 0.0
        %455 = vmatmul.mubr.f32.gmra.mxu0 %v317
        %v456 = vpop.f32.mrf.mxu0
        %v457 = vadd.f32 0.0, %v456
        %v458 = vpop.f32.mrf.mxu0
        %459 = vmatprep.mubr.f32.mxu0 0.0
        %460 = vmatmul.mubr.f32.gmra.mxu0 %v320
        %v461 = vpop.f32.mrf.mxu0
        %v462 = vadd.f32 0.0, %v461
        %v463 = vpop.f32.mrf.mxu0
        %464 = vmatprep.mubr.f32.mxu0 0.0
        %465 = vmatmul.mubr.f32.gmra.mxu0 %v323
        %v466 = vpop.f32.mrf.mxu0
        %v467 = vadd.f32 0.0, %v466
        %v468 = vpop.f32.mrf.mxu0
        %469 = vdwg.mxu0
        %v470 = vld [vmem:[%s173] sm:$0xff]
        %v471 = vld [vmem:[%s173 + $0x8] sm:$0xff]
        %v472 = vld [vmem:[%s173 + $0x10] sm:$0xff]
        %v473 = vld [vmem:[%s173 + $0x18] sm:$0xff]
        %v474 = vld [vmem:[%s173 + $0x20] sm:$0xff]
        %v475 = vld [vmem:[%s173 + $0x28] sm:$0xff]
        %v476 = vld [vmem:[%s173 + $0x30] sm:$0xff]
        %v477 = vld [vmem:[%s173 + $0x38] sm:$0xff]
        %v478 = vld [vmem:[%s173 + $0x40] sm:$0xff]
        %v479 = vld [vmem:[%s173 + $0x48] sm:$0xff]
        %v480 = vld [vmem:[%s173 + $0x50] sm:$0xff]
        %v481 = vld [vmem:[%s173 + $0x58] sm:$0xff]
        %v482 = vld [vmem:[%s173 + $0x60] sm:$0xff]
        %v483 = vld [vmem:[%s173 + $0x68] sm:$0xff]
        %v484 = vld [vmem:[%s173 + $0x70] sm:$0xff]
        %v485 = vld [vmem:[%s173 + $0x78] sm:$0xff]
        %s486 = scalar_lea.vmem %s173, 128 [#allocation2]
        %v487 = vld [vmem:[%s486] sm:$0xff]
        %v488 = vld [vmem:[%s486 + $0x8] sm:$0xff]
        %v489 = vld [vmem:[%s486 + $0x10] sm:$0xff]
        %v490 = vld [vmem:[%s486 + $0x18] sm:$0xff]
        %v491 = vld [vmem:[%s486 + $0x20] sm:$0xff]
        %v492 = vld [vmem:[%s486 + $0x28] sm:$0xff]
        %v493 = vld [vmem:[%s486 + $0x30] sm:$0xff]
        %v494 = vld [vmem:[%s486 + $0x38] sm:$0xff]
        %v495 = vld [vmem:[%s486 + $0x40] sm:$0xff]
        %v496 = vld [vmem:[%s486 + $0x48] sm:$0xff]
        %v497 = vld [vmem:[%s486 + $0x50] sm:$0xff]
        %v498 = vld [vmem:[%s486 + $0x58] sm:$0xff]
        %v499 = vld [vmem:[%s486 + $0x60] sm:$0xff]
        %v500 = vld [vmem:[%s486 + $0x68] sm:$0xff]
        %v501 = vld [vmem:[%s486 + $0x70] sm:$0xff]
        %v502 = vld [vmem:[%s486 + $0x78] sm:$0xff]
        %519 = vrot.lane.b32.xlu0 %v392, 96
        %v520 = vpop.permute.xlu0 %519
        %521 = vrot.lane.b32.xlu0 %v397, 96
        %v522 = vpop.permute.xlu0 %521
        %523 = vrot.lane.b32.xlu0 %v402, 96
        %v524 = vpop.permute.xlu0 %523
        %525 = vrot.lane.b32.xlu0 %v407, 96
        %v526 = vpop.permute.xlu0 %525
        %527 = vrot.lane.b32.xlu0 %v412, 96
        %v528 = vpop.permute.xlu0 %527
        %529 = vrot.lane.b32.xlu0 %v417, 96
        %v530 = vpop.permute.xlu0 %529
        %531 = vrot.lane.b32.xlu0 %v422, 96
        %v532 = vpop.permute.xlu0 %531
        %533 = vrot.lane.b32.xlu0 %v427, 96
        %v534 = vpop.permute.xlu0 %533
        %535 = vrot.lane.b32.xlu0 %v432, 96
        %v536 = vpop.permute.xlu0 %535
        %537 = vrot.lane.b32.xlu0 %v437, 96
        %v538 = vpop.permute.xlu0 %537
        %539 = vrot.lane.b32.xlu0 %v442, 96
        %v540 = vpop.permute.xlu0 %539
        %541 = vrot.lane.b32.xlu0 %v447, 96
        %v542 = vpop.permute.xlu0 %541
        %543 = vrot.lane.b32.xlu0 %v452, 96
        %v544 = vpop.permute.xlu0 %543
        %545 = vrot.lane.b32.xlu0 %v457, 96
        %v546 = vpop.permute.xlu0 %545
        %547 = vrot.lane.b32.xlu0 %v462, 96
        %v548 = vpop.permute.xlu0 %547
        %549 = vrot.lane.b32.xlu0 %v467, 96
        %v550 = vpop.permute.xlu0 %549
        %567 = vmatprep.subr.mxu0 0.0
        %568 = vmatpush1.msra.mxu0 %v550
        %569 = vmatprep.subr.mxu0 0.0
        %570 = vmatpush1.msra.mxu0 %v548
        %571 = vmatprep.subr.mxu0 0.0
        %572 = vmatpush1.msra.mxu0 %v546
        %573 = vmatprep.subr.mxu0 0.0
        %574 = vmatpush1.msra.mxu0 %v544
        %575 = vmatprep.subr.mxu0 0.0
        %576 = vmatpush1.msra.mxu0 %v542
        %577 = vmatprep.subr.mxu0 0.0
        %578 = vmatpush1.msra.mxu0 %v540
        %579 = vmatprep.subr.mxu0 0.0
        %580 = vmatpush1.msra.mxu0 %v538
        %581 = vmatprep.subr.mxu0 0.0
        %582 = vmatpush1.msra.mxu0 %v536
        %583 = vmatprep.subr.mxu0 0.0
        %584 = vmatpush1.msra.mxu0 %v534
        %585 = vmatprep.subr.mxu0 0.0
        %586 = vmatpush1.msra.mxu0 %v532
        %587 = vmatprep.subr.mxu0 0.0
        %588 = vmatpush1.msra.mxu0 %v530
        %589 = vmatprep.subr.mxu0 0.0
        %590 = vmatpush1.msra.mxu0 %v528
        %591 = vmatprep.subr.mxu0 0.0
        %592 = vmatpush1.msra.mxu0 %v526
        %593 = vmatprep.subr.mxu0 0.0
        %594 = vmatpush1.msra.mxu0 %v524
        %595 = vmatprep.subr.mxu0 0.0
        %596 = vmatpush1.msra.mxu0 %v522
        %597 = vmatprep.subr.mxu0 0.0
        %598 = vmatpush1.msra.mxu0 %v520
        %599 = vmatprep.subr.mxu0 0.0
        %600 = vmatpush2.msra.mxu0 0.0
        %601 = vmatprep.subr.mxu0 0.0
        %602 = vmatpush2.msra.mxu0 0.0
        %603 = vmatprep.subr.mxu0 0.0
        %604 = vmatpush2.msra.mxu0 0.0
        %605 = vmatprep.subr.mxu0 0.0
        %606 = vmatpush2.msra.mxu0 0.0
        %607 = vmatprep.subr.mxu0 0.0
        %608 = vmatpush2.msra.mxu0 0.0
        %609 = vmatprep.subr.mxu0 0.0
        %610 = vmatpush2.msra.mxu0 0.0
        %611 = vmatprep.subr.mxu0 0.0
        %612 = vmatpush2.msra.mxu0 0.0
        %613 = vmatprep.subr.mxu0 0.0
        %614 = vmatpush2.msra.mxu0 0.0
        %615 = vmatprep.subr.mxu0 0.0
        %616 = vmatpush2.msra.mxu0 0.0
        %617 = vmatprep.subr.mxu0 0.0
        %618 = vmatpush2.msra.mxu0 0.0
        %619 = vmatprep.subr.mxu0 0.0
        %620 = vmatpush2.msra.mxu0 0.0
        %621 = vmatprep.subr.mxu0 0.0
        %622 = vmatpush2.msra.mxu0 0.0
        %623 = vmatprep.subr.mxu0 0.0
        %624 = vmatpush2.msra.mxu0 0.0
        %625 = vmatprep.subr.mxu0 0.0
        %626 = vmatpush2.msra.mxu0 0.0
        %627 = vmatprep.subr.mxu0 0.0
        %628 = vmatpush2.msra.mxu0 0.0
        %629 = vmatprep.subr.mxu0 0.0
        %630 = vmatpush2.msra.mxu0 0.0
        %631 = vmatprep.mubr.f32.mxu0 0.0
        %632 = vmatmul.mubr.f32.gmra.mxu0 %v487
        %v633 = vpop.f32.mrf.mxu0
        %v634 = vadd.f32 0.0, %v633
        %v635 = vpop.f32.mrf.mxu0
        %636 = vmatprep.mubr.f32.mxu0 0.0
        %637 = vmatmul.mubr.f32.gmra.mxu0 %v488
        %v638 = vpop.f32.mrf.mxu0
        %v639 = vadd.f32 0.0, %v638
        %v640 = vpop.f32.mrf.mxu0
        %641 = vmatprep.mubr.f32.mxu0 0.0
        %642 = vmatmul.mubr.f32.gmra.mxu0 %v489
        %v643 = vpop.f32.mrf.mxu0
        %v644 = vadd.f32 0.0, %v643
        %v645 = vpop.f32.mrf.mxu0
        %646 = vmatprep.mubr.f32.mxu0 0.0
        %647 = vmatmul.mubr.f32.gmra.mxu0 %v490
        %v648 = vpop.f32.mrf.mxu0
        %v649 = vadd.f32 0.0, %v648
        %v650 = vpop.f32.mrf.mxu0
        %651 = vmatprep.mubr.f32.mxu0 0.0
        %652 = vmatmul.mubr.f32.gmra.mxu0 %v491
        %v653 = vpop.f32.mrf.mxu0
        %v654 = vadd.f32 0.0, %v653
        %v655 = vpop.f32.mrf.mxu0
        %656 = vmatprep.mubr.f32.mxu0 0.0
        %657 = vmatmul.mubr.f32.gmra.mxu0 %v492
        %v658 = vpop.f32.mrf.mxu0
        %v659 = vadd.f32 0.0, %v658
        %v660 = vpop.f32.mrf.mxu0
        %661 = vmatprep.mubr.f32.mxu0 0.0
        %662 = vmatmul.mubr.f32.gmra.mxu0 %v493
        %v663 = vpop.f32.mrf.mxu0
        %v664 = vadd.f32 0.0, %v663
        %v665 = vpop.f32.mrf.mxu0
        %666 = vmatprep.mubr.f32.mxu0 0.0
        %667 = vmatmul.mubr.f32.gmra.mxu0 %v494
        %v668 = vpop.f32.mrf.mxu0
        %v669 = vadd.f32 0.0, %v668
        %v670 = vpop.f32.mrf.mxu0
        %671 = vmatprep.mubr.f32.mxu0 0.0
        %672 = vmatmul.mubr.f32.gmra.mxu0 %v495
        %v673 = vpop.f32.mrf.mxu0
        %v674 = vadd.f32 0.0, %v673
        %v675 = vpop.f32.mrf.mxu0
        %676 = vmatprep.mubr.f32.mxu0 0.0
        %677 = vmatmul.mubr.f32.gmra.mxu0 %v496
        %v678 = vpop.f32.mrf.mxu0
        %v679 = vadd.f32 0.0, %v678
        %v680 = vpop.f32.mrf.mxu0
        %681 = vmatprep.mubr.f32.mxu0 0.0
        %682 = vmatmul.mubr.f32.gmra.mxu0 %v497
        %v683 = vpop.f32.mrf.mxu0
        %v684 = vadd.f32 0.0, %v683
        %v685 = vpop.f32.mrf.mxu0
        %686 = vmatprep.mubr.f32.mxu0 0.0
        %687 = vmatmul.mubr.f32.gmra.mxu0 %v498
        %v688 = vpop.f32.mrf.mxu0
        %v689 = vadd.f32 0.0, %v688
        %v690 = vpop.f32.mrf.mxu0
        %691 = vmatprep.mubr.f32.mxu0 0.0
        %692 = vmatmul.mubr.f32.gmra.mxu0 %v499
        %v693 = vpop.f32.mrf.mxu0
        %v694 = vadd.f32 0.0, %v693
        %v695 = vpop.f32.mrf.mxu0
        %696 = vmatprep.mubr.f32.mxu0 0.0
        %697 = vmatmul.mubr.f32.gmra.mxu0 %v500
        %v698 = vpop.f32.mrf.mxu0
        %v699 = vadd.f32 0.0, %v698
        %v700 = vpop.f32.mrf.mxu0
        %701 = vmatprep.mubr.f32.mxu0 0.0
        %702 = vmatmul.mubr.f32.gmra.mxu0 %v501
        %v703 = vpop.f32.mrf.mxu0
        %v704 = vadd.f32 0.0, %v703
        %v705 = vpop.f32.mrf.mxu0
        %706 = vmatprep.mubr.f32.mxu0 0.0
        %707 = vmatmul.mubr.f32.gmra.mxu0 %v502
        %v708 = vpop.f32.mrf.mxu0
        %v709 = vadd.f32 0.0, %v708
        %v710 = vpop.f32.mrf.mxu0
        %711 = vdwg.mxu0
        %712 = vmatprep.subr.mxu0 0.0
        %713 = vmatpush1.msra.mxu0 %v467
        %714 = vmatprep.subr.mxu0 0.0
        %715 = vmatpush1.msra.mxu0 %v462
        %716 = vmatprep.subr.mxu0 0.0
        %717 = vmatpush1.msra.mxu0 %v457
        %718 = vmatprep.subr.mxu0 0.0
        %719 = vmatpush1.msra.mxu0 %v452
        %720 = vmatprep.subr.mxu0 0.0
        %721 = vmatpush1.msra.mxu0 %v447
        %722 = vmatprep.subr.mxu0 0.0
        %723 = vmatpush1.msra.mxu0 %v442
        %724 = vmatprep.subr.mxu0 0.0
        %725 = vmatpush1.msra.mxu0 %v437
        %726 = vmatprep.subr.mxu0 0.0
        %727 = vmatpush1.msra.mxu0 %v432
        %728 = vmatprep.subr.mxu0 0.0
        %729 = vmatpush1.msra.mxu0 %v427
        %730 = vmatprep.subr.mxu0 0.0
        %731 = vmatpush1.msra.mxu0 %v422
        %732 = vmatprep.subr.mxu0 0.0
        %733 = vmatpush1.msra.mxu0 %v417
        %734 = vmatprep.subr.mxu0 0.0
        %735 = vmatpush1.msra.mxu0 %v412
        %736 = vmatprep.subr.mxu0 0.0
        %737 = vmatpush1.msra.mxu0 %v407
        %738 = vmatprep.subr.mxu0 0.0
        %739 = vmatpush1.msra.mxu0 %v402
        %740 = vmatprep.subr.mxu0 0.0
        %741 = vmatpush1.msra.mxu0 %v397
        %742 = vmatprep.subr.mxu0 0.0
        %743 = vmatpush1.msra.mxu0 %v392
        %744 = vmatprep.subr.mxu0 0.0
        %745 = vmatpush2.msra.mxu0 0.0
        %746 = vmatprep.subr.mxu0 0.0
        %747 = vmatpush2.msra.mxu0 0.0
        %748 = vmatprep.subr.mxu0 0.0
        %749 = vmatpush2.msra.mxu0 0.0
        %750 = vmatprep.subr.mxu0 0.0
        %751 = vmatpush2.msra.mxu0 0.0
        %752 = vmatprep.subr.mxu0 0.0
        %753 = vmatpush2.msra.mxu0 0.0
        %754 = vmatprep.subr.mxu0 0.0
        %755 = vmatpush2.msra.mxu0 0.0
        %756 = vmatprep.subr.mxu0 0.0
        %757 = vmatpush2.msra.mxu0 0.0
        %758 = vmatprep.subr.mxu0 0.0
        %759 = vmatpush2.msra.mxu0 0.0
        %760 = vmatprep.subr.mxu0 0.0
        %761 = vmatpush2.msra.mxu0 0.0
        %762 = vmatprep.subr.mxu0 0.0
        %763 = vmatpush2.msra.mxu0 0.0
        %764 = vmatprep.subr.mxu0 0.0
        %765 = vmatpush2.msra.mxu0 0.0
        %766 = vmatprep.subr.mxu0 0.0
        %767 = vmatpush2.msra.mxu0 0.0
        %768 = vmatprep.subr.mxu0 0.0
        %769 = vmatpush2.msra.mxu0 0.0
        %770 = vmatprep.subr.mxu0 0.0
        %771 = vmatpush2.msra.mxu0 0.0
        %772 = vmatprep.subr.mxu0 0.0
        %773 = vmatpush2.msra.mxu0 0.0
        %774 = vmatprep.subr.mxu0 0.0
        %775 = vmatpush2.msra.mxu0 0.0
        %776 = vmatprep.mubr.f32.mxu0 0.0
        %777 = vmatmul.mubr.f32.gmra.mxu0 %v470
        %v778 = vpop.f32.mrf.mxu0
        %v779 = vadd.f32 %v634, %v778
        %v780 = vpop.f32.mrf.mxu0
        %781 = vmatprep.mubr.f32.mxu0 0.0
        %782 = vmatmul.mubr.f32.gmra.mxu0 %v471
        %v783 = vpop.f32.mrf.mxu0
        %v784 = vadd.f32 %v639, %v783
        %v785 = vpop.f32.mrf.mxu0
        %786 = vmatprep.mubr.f32.mxu0 0.0
        %787 = vmatmul.mubr.f32.gmra.mxu0 %v472
        %v788 = vpop.f32.mrf.mxu0
        %v789 = vadd.f32 %v644, %v788
        %v790 = vpop.f32.mrf.mxu0
        %791 = vmatprep.mubr.f32.mxu0 0.0
        %792 = vmatmul.mubr.f32.gmra.mxu0 %v473
        %v793 = vpop.f32.mrf.mxu0
        %v794 = vadd.f32 %v649, %v793
        %v795 = vpop.f32.mrf.mxu0
        %796 = vmatprep.mubr.f32.mxu0 0.0
        %797 = vmatmul.mubr.f32.gmra.mxu0 %v474
        %v798 = vpop.f32.mrf.mxu0
        %v799 = vadd.f32 %v654, %v798
        %v800 = vpop.f32.mrf.mxu0
        %801 = vmatprep.mubr.f32.mxu0 0.0
        %802 = vmatmul.mubr.f32.gmra.mxu0 %v475
        %v803 = vpop.f32.mrf.mxu0
        %v804 = vadd.f32 %v659, %v803
        %v805 = vpop.f32.mrf.mxu0
        %806 = vmatprep.mubr.f32.mxu0 0.0
        %807 = vmatmul.mubr.f32.gmra.mxu0 %v476
        %v808 = vpop.f32.mrf.mxu0
        %v809 = vadd.f32 %v664, %v808
        %v810 = vpop.f32.mrf.mxu0
        %811 = vmatprep.mubr.f32.mxu0 0.0
        %812 = vmatmul.mubr.f32.gmra.mxu0 %v477
        %v813 = vpop.f32.mrf.mxu0
        %v814 = vadd.f32 %v669, %v813
        %v815 = vpop.f32.mrf.mxu0
        %816 = vmatprep.mubr.f32.mxu0 0.0
        %817 = vmatmul.mubr.f32.gmra.mxu0 %v478
        %v818 = vpop.f32.mrf.mxu0
        %v819 = vadd.f32 %v674, %v818
        %v820 = vpop.f32.mrf.mxu0
        %821 = vmatprep.mubr.f32.mxu0 0.0
        %822 = vmatmul.mubr.f32.gmra.mxu0 %v479
        %v823 = vpop.f32.mrf.mxu0
        %v824 = vadd.f32 %v679, %v823
        %v825 = vpop.f32.mrf.mxu0
        %826 = vmatprep.mubr.f32.mxu0 0.0
        %827 = vmatmul.mubr.f32.gmra.mxu0 %v480
        %v828 = vpop.f32.mrf.mxu0
        %v829 = vadd.f32 %v684, %v828
        %v830 = vpop.f32.mrf.mxu0
        %831 = vmatprep.mubr.f32.mxu0 0.0
        %832 = vmatmul.mubr.f32.gmra.mxu0 %v481
        %v833 = vpop.f32.mrf.mxu0
        %v834 = vadd.f32 %v689, %v833
        %v835 = vpop.f32.mrf.mxu0
        %836 = vmatprep.mubr.f32.mxu0 0.0
        %837 = vmatmul.mubr.f32.gmra.mxu0 %v482
        %v838 = vpop.f32.mrf.mxu0
        %v839 = vadd.f32 %v694, %v838
        %v840 = vpop.f32.mrf.mxu0
        %841 = vmatprep.mubr.f32.mxu0 0.0
        %842 = vmatmul.mubr.f32.gmra.mxu0 %v483
        %v843 = vpop.f32.mrf.mxu0
        %v844 = vadd.f32 %v699, %v843
        %v845 = vpop.f32.mrf.mxu0
        %846 = vmatprep.mubr.f32.mxu0 0.0
        %847 = vmatmul.mubr.f32.gmra.mxu0 %v484
        %v848 = vpop.f32.mrf.mxu0
        %v849 = vadd.f32 %v704, %v848
        %v850 = vpop.f32.mrf.mxu0
        %851 = vmatprep.mubr.f32.mxu0 0.0
        %852 = vmatmul.mubr.f32.gmra.mxu0 %v485
        %v853 = vpop.f32.mrf.mxu0
        %v854 = vadd.f32 %v709, %v853
        %v855 = vpop.f32.mrf.mxu0
        %856 = vdwg.mxu0
        %s857 = scalar_lea.vmem %s173, 256 [#allocation2]
        %v858 = vld [vmem:[%s857] sm:$0xff]
        %v859 = vld [vmem:[%s857 + $0x8] sm:$0xff]
        %v860 = vld [vmem:[%s857 + $0x10] sm:$0xff]
        %v861 = vld [vmem:[%s857 + $0x18] sm:$0xff]
        %v862 = vld [vmem:[%s857 + $0x20] sm:$0xff]
        %v863 = vld [vmem:[%s857 + $0x28] sm:$0xff]
        %v864 = vld [vmem:[%s857 + $0x30] sm:$0xff]
        %v865 = vld [vmem:[%s857 + $0x38] sm:$0xff]
        %v866 = vld [vmem:[%s857 + $0x40] sm:$0xff]
        %v867 = vld [vmem:[%s857 + $0x48] sm:$0xff]
        %v868 = vld [vmem:[%s857 + $0x50] sm:$0xff]
        %v869 = vld [vmem:[%s857 + $0x58] sm:$0xff]
        %v870 = vld [vmem:[%s857 + $0x60] sm:$0xff]
        %v871 = vld [vmem:[%s857 + $0x68] sm:$0xff]
        %v872 = vld [vmem:[%s857 + $0x70] sm:$0xff]
        %v873 = vld [vmem:[%s857 + $0x78] sm:$0xff]
        %874 = vrot.lane.b32.xlu0 %v392, 64
        %v875 = vpop.permute.xlu0 %874
        %876 = vrot.lane.b32.xlu0 %v397, 64
        %v877 = vpop.permute.xlu0 %876
        %878 = vrot.lane.b32.xlu0 %v402, 64
        %v879 = vpop.permute.xlu0 %878
        %880 = vrot.lane.b32.xlu0 %v407, 64
        %v881 = vpop.permute.xlu0 %880
        %882 = vrot.lane.b32.xlu0 %v412, 64
        %v883 = vpop.permute.xlu0 %882
        %884 = vrot.lane.b32.xlu0 %v417, 64
        %v885 = vpop.permute.xlu0 %884
        %886 = vrot.lane.b32.xlu0 %v422, 64
        %v887 = vpop.permute.xlu0 %886
        %888 = vrot.lane.b32.xlu0 %v427, 64
        %v889 = vpop.permute.xlu0 %888
        %890 = vrot.lane.b32.xlu0 %v432, 64
        %v891 = vpop.permute.xlu0 %890
        %892 = vrot.lane.b32.xlu0 %v437, 64
        %v893 = vpop.permute.xlu0 %892
        %894 = vrot.lane.b32.xlu0 %v442, 64
        %v895 = vpop.permute.xlu0 %894
        %896 = vrot.lane.b32.xlu0 %v447, 64
        %v897 = vpop.permute.xlu0 %896
        %898 = vrot.lane.b32.xlu0 %v452, 64
        %v899 = vpop.permute.xlu0 %898
        %900 = vrot.lane.b32.xlu0 %v457, 64
        %v901 = vpop.permute.xlu0 %900
        %902 = vrot.lane.b32.xlu0 %v462, 64
        %v903 = vpop.permute.xlu0 %902
        %904 = vrot.lane.b32.xlu0 %v467, 64
        %v905 = vpop.permute.xlu0 %904
        %922 = vmatprep.subr.mxu0 0.0
        %923 = vmatpush1.msra.mxu0 %v905
        %924 = vmatprep.subr.mxu0 0.0
        %925 = vmatpush1.msra.mxu0 %v903
        %926 = vmatprep.subr.mxu0 0.0
        %927 = vmatpush1.msra.mxu0 %v901
        %928 = vmatprep.subr.mxu0 0.0
        %929 = vmatpush1.msra.mxu0 %v899
        %930 = vmatprep.subr.mxu0 0.0
        %931 = vmatpush1.msra.mxu0 %v897
        %932 = vmatprep.subr.mxu0 0.0
        %933 = vmatpush1.msra.mxu0 %v895
        %934 = vmatprep.subr.mxu0 0.0
        %935 = vmatpush1.msra.mxu0 %v893
        %936 = vmatprep.subr.mxu0 0.0
        %937 = vmatpush1.msra.mxu0 %v891
        %938 = vmatprep.subr.mxu0 0.0
        %939 = vmatpush1.msra.mxu0 %v889
        %940 = vmatprep.subr.mxu0 0.0
        %941 = vmatpush1.msra.mxu0 %v887
        %942 = vmatprep.subr.mxu0 0.0
        %943 = vmatpush1.msra.mxu0 %v885
        %944 = vmatprep.subr.mxu0 0.0
        %945 = vmatpush1.msra.mxu0 %v883
        %946 = vmatprep.subr.mxu0 0.0
        %947 = vmatpush1.msra.mxu0 %v881
        %948 = vmatprep.subr.mxu0 0.0
        %949 = vmatpush1.msra.mxu0 %v879
        %950 = vmatprep.subr.mxu0 0.0
        %951 = vmatpush1.msra.mxu0 %v877
        %952 = vmatprep.subr.mxu0 0.0
        %953 = vmatpush1.msra.mxu0 %v875
        %954 = vmatprep.subr.mxu0 0.0
        %955 = vmatpush2.msra.mxu0 0.0
        %956 = vmatprep.subr.mxu0 0.0
        %957 = vmatpush2.msra.mxu0 0.0
        %958 = vmatprep.subr.mxu0 0.0
        %959 = vmatpush2.msra.mxu0 0.0
        %960 = vmatprep.subr.mxu0 0.0
        %961 = vmatpush2.msra.mxu0 0.0
        %962 = vmatprep.subr.mxu0 0.0
        %963 = vmatpush2.msra.mxu0 0.0
        %964 = vmatprep.subr.mxu0 0.0
        %965 = vmatpush2.msra.mxu0 0.0
        %966 = vmatprep.subr.mxu0 0.0
        %967 = vmatpush2.msra.mxu0 0.0
        %968 = vmatprep.subr.mxu0 0.0
        %969 = vmatpush2.msra.mxu0 0.0
        %970 = vmatprep.subr.mxu0 0.0
        %971 = vmatpush2.msra.mxu0 0.0
        %972 = vmatprep.subr.mxu0 0.0
        %973 = vmatpush2.msra.mxu0 0.0
        %974 = vmatprep.subr.mxu0 0.0
        %975 = vmatpush2.msra.mxu0 0.0
        %976 = vmatprep.subr.mxu0 0.0
        %977 = vmatpush2.msra.mxu0 0.0
        %978 = vmatprep.subr.mxu0 0.0
        %979 = vmatpush2.msra.mxu0 0.0
        %980 = vmatprep.subr.mxu0 0.0
        %981 = vmatpush2.msra.mxu0 0.0
        %982 = vmatprep.subr.mxu0 0.0
        %983 = vmatpush2.msra.mxu0 0.0
        %984 = vmatprep.subr.mxu0 0.0
        %985 = vmatpush2.msra.mxu0 0.0
        %986 = vmatprep.mubr.f32.mxu0 0.0
        %987 = vmatmul.mubr.f32.gmra.mxu0 %v858
        %v988 = vpop.f32.mrf.mxu0
        %v989 = vadd.f32 0.0, %v988
        %v990 = vpop.f32.mrf.mxu0
        %991 = vmatprep.mubr.f32.mxu0 0.0
        %992 = vmatmul.mubr.f32.gmra.mxu0 %v859
        %v993 = vpop.f32.mrf.mxu0
        %v994 = vadd.f32 0.0, %v993
        %v995 = vpop.f32.mrf.mxu0
        %996 = vmatprep.mubr.f32.mxu0 0.0
        %997 = vmatmul.mubr.f32.gmra.mxu0 %v860
        %v998 = vpop.f32.mrf.mxu0
        %v999 = vadd.f32 0.0, %v998
        %v1000 = vpop.f32.mrf.mxu0
        %1001 = vmatprep.mubr.f32.mxu0 0.0
        %1002 = vmatmul.mubr.f32.gmra.mxu0 %v861
        %v1003 = vpop.f32.mrf.mxu0
        %v1004 = vadd.f32 0.0, %v1003
        %v1005 = vpop.f32.mrf.mxu0
        %1006 = vmatprep.mubr.f32.mxu0 0.0
        %1007 = vmatmul.mubr.f32.gmra.mxu0 %v862
        %v1008 = vpop.f32.mrf.mxu0
        %v1009 = vadd.f32 0.0, %v1008
        %v1010 = vpop.f32.mrf.mxu0
        %1011 = vmatprep.mubr.f32.mxu0 0.0
        %1012 = vmatmul.mubr.f32.gmra.mxu0 %v863
        %v1013 = vpop.f32.mrf.mxu0
        %v1014 = vadd.f32 0.0, %v1013
        %v1015 = vpop.f32.mrf.mxu0
        %1016 = vmatprep.mubr.f32.mxu0 0.0
        %1017 = vmatmul.mubr.f32.gmra.mxu0 %v864
        %v1018 = vpop.f32.mrf.mxu0
        %v1019 = vadd.f32 0.0, %v1018
        %v1020 = vpop.f32.mrf.mxu0
        %1021 = vmatprep.mubr.f32.mxu0 0.0
        %1022 = vmatmul.mubr.f32.gmra.mxu0 %v865
        %v1023 = vpop.f32.mrf.mxu0
        %v1024 = vadd.f32 0.0, %v1023
        %v1025 = vpop.f32.mrf.mxu0
        %1026 = vmatprep.mubr.f32.mxu0 0.0
        %1027 = vmatmul.mubr.f32.gmra.mxu0 %v866
        %v1028 = vpop.f32.mrf.mxu0
        %v1029 = vadd.f32 0.0, %v1028
        %v1030 = vpop.f32.mrf.mxu0
        %1031 = vmatprep.mubr.f32.mxu0 0.0
        %1032 = vmatmul.mubr.f32.gmra.mxu0 %v867
        %v1033 = vpop.f32.mrf.mxu0
        %v1034 = vadd.f32 0.0, %v1033
        %v1035 = vpop.f32.mrf.mxu0
        %1036 = vmatprep.mubr.f32.mxu0 0.0
        %1037 = vmatmul.mubr.f32.gmra.mxu0 %v868
        %v1038 = vpop.f32.mrf.mxu0
        %v1039 = vadd.f32 0.0, %v1038
        %v1040 = vpop.f32.mrf.mxu0
        %1041 = vmatprep.mubr.f32.mxu0 0.0
        %1042 = vmatmul.mubr.f32.gmra.mxu0 %v869
        %v1043 = vpop.f32.mrf.mxu0
        %v1044 = vadd.f32 0.0, %v1043
        %v1045 = vpop.f32.mrf.mxu0
        %1046 = vmatprep.mubr.f32.mxu0 0.0
        %1047 = vmatmul.mubr.f32.gmra.mxu0 %v870
        %v1048 = vpop.f32.mrf.mxu0
        %v1049 = vadd.f32 0.0, %v1048
        %v1050 = vpop.f32.mrf.mxu0
        %1051 = vmatprep.mubr.f32.mxu0 0.0
        %1052 = vmatmul.mubr.f32.gmra.mxu0 %v871
        %v1053 = vpop.f32.mrf.mxu0
        %v1054 = vadd.f32 0.0, %v1053
        %v1055 = vpop.f32.mrf.mxu0
        %1056 = vmatprep.mubr.f32.mxu0 0.0
        %1057 = vmatmul.mubr.f32.gmra.mxu0 %v872
        %v1058 = vpop.f32.mrf.mxu0
        %v1059 = vadd.f32 0.0, %v1058
        %v1060 = vpop.f32.mrf.mxu0
        %1061 = vmatprep.mubr.f32.mxu0 0.0
        %1062 = vmatmul.mubr.f32.gmra.mxu0 %v873
        %v1063 = vpop.f32.mrf.mxu0
        %v1064 = vadd.f32 0.0, %v1063
        %v1065 = vpop.f32.mrf.mxu0
        %1066 = vdwg.mxu0
        %v1067 = vadd.f32 %v779, %v989
        %v1068 = vadd.f32 %v784, %v994
        %v1069 = vadd.f32 %v789, %v999
        %v1070 = vadd.f32 %v794, %v1004
        %v1071 = vadd.f32 %v799, %v1009
        %v1072 = vadd.f32 %v804, %v1014
        %v1073 = vadd.f32 %v809, %v1019
        %v1074 = vadd.f32 %v814, %v1024
        %v1075 = vadd.f32 %v819, %v1029
        %v1076 = vadd.f32 %v824, %v1034
        %v1077 = vadd.f32 %v829, %v1039
        %v1078 = vadd.f32 %v834, %v1044
        %v1079 = vadd.f32 %v839, %v1049
        %v1080 = vadd.f32 %v844, %v1054
        %v1081 = vadd.f32 %v849, %v1059
        %v1082 = vadd.f32 %v854, %v1064
        %1083 = vrot.lane.b32.xlu0 %v211, 32
        %v1084 = vpop.permute.xlu0 %1083
        %1085 = vrot.lane.b32.xlu0 %v212, 32
        %v1086 = vpop.permute.xlu0 %1085
        %1087 = vrot.lane.b32.xlu0 %v213, 32
        %v1088 = vpop.permute.xlu0 %1087
        %1089 = vrot.lane.b32.xlu0 %v214, 32
        %v1090 = vpop.permute.xlu0 %1089
        %1091 = vrot.lane.b32.xlu0 %v215, 32
        %v1092 = vpop.permute.xlu0 %1091
        %1093 = vrot.lane.b32.xlu0 %v216, 32
        %v1094 = vpop.permute.xlu0 %1093
        %1095 = vrot.lane.b32.xlu0 %v217, 32
        %v1096 = vpop.permute.xlu0 %1095
        %1097 = vrot.lane.b32.xlu0 %v218, 32
        %v1098 = vpop.permute.xlu0 %1097
        %1099 = vrot.lane.b32.xlu0 %v219, 32
        %v1100 = vpop.permute.xlu0 %1099
        %1101 = vrot.lane.b32.xlu0 %v220, 32
        %v1102 = vpop.permute.xlu0 %1101
        %1103 = vrot.lane.b32.xlu0 %v221, 32
        %v1104 = vpop.permute.xlu0 %1103
        %1105 = vrot.lane.b32.xlu0 %v222, 32
        %v1106 = vpop.permute.xlu0 %1105
        %1107 = vrot.lane.b32.xlu0 %v223, 32
        %v1108 = vpop.permute.xlu0 %1107
        %1109 = vrot.lane.b32.xlu0 %v224, 32
        %v1110 = vpop.permute.xlu0 %1109
        %1111 = vrot.lane.b32.xlu0 %v225, 32
        %v1112 = vpop.permute.xlu0 %1111
        %1113 = vrot.lane.b32.xlu0 %v226, 32
        %v1114 = vpop.permute.xlu0 %1113
        %v1131 = vsel %vm276, %v1067, %v1084
        %v1132 = vsel %vm276, %v1068, %v1086
        %v1133 = vsel %vm276, %v1069, %v1088
        %v1134 = vsel %vm276, %v1070, %v1090
        %v1135 = vsel %vm276, %v1071, %v1092
        %v1136 = vsel %vm276, %v1072, %v1094
        %v1137 = vsel %vm276, %v1073, %v1096
        %v1138 = vsel %vm276, %v1074, %v1098
        %v1139 = vsel %vm276, %v1075, %v1100
        %v1140 = vsel %vm276, %v1076, %v1102
        %v1141 = vsel %vm276, %v1077, %v1104
        %v1142 = vsel %vm276, %v1078, %v1106
        %v1143 = vsel %vm276, %v1079, %v1108
        %v1144 = vsel %vm276, %v1080, %v1110
        %v1145 = vsel %vm276, %v1081, %v1112
        %v1146 = vsel %vm276, %v1082, %v1114
        %vm1147 = vcmask 523264
        %v1149 = vsel %vm1147, %v1131, 0
        %v1152 = vsel %vm1147, %v1132, 0
        %v1155 = vsel %vm1147, %v1133, 0
        %v1158 = vsel %vm1147, %v1134, 0
        %v1161 = vsel %vm1147, %v1135, 0
        %v1164 = vsel %vm1147, %v1136, 0
        %v1167 = vsel %vm1147, %v1137, 0
        %v1170 = vsel %vm1147, %v1138, 0
        %v1173 = vsel %vm1147, %v1139, 0
        %v1176 = vsel %vm1147, %v1140, 0
        %v1179 = vsel %vm1147, %v1141, 0
        %v1182 = vsel %vm1147, %v1142, 0
        %v1185 = vsel %vm1147, %v1143, 0
        %v1188 = vsel %vm1147, %v1144, 0
        %v1191 = vsel %vm1147, %v1145, 0
        %v1194 = vsel %vm1147, %v1146, 0
        %1196 = vmatprep.subr.mxu0 0.0
        %1197 = vmatpush1.msra.mxu0 0.0
        %1198 = vmatprep.subr.mxu0 0.0
        %1199 = vmatpush1.msra.mxu0 0.0
        %1200 = vmatprep.subr.mxu0 0.0
        %1201 = vmatpush1.msra.mxu0 0.0
        %1202 = vmatprep.subr.mxu0 0.0
        %1203 = vmatpush1.msra.mxu0 0.0
        %1204 = vmatprep.subr.mxu0 0.0
        %1205 = vmatpush1.msra.mxu0 0.0
        %1206 = vmatprep.subr.mxu0 0.0
        %1207 = vmatpush1.msra.mxu0 0.0
        %1208 = vmatprep.subr.mxu0 0.0
        %1209 = vmatpush1.msra.mxu0 0.0
        %1210 = vmatprep.subr.mxu0 0.0
        %1211 = vmatpush1.msra.mxu0 0.0
        %1212 = vmatprep.subr.mxu0 0.0
        %1213 = vmatpush1.msra.mxu0 %v234
        %1214 = vmatprep.subr.mxu0 0.0
        %1215 = vmatpush1.msra.mxu0 %v233
        %1216 = vmatprep.subr.mxu0 0.0
        %1217 = vmatpush1.msra.mxu0 %v232
        %1218 = vmatprep.subr.mxu0 0.0
        %1219 = vmatpush1.msra.mxu0 %v231
        %1220 = vmatprep.subr.mxu0 0.0
        %1221 = vmatpush1.msra.mxu0 %v230
        %1222 = vmatprep.subr.mxu0 0.0
        %1223 = vmatpush1.msra.mxu0 %v229
        %1224 = vmatprep.subr.mxu0 0.0
        %1225 = vmatpush1.msra.mxu0 %v228
        %1226 = vmatprep.subr.mxu0 0.0
        %1227 = vmatpush1.msra.mxu0 %v227
        %1228 = vmatprep.subr.mxu0 0.0
        %1229 = vmatpush2.msra.mxu0 0.0
        %1230 = vmatprep.subr.mxu0 0.0
        %1231 = vmatpush2.msra.mxu0 0.0
        %1232 = vmatprep.subr.mxu0 0.0
        %1233 = vmatpush2.msra.mxu0 0.0
        %1234 = vmatprep.subr.mxu0 0.0
        %1235 = vmatpush2.msra.mxu0 0.0
        %1236 = vmatprep.subr.mxu0 0.0
        %1237 = vmatpush2.msra.mxu0 0.0
        %1238 = vmatprep.subr.mxu0 0.0
        %1239 = vmatpush2.msra.mxu0 0.0
        %1240 = vmatprep.subr.mxu0 0.0
        %1241 = vmatpush2.msra.mxu0 0.0
        %1242 = vmatprep.subr.mxu0 0.0
        %1243 = vmatpush2.msra.mxu0 0.0
        %1244 = vmatprep.subr.mxu0 0.0
        %1245 = vmatpush2.msra.mxu0 0.0
        %1246 = vmatprep.subr.mxu0 0.0
        %1247 = vmatpush2.msra.mxu0 0.0
        %1248 = vmatprep.subr.mxu0 0.0
        %1249 = vmatpush2.msra.mxu0 0.0
        %1250 = vmatprep.subr.mxu0 0.0
        %1251 = vmatpush2.msra.mxu0 0.0
        %1252 = vmatprep.subr.mxu0 0.0
        %1253 = vmatpush2.msra.mxu0 0.0
        %1254 = vmatprep.subr.mxu0 0.0
        %1255 = vmatpush2.msra.mxu0 0.0
        %1256 = vmatprep.subr.mxu0 0.0
        %1257 = vmatpush2.msra.mxu0 0.0
        %1258 = vmatprep.subr.mxu0 0.0
        %1259 = vmatpush2.msra.mxu0 0.0
        %1260 = vmatprep.mubr.f32.mxu0 0.0
        %1261 = vmatmul.mubr.f32.gmra.mxu0 %v1149
        %v1262 = vpop.f32.mrf.mxu0
        %v1263 = vadd.f32 0.0, %v1262
        %v1264 = vpop.f32.mrf.mxu0
        %1265 = vmatprep.mubr.f32.mxu0 0.0
        %1266 = vmatmul.mubr.f32.gmra.mxu0 %v1152
        %v1267 = vpop.f32.mrf.mxu0
        %v1268 = vadd.f32 0.0, %v1267
        %v1269 = vpop.f32.mrf.mxu0
        %1270 = vmatprep.mubr.f32.mxu0 0.0
        %1271 = vmatmul.mubr.f32.gmra.mxu0 %v1155
        %v1272 = vpop.f32.mrf.mxu0
        %v1273 = vadd.f32 0.0, %v1272
        %v1274 = vpop.f32.mrf.mxu0
        %1275 = vmatprep.mubr.f32.mxu0 0.0
        %1276 = vmatmul.mubr.f32.gmra.mxu0 %v1158
        %v1277 = vpop.f32.mrf.mxu0
        %v1278 = vadd.f32 0.0, %v1277
        %v1279 = vpop.f32.mrf.mxu0
        %1280 = vmatprep.mubr.f32.mxu0 0.0
        %1281 = vmatmul.mubr.f32.gmra.mxu0 %v1161
        %v1282 = vpop.f32.mrf.mxu0
        %v1283 = vadd.f32 0.0, %v1282
        %v1284 = vpop.f32.mrf.mxu0
        %1285 = vmatprep.mubr.f32.mxu0 0.0
        %1286 = vmatmul.mubr.f32.gmra.mxu0 %v1164
        %v1287 = vpop.f32.mrf.mxu0
        %v1288 = vadd.f32 0.0, %v1287
        %v1289 = vpop.f32.mrf.mxu0
        %1290 = vmatprep.mubr.f32.mxu0 0.0
        %1291 = vmatmul.mubr.f32.gmra.mxu0 %v1167
        %v1292 = vpop.f32.mrf.mxu0
        %v1293 = vadd.f32 0.0, %v1292
        %v1294 = vpop.f32.mrf.mxu0
        %1295 = vmatprep.mubr.f32.mxu0 0.0
        %1296 = vmatmul.mubr.f32.gmra.mxu0 %v1170
        %v1297 = vpop.f32.mrf.mxu0
        %v1298 = vadd.f32 0.0, %v1297
        %v1299 = vpop.f32.mrf.mxu0
        %1300 = vmatprep.mubr.f32.mxu0 0.0
        %1301 = vmatmul.mubr.f32.gmra.mxu0 %v1173
        %v1302 = vpop.f32.mrf.mxu0
        %v1303 = vadd.f32 0.0, %v1302
        %v1304 = vpop.f32.mrf.mxu0
        %1305 = vmatprep.mubr.f32.mxu0 0.0
        %1306 = vmatmul.mubr.f32.gmra.mxu0 %v1176
        %v1307 = vpop.f32.mrf.mxu0
        %v1308 = vadd.f32 0.0, %v1307
        %v1309 = vpop.f32.mrf.mxu0
        %1310 = vmatprep.mubr.f32.mxu0 0.0
        %1311 = vmatmul.mubr.f32.gmra.mxu0 %v1179
        %v1312 = vpop.f32.mrf.mxu0
        %v1313 = vadd.f32 0.0, %v1312
        %v1314 = vpop.f32.mrf.mxu0
        %1315 = vmatprep.mubr.f32.mxu0 0.0
        %1316 = vmatmul.mubr.f32.gmra.mxu0 %v1182
        %v1317 = vpop.f32.mrf.mxu0
        %v1318 = vadd.f32 0.0, %v1317
        %v1319 = vpop.f32.mrf.mxu0
        %1320 = vmatprep.mubr.f32.mxu0 0.0
        %1321 = vmatmul.mubr.f32.gmra.mxu0 %v1185
        %v1322 = vpop.f32.mrf.mxu0
        %v1323 = vadd.f32 0.0, %v1322
        %v1324 = vpop.f32.mrf.mxu0
        %1325 = vmatprep.mubr.f32.mxu0 0.0
        %1326 = vmatmul.mubr.f32.gmra.mxu0 %v1188
        %v1327 = vpop.f32.mrf.mxu0
        %v1328 = vadd.f32 0.0, %v1327
        %v1329 = vpop.f32.mrf.mxu0
        %1330 = vmatprep.mubr.f32.mxu0 0.0
        %1331 = vmatmul.mubr.f32.gmra.mxu0 %v1191
        %v1332 = vpop.f32.mrf.mxu0
        %v1333 = vadd.f32 0.0, %v1332
        %v1334 = vpop.f32.mrf.mxu0
        %1335 = vmatprep.mubr.f32.mxu0 0.0
        %1336 = vmatmul.mubr.f32.gmra.mxu0 %v1194
        %v1337 = vpop.f32.mrf.mxu0
        %v1338 = vadd.f32 0.0, %v1337
        %v1339 = vpop.f32.mrf.mxu0
        %1340 = vdwg.mxu0
        %v1341 = vadd.f32 %v1263, %v255
        %v1342 = vadd.f32 %v1268, %v255
        %v1343 = vadd.f32 %v1273, %v255
        %v1344 = vadd.f32 %v1278, %v255
        %v1345 = vadd.f32 %v1283, %v255
        %v1346 = vadd.f32 %v1288, %v255
        %v1347 = vadd.f32 %v1293, %v255
        %v1348 = vadd.f32 %v1298, %v255
        %v1349 = vadd.f32 %v1303, %v255
        %v1350 = vadd.f32 %v1308, %v255
        %v1351 = vadd.f32 %v1313, %v255
        %v1352 = vadd.f32 %v1318, %v255
        %v1353 = vadd.f32 %v1323, %v255
        %v1354 = vadd.f32 %v1328, %v255
        %v1355 = vadd.f32 %v1333, %v255
        %v1356 = vadd.f32 %v1338, %v255
        %v1357 = vxor.u32 %v1341, 2147483648
        %v1358 = vxor.u32 %v1342, 2147483648
        %v1359 = vxor.u32 %v1343, 2147483648
        %v1360 = vxor.u32 %v1344, 2147483648
        %v1361 = vxor.u32 %v1345, 2147483648
        %v1362 = vxor.u32 %v1346, 2147483648
        %v1363 = vxor.u32 %v1347, 2147483648
        %v1364 = vxor.u32 %v1348, 2147483648
        %v1365 = vxor.u32 %v1349, 2147483648
        %v1366 = vxor.u32 %v1350, 2147483648
        %v1367 = vxor.u32 %v1351, 2147483648
        %v1368 = vxor.u32 %v1352, 2147483648
        %v1369 = vxor.u32 %v1353, 2147483648
        %v1370 = vxor.u32 %v1354, 2147483648
        %v1371 = vxor.u32 %v1355, 2147483648
        %v1372 = vxor.u32 %v1356, 2147483648
        %v1373 = vmul.f32 %v1357, 1.442695
        %v1374 = vpow.pop %v1373
        %v1375 = vmul.f32 %v1358, 1.442695
        %v1376 = vpow.pop %v1375
        %v1377 = vmul.f32 %v1359, 1.442695
        %v1378 = vpow.pop %v1377
        %v1379 = vmul.f32 %v1360, 1.442695
        %v1380 = vpow.pop %v1379
        %v1381 = vmul.f32 %v1361, 1.442695
        %v1382 = vpow.pop %v1381
        %v1383 = vmul.f32 %v1362, 1.442695
        %v1384 = vpow.pop %v1383
        %v1385 = vmul.f32 %v1363, 1.442695
        %v1386 = vpow.pop %v1385
        %v1387 = vmul.f32 %v1364, 1.442695
        %v1388 = vpow.pop %v1387
        %v1389 = vmul.f32 %v1365, 1.442695
        %v1390 = vpow.pop %v1389
        %v1391 = vmul.f32 %v1366, 1.442695
        %v1392 = vpow.pop %v1391
        %v1393 = vmul.f32 %v1367, 1.442695
        %v1394 = vpow.pop %v1393
        %v1395 = vmul.f32 %v1368, 1.442695
        %v1396 = vpow.pop %v1395
        %v1397 = vmul.f32 %v1369, 1.442695
        %v1398 = vpow.pop %v1397
        %v1399 = vmul.f32 %v1370, 1.442695
        %v1400 = vpow.pop %v1399
        %v1401 = vmul.f32 %v1371, 1.442695
        %v1402 = vpow.pop %v1401
        %v1403 = vmul.f32 %v1372, 1.442695
        %v1404 = vpow.pop %v1403
        %v1405 = vadd.f32 %v1374, 1.0
        %v1406 = vadd.f32 %v1376, 1.0
        %v1407 = vadd.f32 %v1378, 1.0
        %v1408 = vadd.f32 %v1380, 1.0
        %v1409 = vadd.f32 %v1382, 1.0
        %v1410 = vadd.f32 %v1384, 1.0
        %v1411 = vadd.f32 %v1386, 1.0
        %v1412 = vadd.f32 %v1388, 1.0
        %v1413 = vadd.f32 %v1390, 1.0
        %v1414 = vadd.f32 %v1392, 1.0
        %v1415 = vadd.f32 %v1394, 1.0
        %v1416 = vadd.f32 %v1396, 1.0
        %v1417 = vadd.f32 %v1398, 1.0
        %v1418 = vadd.f32 %v1400, 1.0
        %v1419 = vadd.f32 %v1402, 1.0
        %v1420 = vadd.f32 %v1404, 1.0
        %v1421 = vrcp.pop %v1405
        %v1422 = vmul.f32 1.0, %v1421
        %v1423 = vrcp.pop %v1406
        %v1424 = vmul.f32 1.0, %v1423
        %v1425 = vrcp.pop %v1407
        %v1426 = vmul.f32 1.0, %v1425
        %v1427 = vrcp.pop %v1408
        %v1428 = vmul.f32 1.0, %v1427
        %v1429 = vrcp.pop %v1409
        %v1430 = vmul.f32 1.0, %v1429
        %v1431 = vrcp.pop %v1410
        %v1432 = vmul.f32 1.0, %v1431
        %v1433 = vrcp.pop %v1411
        %v1434 = vmul.f32 1.0, %v1433
        %v1435 = vrcp.pop %v1412
        %v1436 = vmul.f32 1.0, %v1435
        %v1437 = vrcp.pop %v1413
        %v1438 = vmul.f32 1.0, %v1437
        %v1439 = vrcp.pop %v1414
        %v1440 = vmul.f32 1.0, %v1439
        %v1441 = vrcp.pop %v1415
        %v1442 = vmul.f32 1.0, %v1441
        %v1443 = vrcp.pop %v1416
        %v1444 = vmul.f32 1.0, %v1443
        %v1445 = vrcp.pop %v1417
        %v1446 = vmul.f32 1.0, %v1445
        %v1447 = vrcp.pop %v1418
        %v1448 = vmul.f32 1.0, %v1447
        %v1449 = vrcp.pop %v1419
        %v1450 = vmul.f32 1.0, %v1449
        %v1451 = vrcp.pop %v1420
        %v1452 = vmul.f32 1.0, %v1451
        %1454 = vrot.lane.b32.xlu0 %v260, 64
        %v1455 = vpop.permute.xlu0 %1454
        %v1457 = vadd.f32 %v1263, %v1455
        %v1458 = vadd.f32 %v1268, %v1455
        %v1459 = vadd.f32 %v1273, %v1455
        %v1460 = vadd.f32 %v1278, %v1455
        %v1461 = vadd.f32 %v1283, %v1455
        %v1462 = vadd.f32 %v1288, %v1455
        %v1463 = vadd.f32 %v1293, %v1455
        %v1464 = vadd.f32 %v1298, %v1455
        %v1465 = vadd.f32 %v1303, %v1455
        %v1466 = vadd.f32 %v1308, %v1455
        %v1467 = vadd.f32 %v1313, %v1455
        %v1468 = vadd.f32 %v1318, %v1455
        %v1469 = vadd.f32 %v1323, %v1455
        %v1470 = vadd.f32 %v1328, %v1455
        %v1471 = vadd.f32 %v1333, %v1455
        %v1472 = vadd.f32 %v1338, %v1455
        %1474 = vrot.lane.b32.xlu0 %v265, 96
        %v1475 = vpop.permute.xlu0 %1474
        %v1477 = vadd.f32 %v1263, %v1475
        %v1478 = vadd.f32 %v1268, %v1475
        %v1479 = vadd.f32 %v1273, %v1475
        %v1480 = vadd.f32 %v1278, %v1475
        %v1481 = vadd.f32 %v1283, %v1475
        %v1482 = vadd.f32 %v1288, %v1475
        %v1483 = vadd.f32 %v1293, %v1475
        %v1484 = vadd.f32 %v1298, %v1475
        %v1485 = vadd.f32 %v1303, %v1475
        %v1486 = vadd.f32 %v1308, %v1475
        %v1487 = vadd.f32 %v1313, %v1475
        %v1488 = vadd.f32 %v1318, %v1475
        %v1489 = vadd.f32 %v1323, %v1475
        %v1490 = vadd.f32 %v1328, %v1475
        %v1491 = vadd.f32 %v1333, %v1475
        %v1492 = vadd.f32 %v1338, %v1475
        %1509 = vrot.lane.b32.xlu0 %v1477, 32
        %v1510 = vpop.permute.xlu0 %1509
        %1511 = vrot.lane.b32.xlu0 %v1478, 32
        %v1512 = vpop.permute.xlu0 %1511
        %1513 = vrot.lane.b32.xlu0 %v1479, 32
        %v1514 = vpop.permute.xlu0 %1513
        %1515 = vrot.lane.b32.xlu0 %v1480, 32
        %v1516 = vpop.permute.xlu0 %1515
        %1517 = vrot.lane.b32.xlu0 %v1481, 32
        %v1518 = vpop.permute.xlu0 %1517
        %1519 = vrot.lane.b32.xlu0 %v1482, 32
        %v1520 = vpop.permute.xlu0 %1519
        %1521 = vrot.lane.b32.xlu0 %v1483, 32
        %v1522 = vpop.permute.xlu0 %1521
        %1523 = vrot.lane.b32.xlu0 %v1484, 32
        %v1524 = vpop.permute.xlu0 %1523
        %1525 = vrot.lane.b32.xlu0 %v1485, 32
        %v1526 = vpop.permute.xlu0 %1525
        %1527 = vrot.lane.b32.xlu0 %v1486, 32
        %v1528 = vpop.permute.xlu0 %1527
        %1529 = vrot.lane.b32.xlu0 %v1487, 32
        %v1530 = vpop.permute.xlu0 %1529
        %1531 = vrot.lane.b32.xlu0 %v1488, 32
        %v1532 = vpop.permute.xlu0 %1531
        %1533 = vrot.lane.b32.xlu0 %v1489, 32
        %v1534 = vpop.permute.xlu0 %1533
        %1535 = vrot.lane.b32.xlu0 %v1490, 32
        %v1536 = vpop.permute.xlu0 %1535
        %1537 = vrot.lane.b32.xlu0 %v1491, 32
        %v1538 = vpop.permute.xlu0 %1537
        %1539 = vrot.lane.b32.xlu0 %v1492, 32
        %v1540 = vpop.permute.xlu0 %1539
        %v1557 = vmul.f32 %v1422, %v1510
        %v1558 = vmul.f32 %v1424, %v1512
        %v1559 = vmul.f32 %v1426, %v1514
        %v1560 = vmul.f32 %v1428, %v1516
        %v1561 = vmul.f32 %v1430, %v1518
        %v1562 = vmul.f32 %v1432, %v1520
        %v1563 = vmul.f32 %v1434, %v1522
        %v1564 = vmul.f32 %v1436, %v1524
        %v1565 = vmul.f32 %v1438, %v1526
        %v1566 = vmul.f32 %v1440, %v1528
        %v1567 = vmul.f32 %v1442, %v1530
        %v1568 = vmul.f32 %v1444, %v1532
        %v1569 = vmul.f32 %v1446, %v1534
        %v1570 = vmul.f32 %v1448, %v1536
        %v1571 = vmul.f32 %v1450, %v1538
        %v1572 = vmul.f32 %v1452, %v1540
        %1589 = vrot.lane.b32.xlu0 %v1557, 64
        %v1590 = vpop.permute.xlu0 %1589
        %1591 = vrot.lane.b32.xlu0 %v1558, 64
        %v1592 = vpop.permute.xlu0 %1591
        %1593 = vrot.lane.b32.xlu0 %v1559, 64
        %v1594 = vpop.permute.xlu0 %1593
        %1595 = vrot.lane.b32.xlu0 %v1560, 64
        %v1596 = vpop.permute.xlu0 %1595
        %1597 = vrot.lane.b32.xlu0 %v1561, 64
        %v1598 = vpop.permute.xlu0 %1597
        %1599 = vrot.lane.b32.xlu0 %v1562, 64
        %v1600 = vpop.permute.xlu0 %1599
        %1601 = vrot.lane.b32.xlu0 %v1563, 64
        %v1602 = vpop.permute.xlu0 %1601
        %1603 = vrot.lane.b32.xlu0 %v1564, 64
        %v1604 = vpop.permute.xlu0 %1603
        %1605 = vrot.lane.b32.xlu0 %v1565, 64
        %v1606 = vpop.permute.xlu0 %1605
        %1607 = vrot.lane.b32.xlu0 %v1566, 64
        %v1608 = vpop.permute.xlu0 %1607
        %1609 = vrot.lane.b32.xlu0 %v1567, 64
        %v1610 = vpop.permute.xlu0 %1609
        %1611 = vrot.lane.b32.xlu0 %v1568, 64
        %v1612 = vpop.permute.xlu0 %1611
        %1613 = vrot.lane.b32.xlu0 %v1569, 64
        %v1614 = vpop.permute.xlu0 %1613
        %1615 = vrot.lane.b32.xlu0 %v1570, 64
        %v1616 = vpop.permute.xlu0 %1615
        %1617 = vrot.lane.b32.xlu0 %v1571, 64
        %v1618 = vpop.permute.xlu0 %1617
        %1619 = vrot.lane.b32.xlu0 %v1572, 64
        %v1620 = vpop.permute.xlu0 %1619
        %v1637 = vadd.f32 %v1457, %v1590
        %v1638 = vadd.f32 %v1458, %v1592
        %v1639 = vadd.f32 %v1459, %v1594
        %v1640 = vadd.f32 %v1460, %v1596
        %v1641 = vadd.f32 %v1461, %v1598
        %v1642 = vadd.f32 %v1462, %v1600
        %v1643 = vadd.f32 %v1463, %v1602
        %v1644 = vadd.f32 %v1464, %v1604
        %v1645 = vadd.f32 %v1465, %v1606
        %v1646 = vadd.f32 %v1466, %v1608
        %v1647 = vadd.f32 %v1467, %v1610
        %v1648 = vadd.f32 %v1468, %v1612
        %v1649 = vadd.f32 %v1469, %v1614
        %v1650 = vadd.f32 %v1470, %v1616
        %v1651 = vadd.f32 %v1471, %v1618
        %v1652 = vadd.f32 %v1472, %v1620
        %v1653 = vtanh.pop %v1637
        %v1654 = vtanh.pop %v1638
        %v1655 = vtanh.pop %v1639
        %v1656 = vtanh.pop %v1640
        %v1657 = vtanh.pop %v1641
        %v1658 = vtanh.pop %v1642
        %v1659 = vtanh.pop %v1643
        %v1660 = vtanh.pop %v1644
        %v1661 = vtanh.pop %v1645
        %v1662 = vtanh.pop %v1646
        %v1663 = vtanh.pop %v1647
        %v1664 = vtanh.pop %v1648
        %v1665 = vtanh.pop %v1649
        %v1666 = vtanh.pop %v1650
        %v1667 = vtanh.pop %v1651
        %v1668 = vtanh.pop %v1652
        %v1669 = vsub.f32 1.0, %v1422
        %v1670 = vsub.f32 1.0, %v1424
        %v1671 = vsub.f32 1.0, %v1426
        %v1672 = vsub.f32 1.0, %v1428
        %v1673 = vsub.f32 1.0, %v1430
        %v1674 = vsub.f32 1.0, %v1432
        %v1675 = vsub.f32 1.0, %v1434
        %v1676 = vsub.f32 1.0, %v1436
        %v1677 = vsub.f32 1.0, %v1438
        %v1678 = vsub.f32 1.0, %v1440
        %v1679 = vsub.f32 1.0, %v1442
        %v1680 = vsub.f32 1.0, %v1444
        %v1681 = vsub.f32 1.0, %v1446
        %v1682 = vsub.f32 1.0, %v1448
        %v1683 = vsub.f32 1.0, %v1450
        %v1684 = vsub.f32 1.0, %v1452
        %1701 = vrot.lane.b32.xlu0 %v1653, 96
        %v1702 = vpop.permute.xlu0 %1701
        %1703 = vrot.lane.b32.xlu0 %v1654, 96
        %v1704 = vpop.permute.xlu0 %1703
        %1705 = vrot.lane.b32.xlu0 %v1655, 96
        %v1706 = vpop.permute.xlu0 %1705
        %1707 = vrot.lane.b32.xlu0 %v1656, 96
        %v1708 = vpop.permute.xlu0 %1707
        %1709 = vrot.lane.b32.xlu0 %v1657, 96
        %v1710 = vpop.permute.xlu0 %1709
        %1711 = vrot.lane.b32.xlu0 %v1658, 96
        %v1712 = vpop.permute.xlu0 %1711
        %1713 = vrot.lane.b32.xlu0 %v1659, 96
        %v1714 = vpop.permute.xlu0 %1713
        %1715 = vrot.lane.b32.xlu0 %v1660, 96
        %v1716 = vpop.permute.xlu0 %1715
        %1717 = vrot.lane.b32.xlu0 %v1661, 96
        %v1718 = vpop.permute.xlu0 %1717
        %1719 = vrot.lane.b32.xlu0 %v1662, 96
        %v1720 = vpop.permute.xlu0 %1719
        %1721 = vrot.lane.b32.xlu0 %v1663, 96
        %v1722 = vpop.permute.xlu0 %1721
        %1723 = vrot.lane.b32.xlu0 %v1664, 96
        %v1724 = vpop.permute.xlu0 %1723
        %1725 = vrot.lane.b32.xlu0 %v1665, 96
        %v1726 = vpop.permute.xlu0 %1725
        %1727 = vrot.lane.b32.xlu0 %v1666, 96
        %v1728 = vpop.permute.xlu0 %1727
        %1729 = vrot.lane.b32.xlu0 %v1667, 96
        %v1730 = vpop.permute.xlu0 %1729
        %1731 = vrot.lane.b32.xlu0 %v1668, 96
        %v1732 = vpop.permute.xlu0 %1731
        %v1749 = vmul.f32 %v1669, %v1702
        %v1750 = vmul.f32 %v1670, %v1704
        %v1751 = vmul.f32 %v1671, %v1706
        %v1752 = vmul.f32 %v1672, %v1708
        %v1753 = vmul.f32 %v1673, %v1710
        %v1754 = vmul.f32 %v1674, %v1712
        %v1755 = vmul.f32 %v1675, %v1714
        %v1756 = vmul.f32 %v1676, %v1716
        %v1757 = vmul.f32 %v1677, %v1718
        %v1758 = vmul.f32 %v1678, %v1720
        %v1759 = vmul.f32 %v1679, %v1722
        %v1760 = vmul.f32 %v1680, %v1724
        %v1761 = vmul.f32 %v1681, %v1726
        %v1762 = vmul.f32 %v1682, %v1728
        %v1763 = vmul.f32 %v1683, %v1730
        %v1764 = vmul.f32 %v1684, %v1732
        %v1765 = vmul.f32 %v1422, %v1084
        %v1766 = vmul.f32 %v1424, %v1086
        %v1767 = vmul.f32 %v1426, %v1088
        %v1768 = vmul.f32 %v1428, %v1090
        %v1769 = vmul.f32 %v1430, %v1092
        %v1770 = vmul.f32 %v1432, %v1094
        %v1771 = vmul.f32 %v1434, %v1096
        %v1772 = vmul.f32 %v1436, %v1098
        %v1773 = vmul.f32 %v1438, %v1100
        %v1774 = vmul.f32 %v1440, %v1102
        %v1775 = vmul.f32 %v1442, %v1104
        %v1776 = vmul.f32 %v1444, %v1106
        %v1777 = vmul.f32 %v1446, %v1108
        %v1778 = vmul.f32 %v1448, %v1110
        %v1779 = vmul.f32 %v1450, %v1112
        %v1780 = vmul.f32 %v1452, %v1114
        %v1781 = vadd.f32 %v1749, %v1765
        %v1782 = vadd.f32 %v1750, %v1766
        %v1783 = vadd.f32 %v1751, %v1767
        %v1784 = vadd.f32 %v1752, %v1768
        %v1785 = vadd.f32 %v1753, %v1769
        %v1786 = vadd.f32 %v1754, %v1770
        %v1787 = vadd.f32 %v1755, %v1771
        %v1788 = vadd.f32 %v1756, %v1772
        %v1789 = vadd.f32 %v1757, %v1773
        %v1790 = vadd.f32 %v1758, %v1774
        %v1791 = vadd.f32 %v1759, %v1775
        %v1792 = vadd.f32 %v1760, %v1776
        %v1793 = vadd.f32 %v1761, %v1777
        %v1794 = vadd.f32 %v1762, %v1778
        %v1795 = vadd.f32 %v1763, %v1779
        %v1796 = vadd.f32 %v1764, %v1780
        %1813 = vrot.lane.b32.xlu0 %v1781, 96
        %v1814 = vpop.permute.xlu0 %1813
        %1815 = vrot.lane.b32.xlu0 %v1782, 96
        %v1816 = vpop.permute.xlu0 %1815
        %1817 = vrot.lane.b32.xlu0 %v1783, 96
        %v1818 = vpop.permute.xlu0 %1817
        %1819 = vrot.lane.b32.xlu0 %v1784, 96
        %v1820 = vpop.permute.xlu0 %1819
        %1821 = vrot.lane.b32.xlu0 %v1785, 96
        %v1822 = vpop.permute.xlu0 %1821
        %1823 = vrot.lane.b32.xlu0 %v1786, 96
        %v1824 = vpop.permute.xlu0 %1823
        %1825 = vrot.lane.b32.xlu0 %v1787, 96
        %v1826 = vpop.permute.xlu0 %1825
        %1827 = vrot.lane.b32.xlu0 %v1788, 96
        %v1828 = vpop.permute.xlu0 %1827
        %1829 = vrot.lane.b32.xlu0 %v1789, 96
        %v1830 = vpop.permute.xlu0 %1829
        %1831 = vrot.lane.b32.xlu0 %v1790, 96
        %v1832 = vpop.permute.xlu0 %1831
        %1833 = vrot.lane.b32.xlu0 %v1791, 96
        %v1834 = vpop.permute.xlu0 %1833
        %1835 = vrot.lane.b32.xlu0 %v1792, 96
        %v1836 = vpop.permute.xlu0 %1835
        %1837 = vrot.lane.b32.xlu0 %v1793, 96
        %v1838 = vpop.permute.xlu0 %1837
        %1839 = vrot.lane.b32.xlu0 %v1794, 96
        %v1840 = vpop.permute.xlu0 %1839
        %1841 = vrot.lane.b32.xlu0 %v1795, 96
        %v1842 = vpop.permute.xlu0 %1841
        %1843 = vrot.lane.b32.xlu0 %v1796, 96
        %v1844 = vpop.permute.xlu0 %1843
        %v1845 = vsel %vm276, %v1814, 0
        %v1847 = vsel %vm276, %v1816, 0
        %v1849 = vsel %vm276, %v1818, 0
        %v1851 = vsel %vm276, %v1820, 0
        %v1853 = vsel %vm276, %v1822, 0
        %v1855 = vsel %vm276, %v1824, 0
        %v1857 = vsel %vm276, %v1826, 0
        %v1859 = vsel %vm276, %v1828, 0
        %v1861 = vsel %vm276, %v1830, 0
        %v1863 = vsel %vm276, %v1832, 0
        %v1865 = vsel %vm276, %v1834, 0
        %v1867 = vsel %vm276, %v1836, 0
        %v1869 = vsel %vm276, %v1838, 0
        %v1871 = vsel %vm276, %v1840, 0
        %v1873 = vsel %vm276, %v1842, 0
        %v1875 = vsel %vm276, %v1844, 0
        %1877 = vmatprep.subr.mxu0 0.0
        %1878 = vmatpush1.msra.mxu0 0.0
        %1879 = vmatprep.subr.mxu0 0.0
        %1880 = vmatpush1.msra.mxu0 0.0
        %1881 = vmatprep.subr.mxu0 0.0
        %1882 = vmatpush1.msra.mxu0 0.0
        %1883 = vmatprep.subr.mxu0 0.0
        %1884 = vmatpush1.msra.mxu0 0.0
        %1885 = vmatprep.subr.mxu0 0.0
        %1886 = vmatpush1.msra.mxu0 0.0
        %1887 = vmatprep.subr.mxu0 0.0
        %1888 = vmatpush1.msra.mxu0 0.0
        %1889 = vmatprep.subr.mxu0 0.0
        %1890 = vmatpush1.msra.mxu0 0.0
        %1891 = vmatprep.subr.mxu0 0.0
        %1892 = vmatpush1.msra.mxu0 0.0
        %1893 = vmatprep.subr.mxu0 0.0
        %1894 = vmatpush1.msra.mxu0 0.0
        %1895 = vmatprep.subr.mxu0 0.0
        %1896 = vmatpush1.msra.mxu0 0.0
        %1897 = vmatprep.subr.mxu0 0.0
        %1898 = vmatpush1.msra.mxu0 0.0
        %1899 = vmatprep.subr.mxu0 0.0
        %1900 = vmatpush1.msra.mxu0 0.0
        %1901 = vmatprep.subr.mxu0 0.0
        %1902 = vmatpush1.msra.mxu0 %v238
        %1903 = vmatprep.subr.mxu0 0.0
        %1904 = vmatpush1.msra.mxu0 %v237
        %1905 = vmatprep.subr.mxu0 0.0
        %1906 = vmatpush1.msra.mxu0 %v236
        %1907 = vmatprep.subr.mxu0 0.0
        %1908 = vmatpush1.msra.mxu0 %v235
        %1909 = vmatprep.subr.mxu0 0.0
        %1910 = vmatpush2.msra.mxu0 0.0
        %1911 = vmatprep.subr.mxu0 0.0
        %1912 = vmatpush2.msra.mxu0 0.0
        %1913 = vmatprep.subr.mxu0 0.0
        %1914 = vmatpush2.msra.mxu0 0.0
        %1915 = vmatprep.subr.mxu0 0.0
        %1916 = vmatpush2.msra.mxu0 0.0
        %1917 = vmatprep.subr.mxu0 0.0
        %1918 = vmatpush2.msra.mxu0 0.0
        %1919 = vmatprep.subr.mxu0 0.0
        %1920 = vmatpush2.msra.mxu0 0.0
        %1921 = vmatprep.subr.mxu0 0.0
        %1922 = vmatpush2.msra.mxu0 0.0
        %1923 = vmatprep.subr.mxu0 0.0
        %1924 = vmatpush2.msra.mxu0 0.0
        %1925 = vmatprep.subr.mxu0 0.0
        %1926 = vmatpush2.msra.mxu0 0.0
        %1927 = vmatprep.subr.mxu0 0.0
        %1928 = vmatpush2.msra.mxu0 0.0
        %1929 = vmatprep.subr.mxu0 0.0
        %1930 = vmatpush2.msra.mxu0 0.0
        %1931 = vmatprep.subr.mxu0 0.0
        %1932 = vmatpush2.msra.mxu0 0.0
        %1933 = vmatprep.subr.mxu0 0.0
        %1934 = vmatpush2.msra.mxu0 0.0
        %1935 = vmatprep.subr.mxu0 0.0
        %1936 = vmatpush2.msra.mxu0 0.0
        %1937 = vmatprep.subr.mxu0 0.0
        %1938 = vmatpush2.msra.mxu0 0.0
        %1939 = vmatprep.subr.mxu0 0.0
        %1940 = vmatpush2.msra.mxu0 0.0
        %1941 = vmatprep.mubr.f32.mxu0 0.0
        %1942 = vmatmul.mubr.f32.gmra.mxu0 %v1845
        %v1943 = vpop.f32.mrf.mxu0
        %v1944 = vadd.f32 0.0, %v1943
        %v1945 = vpop.f32.mrf.mxu0
        %1946 = vmatprep.mubr.f32.mxu0 0.0
        %1947 = vmatmul.mubr.f32.gmra.mxu0 %v1847
        %v1948 = vpop.f32.mrf.mxu0
        %v1949 = vadd.f32 0.0, %v1948
        %v1950 = vpop.f32.mrf.mxu0
        %1951 = vmatprep.mubr.f32.mxu0 0.0
        %1952 = vmatmul.mubr.f32.gmra.mxu0 %v1849
        %v1953 = vpop.f32.mrf.mxu0
        %v1954 = vadd.f32 0.0, %v1953
        %v1955 = vpop.f32.mrf.mxu0
        %1956 = vmatprep.mubr.f32.mxu0 0.0
        %1957 = vmatmul.mubr.f32.gmra.mxu0 %v1851
        %v1958 = vpop.f32.mrf.mxu0
        %v1959 = vadd.f32 0.0, %v1958
        %v1960 = vpop.f32.mrf.mxu0
        %1961 = vmatprep.mubr.f32.mxu0 0.0
        %1962 = vmatmul.mubr.f32.gmra.mxu0 %v1853
        %v1963 = vpop.f32.mrf.mxu0
        %v1964 = vadd.f32 0.0, %v1963
        %v1965 = vpop.f32.mrf.mxu0
        %1966 = vmatprep.mubr.f32.mxu0 0.0
        %1967 = vmatmul.mubr.f32.gmra.mxu0 %v1855
        %v1968 = vpop.f32.mrf.mxu0
        %v1969 = vadd.f32 0.0, %v1968
        %v1970 = vpop.f32.mrf.mxu0
        %1971 = vmatprep.mubr.f32.mxu0 0.0
        %1972 = vmatmul.mubr.f32.gmra.mxu0 %v1857
        %v1973 = vpop.f32.mrf.mxu0
        %v1974 = vadd.f32 0.0, %v1973
        %v1975 = vpop.f32.mrf.mxu0
        %1976 = vmatprep.mubr.f32.mxu0 0.0
        %1977 = vmatmul.mubr.f32.gmra.mxu0 %v1859
        %v1978 = vpop.f32.mrf.mxu0
        %v1979 = vadd.f32 0.0, %v1978
        %v1980 = vpop.f32.mrf.mxu0
        %1981 = vmatprep.mubr.f32.mxu0 0.0
        %1982 = vmatmul.mubr.f32.gmra.mxu0 %v1861
        %v1983 = vpop.f32.mrf.mxu0
        %v1984 = vadd.f32 0.0, %v1983
        %v1985 = vpop.f32.mrf.mxu0
        %1986 = vmatprep.mubr.f32.mxu0 0.0
        %1987 = vmatmul.mubr.f32.gmra.mxu0 %v1863
        %v1988 = vpop.f32.mrf.mxu0
        %v1989 = vadd.f32 0.0, %v1988
        %v1990 = vpop.f32.mrf.mxu0
        %1991 = vmatprep.mubr.f32.mxu0 0.0
        %1992 = vmatmul.mubr.f32.gmra.mxu0 %v1865
        %v1993 = vpop.f32.mrf.mxu0
        %v1994 = vadd.f32 0.0, %v1993
        %v1995 = vpop.f32.mrf.mxu0
        %1996 = vmatprep.mubr.f32.mxu0 0.0
        %1997 = vmatmul.mubr.f32.gmra.mxu0 %v1867
        %v1998 = vpop.f32.mrf.mxu0
        %v1999 = vadd.f32 0.0, %v1998
        %v2000 = vpop.f32.mrf.mxu0
        %2001 = vmatprep.mubr.f32.mxu0 0.0
        %2002 = vmatmul.mubr.f32.gmra.mxu0 %v1869
        %v2003 = vpop.f32.mrf.mxu0
        %v2004 = vadd.f32 0.0, %v2003
        %v2005 = vpop.f32.mrf.mxu0
        %2006 = vmatprep.mubr.f32.mxu0 0.0
        %2007 = vmatmul.mubr.f32.gmra.mxu0 %v1871
        %v2008 = vpop.f32.mrf.mxu0
        %v2009 = vadd.f32 0.0, %v2008
        %v2010 = vpop.f32.mrf.mxu0
        %2011 = vmatprep.mubr.f32.mxu0 0.0
        %2012 = vmatmul.mubr.f32.gmra.mxu0 %v1873
        %v2013 = vpop.f32.mrf.mxu0
        %v2014 = vadd.f32 0.0, %v2013
        %v2015 = vpop.f32.mrf.mxu0
        %2016 = vmatprep.mubr.f32.mxu0 0.0
        %2017 = vmatmul.mubr.f32.gmra.mxu0 %v1875
        %v2018 = vpop.f32.mrf.mxu0
        %v2019 = vadd.f32 0.0, %v2018
        %v2020 = vpop.f32.mrf.mxu0
        %2021 = vdwg.mxu0
        %2038 = vrot.lane.b32.xlu0 %v1944, 96
        %v2039 = vpop.permute.xlu0 %2038
        %2040 = vrot.lane.b32.xlu0 %v1949, 96
        %v2041 = vpop.permute.xlu0 %2040
        %2042 = vrot.lane.b32.xlu0 %v1954, 96
        %v2043 = vpop.permute.xlu0 %2042
        %2044 = vrot.lane.b32.xlu0 %v1959, 96
        %v2045 = vpop.permute.xlu0 %2044
        %2046 = vrot.lane.b32.xlu0 %v1964, 96
        %v2047 = vpop.permute.xlu0 %2046
        %2048 = vrot.lane.b32.xlu0 %v1969, 96
        %v2049 = vpop.permute.xlu0 %2048
        %2050 = vrot.lane.b32.xlu0 %v1974, 96
        %v2051 = vpop.permute.xlu0 %2050
        %2052 = vrot.lane.b32.xlu0 %v1979, 96
        %v2053 = vpop.permute.xlu0 %2052
        %2054 = vrot.lane.b32.xlu0 %v1984, 96
        %v2055 = vpop.permute.xlu0 %2054
        %2056 = vrot.lane.b32.xlu0 %v1989, 96
        %v2057 = vpop.permute.xlu0 %2056
        %2058 = vrot.lane.b32.xlu0 %v1994, 96
        %v2059 = vpop.permute.xlu0 %2058
        %2060 = vrot.lane.b32.xlu0 %v1999, 96
        %v2061 = vpop.permute.xlu0 %2060
        %2062 = vrot.lane.b32.xlu0 %v2004, 96
        %v2063 = vpop.permute.xlu0 %2062
        %2064 = vrot.lane.b32.xlu0 %v2009, 96
        %v2065 = vpop.permute.xlu0 %2064
        %2066 = vrot.lane.b32.xlu0 %v2014, 96
        %v2067 = vpop.permute.xlu0 %2066
        %2068 = vrot.lane.b32.xlu0 %v2019, 96
        %v2069 = vpop.permute.xlu0 %2068
        %2086 = vmatprep.subr.mxu0 0.0
        %2087 = vmatpush1.msra.mxu0 %v2069
        %2088 = vmatprep.subr.mxu0 0.0
        %2089 = vmatpush1.msra.mxu0 %v2067
        %2090 = vmatprep.subr.mxu0 0.0
        %2091 = vmatpush1.msra.mxu0 %v2065
        %2092 = vmatprep.subr.mxu0 0.0
        %2093 = vmatpush1.msra.mxu0 %v2063
        %2094 = vmatprep.subr.mxu0 0.0
        %2095 = vmatpush1.msra.mxu0 %v2061
        %2096 = vmatprep.subr.mxu0 0.0
        %2097 = vmatpush1.msra.mxu0 %v2059
        %2098 = vmatprep.subr.mxu0 0.0
        %2099 = vmatpush1.msra.mxu0 %v2057
        %2100 = vmatprep.subr.mxu0 0.0
        %2101 = vmatpush1.msra.mxu0 %v2055
        %2102 = vmatprep.subr.mxu0 0.0
        %2103 = vmatpush1.msra.mxu0 %v2053
        %2104 = vmatprep.subr.mxu0 0.0
        %2105 = vmatpush1.msra.mxu0 %v2051
        %2106 = vmatprep.subr.mxu0 0.0
        %2107 = vmatpush1.msra.mxu0 %v2049
        %2108 = vmatprep.subr.mxu0 0.0
        %2109 = vmatpush1.msra.mxu0 %v2047
        %2110 = vmatprep.subr.mxu0 0.0
        %2111 = vmatpush1.msra.mxu0 %v2045
        %2112 = vmatprep.subr.mxu0 0.0
        %2113 = vmatpush1.msra.mxu0 %v2043
        %2114 = vmatprep.subr.mxu0 0.0
        %2115 = vmatpush1.msra.mxu0 %v2041
        %2116 = vmatprep.subr.mxu0 0.0
        %2117 = vmatpush1.msra.mxu0 %v2039
        %2118 = vmatprep.subr.mxu0 0.0
        %2119 = vmatpush2.msra.mxu0 0.0
        %2120 = vmatprep.subr.mxu0 0.0
        %2121 = vmatpush2.msra.mxu0 0.0
        %2122 = vmatprep.subr.mxu0 0.0
        %2123 = vmatpush2.msra.mxu0 0.0
        %2124 = vmatprep.subr.mxu0 0.0
        %2125 = vmatpush2.msra.mxu0 0.0
        %2126 = vmatprep.subr.mxu0 0.0
        %2127 = vmatpush2.msra.mxu0 0.0
        %2128 = vmatprep.subr.mxu0 0.0
        %2129 = vmatpush2.msra.mxu0 0.0
        %2130 = vmatprep.subr.mxu0 0.0
        %2131 = vmatpush2.msra.mxu0 0.0
        %2132 = vmatprep.subr.mxu0 0.0
        %2133 = vmatpush2.msra.mxu0 0.0
        %2134 = vmatprep.subr.mxu0 0.0
        %2135 = vmatpush2.msra.mxu0 0.0
        %2136 = vmatprep.subr.mxu0 0.0
        %2137 = vmatpush2.msra.mxu0 0.0
        %2138 = vmatprep.subr.mxu0 0.0
        %2139 = vmatpush2.msra.mxu0 0.0
        %2140 = vmatprep.subr.mxu0 0.0
        %2141 = vmatpush2.msra.mxu0 0.0
        %2142 = vmatprep.subr.mxu0 0.0
        %2143 = vmatpush2.msra.mxu0 0.0
        %2144 = vmatprep.subr.mxu0 0.0
        %2145 = vmatpush2.msra.mxu0 0.0
        %2146 = vmatprep.subr.mxu0 0.0
        %2147 = vmatpush2.msra.mxu0 0.0
        %2148 = vmatprep.subr.mxu0 0.0
        %2149 = vmatpush2.msra.mxu0 0.0
        %2150 = vmatprep.mubr.f32.mxu0 0.0
        %2151 = vmatmul.mubr.f32.gmra.mxu0 %v487
        %v2152 = vpop.f32.mrf.mxu0
        %v2153 = vadd.f32 0.0, %v2152
        %v2154 = vpop.f32.mrf.mxu0
        %2155 = vmatprep.mubr.f32.mxu0 0.0
        %2156 = vmatmul.mubr.f32.gmra.mxu0 %v488
        %v2157 = vpop.f32.mrf.mxu0
        %v2158 = vadd.f32 0.0, %v2157
        %v2159 = vpop.f32.mrf.mxu0
        %2160 = vmatprep.mubr.f32.mxu0 0.0
        %2161 = vmatmul.mubr.f32.gmra.mxu0 %v489
        %v2162 = vpop.f32.mrf.mxu0
        %v2163 = vadd.f32 0.0, %v2162
        %v2164 = vpop.f32.mrf.mxu0
        %2165 = vmatprep.mubr.f32.mxu0 0.0
        %2166 = vmatmul.mubr.f32.gmra.mxu0 %v490
        %v2167 = vpop.f32.mrf.mxu0
        %v2168 = vadd.f32 0.0, %v2167
        %v2169 = vpop.f32.mrf.mxu0
        %2170 = vmatprep.mubr.f32.mxu0 0.0
        %2171 = vmatmul.mubr.f32.gmra.mxu0 %v491
        %v2172 = vpop.f32.mrf.mxu0
        %v2173 = vadd.f32 0.0, %v2172
        %v2174 = vpop.f32.mrf.mxu0
        %2175 = vmatprep.mubr.f32.mxu0 0.0
        %2176 = vmatmul.mubr.f32.gmra.mxu0 %v492
        %v2177 = vpop.f32.mrf.mxu0
        %v2178 = vadd.f32 0.0, %v2177
        %v2179 = vpop.f32.mrf.mxu0
        %2180 = vmatprep.mubr.f32.mxu0 0.0
        %2181 = vmatmul.mubr.f32.gmra.mxu0 %v493
        %v2182 = vpop.f32.mrf.mxu0
        %v2183 = vadd.f32 0.0, %v2182
        %v2184 = vpop.f32.mrf.mxu0
        %2185 = vmatprep.mubr.f32.mxu0 0.0
        %2186 = vmatmul.mubr.f32.gmra.mxu0 %v494
        %v2187 = vpop.f32.mrf.mxu0
        %v2188 = vadd.f32 0.0, %v2187
        %v2189 = vpop.f32.mrf.mxu0
        %2190 = vmatprep.mubr.f32.mxu0 0.0
        %2191 = vmatmul.mubr.f32.gmra.mxu0 %v495
        %v2192 = vpop.f32.mrf.mxu0
        %v2193 = vadd.f32 0.0, %v2192
        %v2194 = vpop.f32.mrf.mxu0
        %2195 = vmatprep.mubr.f32.mxu0 0.0
        %2196 = vmatmul.mubr.f32.gmra.mxu0 %v496
        %v2197 = vpop.f32.mrf.mxu0
        %v2198 = vadd.f32 0.0, %v2197
        %v2199 = vpop.f32.mrf.mxu0
        %2200 = vmatprep.mubr.f32.mxu0 0.0
        %2201 = vmatmul.mubr.f32.gmra.mxu0 %v497
        %v2202 = vpop.f32.mrf.mxu0
        %v2203 = vadd.f32 0.0, %v2202
        %v2204 = vpop.f32.mrf.mxu0
        %2205 = vmatprep.mubr.f32.mxu0 0.0
        %2206 = vmatmul.mubr.f32.gmra.mxu0 %v498
        %v2207 = vpop.f32.mrf.mxu0
        %v2208 = vadd.f32 0.0, %v2207
        %v2209 = vpop.f32.mrf.mxu0
        %2210 = vmatprep.mubr.f32.mxu0 0.0
        %2211 = vmatmul.mubr.f32.gmra.mxu0 %v499
        %v2212 = vpop.f32.mrf.mxu0
        %v2213 = vadd.f32 0.0, %v2212
        %v2214 = vpop.f32.mrf.mxu0
        %2215 = vmatprep.mubr.f32.mxu0 0.0
        %2216 = vmatmul.mubr.f32.gmra.mxu0 %v500
        %v2217 = vpop.f32.mrf.mxu0
        %v2218 = vadd.f32 0.0, %v2217
        %v2219 = vpop.f32.mrf.mxu0
        %2220 = vmatprep.mubr.f32.mxu0 0.0
        %2221 = vmatmul.mubr.f32.gmra.mxu0 %v501
        %v2222 = vpop.f32.mrf.mxu0
        %v2223 = vadd.f32 0.0, %v2222
        %v2224 = vpop.f32.mrf.mxu0
        %2225 = vmatprep.mubr.f32.mxu0 0.0
        %2226 = vmatmul.mubr.f32.gmra.mxu0 %v502
        %v2227 = vpop.f32.mrf.mxu0
        %v2228 = vadd.f32 0.0, %v2227
        %v2229 = vpop.f32.mrf.mxu0
        %2230 = vdwg.mxu0
        %2231 = vmatprep.subr.mxu0 0.0
        %2232 = vmatpush1.msra.mxu0 %v2019
        %2233 = vmatprep.subr.mxu0 0.0
        %2234 = vmatpush1.msra.mxu0 %v2014
        %2235 = vmatprep.subr.mxu0 0.0
        %2236 = vmatpush1.msra.mxu0 %v2009
        %2237 = vmatprep.subr.mxu0 0.0
        %2238 = vmatpush1.msra.mxu0 %v2004
        %2239 = vmatprep.subr.mxu0 0.0
        %2240 = vmatpush1.msra.mxu0 %v1999
        %2241 = vmatprep.subr.mxu0 0.0
        %2242 = vmatpush1.msra.mxu0 %v1994
        %2243 = vmatprep.subr.mxu0 0.0
        %2244 = vmatpush1.msra.mxu0 %v1989
        %2245 = vmatprep.subr.mxu0 0.0
        %2246 = vmatpush1.msra.mxu0 %v1984
        %2247 = vmatprep.subr.mxu0 0.0
        %2248 = vmatpush1.msra.mxu0 %v1979
        %2249 = vmatprep.subr.mxu0 0.0
        %2250 = vmatpush1.msra.mxu0 %v1974
        %2251 = vmatprep.subr.mxu0 0.0
        %2252 = vmatpush1.msra.mxu0 %v1969
        %2253 = vmatprep.subr.mxu0 0.0
        %2254 = vmatpush1.msra.mxu0 %v1964
        %2255 = vmatprep.subr.mxu0 0.0
        %2256 = vmatpush1.msra.mxu0 %v1959
        %2257 = vmatprep.subr.mxu0 0.0
        %2258 = vmatpush1.msra.mxu0 %v1954
        %2259 = vmatprep.subr.mxu0 0.0
        %2260 = vmatpush1.msra.mxu0 %v1949
        %2261 = vmatprep.subr.mxu0 0.0
        %2262 = vmatpush1.msra.mxu0 %v1944
        %2263 = vmatprep.subr.mxu0 0.0
        %2264 = vmatpush2.msra.mxu0 0.0
        %2265 = vmatprep.subr.mxu0 0.0
        %2266 = vmatpush2.msra.mxu0 0.0
        %2267 = vmatprep.subr.mxu0 0.0
        %2268 = vmatpush2.msra.mxu0 0.0
        %2269 = vmatprep.subr.mxu0 0.0
        %2270 = vmatpush2.msra.mxu0 0.0
        %2271 = vmatprep.subr.mxu0 0.0
        %2272 = vmatpush2.msra.mxu0 0.0
        %2273 = vmatprep.subr.mxu0 0.0
        %2274 = vmatpush2.msra.mxu0 0.0
        %2275 = vmatprep.subr.mxu0 0.0
        %2276 = vmatpush2.msra.mxu0 0.0
        %2277 = vmatprep.subr.mxu0 0.0
        %2278 = vmatpush2.msra.mxu0 0.0
        %2279 = vmatprep.subr.mxu0 0.0
        %2280 = vmatpush2.msra.mxu0 0.0
        %2281 = vmatprep.subr.mxu0 0.0
        %2282 = vmatpush2.msra.mxu0 0.0
        %2283 = vmatprep.subr.mxu0 0.0
        %2284 = vmatpush2.msra.mxu0 0.0
        %2285 = vmatprep.subr.mxu0 0.0
        %2286 = vmatpush2.msra.mxu0 0.0
        %2287 = vmatprep.subr.mxu0 0.0
        %2288 = vmatpush2.msra.mxu0 0.0
        %2289 = vmatprep.subr.mxu0 0.0
        %2290 = vmatpush2.msra.mxu0 0.0
        %2291 = vmatprep.subr.mxu0 0.0
        %2292 = vmatpush2.msra.mxu0 0.0
        %2293 = vmatprep.subr.mxu0 0.0
        %2294 = vmatpush2.msra.mxu0 0.0
        %2295 = vmatprep.mubr.f32.mxu0 0.0
        %2296 = vmatmul.mubr.f32.gmra.mxu0 %v470
        %v2297 = vpop.f32.mrf.mxu0
        %v2298 = vadd.f32 %v2153, %v2297
        %v2299 = vpop.f32.mrf.mxu0
        %2300 = vmatprep.mubr.f32.mxu0 0.0
        %2301 = vmatmul.mubr.f32.gmra.mxu0 %v471
        %v2302 = vpop.f32.mrf.mxu0
        %v2303 = vadd.f32 %v2158, %v2302
        %v2304 = vpop.f32.mrf.mxu0
        %2305 = vmatprep.mubr.f32.mxu0 0.0
        %2306 = vmatmul.mubr.f32.gmra.mxu0 %v472
        %v2307 = vpop.f32.mrf.mxu0
        %v2308 = vadd.f32 %v2163, %v2307
        %v2309 = vpop.f32.mrf.mxu0
        %2310 = vmatprep.mubr.f32.mxu0 0.0
        %2311 = vmatmul.mubr.f32.gmra.mxu0 %v473
        %v2312 = vpop.f32.mrf.mxu0
        %v2313 = vadd.f32 %v2168, %v2312
        %v2314 = vpop.f32.mrf.mxu0
        %2315 = vmatprep.mubr.f32.mxu0 0.0
        %2316 = vmatmul.mubr.f32.gmra.mxu0 %v474
        %v2317 = vpop.f32.mrf.mxu0
        %v2318 = vadd.f32 %v2173, %v2317
        %v2319 = vpop.f32.mrf.mxu0
        %2320 = vmatprep.mubr.f32.mxu0 0.0
        %2321 = vmatmul.mubr.f32.gmra.mxu0 %v475
        %v2322 = vpop.f32.mrf.mxu0
        %v2323 = vadd.f32 %v2178, %v2322
        %v2324 = vpop.f32.mrf.mxu0
        %2325 = vmatprep.mubr.f32.mxu0 0.0
        %2326 = vmatmul.mubr.f32.gmra.mxu0 %v476
        %v2327 = vpop.f32.mrf.mxu0
        %v2328 = vadd.f32 %v2183, %v2327
        %v2329 = vpop.f32.mrf.mxu0
        %2330 = vmatprep.mubr.f32.mxu0 0.0
        %2331 = vmatmul.mubr.f32.gmra.mxu0 %v477
        %v2332 = vpop.f32.mrf.mxu0
        %v2333 = vadd.f32 %v2188, %v2332
        %v2334 = vpop.f32.mrf.mxu0
        %2335 = vmatprep.mubr.f32.mxu0 0.0
        %2336 = vmatmul.mubr.f32.gmra.mxu0 %v478
        %v2337 = vpop.f32.mrf.mxu0
        %v2338 = vadd.f32 %v2193, %v2337
        %v2339 = vpop.f32.mrf.mxu0
        %2340 = vmatprep.mubr.f32.mxu0 0.0
        %2341 = vmatmul.mubr.f32.gmra.mxu0 %v479
        %v2342 = vpop.f32.mrf.mxu0
        %v2343 = vadd.f32 %v2198, %v2342
        %v2344 = vpop.f32.mrf.mxu0
        %2345 = vmatprep.mubr.f32.mxu0 0.0
        %2346 = vmatmul.mubr.f32.gmra.mxu0 %v480
        %v2347 = vpop.f32.mrf.mxu0
        %v2348 = vadd.f32 %v2203, %v2347
        %v2349 = vpop.f32.mrf.mxu0
        %2350 = vmatprep.mubr.f32.mxu0 0.0
        %2351 = vmatmul.mubr.f32.gmra.mxu0 %v481
        %v2352 = vpop.f32.mrf.mxu0
        %v2353 = vadd.f32 %v2208, %v2352
        %v2354 = vpop.f32.mrf.mxu0
        %2355 = vmatprep.mubr.f32.mxu0 0.0
        %2356 = vmatmul.mubr.f32.gmra.mxu0 %v482
        %v2357 = vpop.f32.mrf.mxu0
        %v2358 = vadd.f32 %v2213, %v2357
        %v2359 = vpop.f32.mrf.mxu0
        %2360 = vmatprep.mubr.f32.mxu0 0.0
        %2361 = vmatmul.mubr.f32.gmra.mxu0 %v483
        %v2362 = vpop.f32.mrf.mxu0
        %v2363 = vadd.f32 %v2218, %v2362
        %v2364 = vpop.f32.mrf.mxu0
        %2365 = vmatprep.mubr.f32.mxu0 0.0
        %2366 = vmatmul.mubr.f32.gmra.mxu0 %v484
        %v2367 = vpop.f32.mrf.mxu0
        %v2368 = vadd.f32 %v2223, %v2367
        %v2369 = vpop.f32.mrf.mxu0
        %2370 = vmatprep.mubr.f32.mxu0 0.0
        %2371 = vmatmul.mubr.f32.gmra.mxu0 %v485
        %v2372 = vpop.f32.mrf.mxu0
        %v2373 = vadd.f32 %v2228, %v2372
        %v2374 = vpop.f32.mrf.mxu0
        %2375 = vdwg.mxu0
        %2376 = vrot.lane.b32.xlu0 %v1944, 64
        %v2377 = vpop.permute.xlu0 %2376
        %2378 = vrot.lane.b32.xlu0 %v1949, 64
        %v2379 = vpop.permute.xlu0 %2378
        %2380 = vrot.lane.b32.xlu0 %v1954, 64
        %v2381 = vpop.permute.xlu0 %2380
        %2382 = vrot.lane.b32.xlu0 %v1959, 64
        %v2383 = vpop.permute.xlu0 %2382
        %2384 = vrot.lane.b32.xlu0 %v1964, 64
        %v2385 = vpop.permute.xlu0 %2384
        %2386 = vrot.lane.b32.xlu0 %v1969, 64
        %v2387 = vpop.permute.xlu0 %2386
        %2388 = vrot.lane.b32.xlu0 %v1974, 64
        %v2389 = vpop.permute.xlu0 %2388
        %2390 = vrot.lane.b32.xlu0 %v1979, 64
        %v2391 = vpop.permute.xlu0 %2390
        %2392 = vrot.lane.b32.xlu0 %v1984, 64
        %v2393 = vpop.permute.xlu0 %2392
        %2394 = vrot.lane.b32.xlu0 %v1989, 64
        %v2395 = vpop.permute.xlu0 %2394
        %2396 = vrot.lane.b32.xlu0 %v1994, 64
        %v2397 = vpop.permute.xlu0 %2396
        %2398 = vrot.lane.b32.xlu0 %v1999, 64
        %v2399 = vpop.permute.xlu0 %2398
        %2400 = vrot.lane.b32.xlu0 %v2004, 64
        %v2401 = vpop.permute.xlu0 %2400
        %2402 = vrot.lane.b32.xlu0 %v2009, 64
        %v2403 = vpop.permute.xlu0 %2402
        %2404 = vrot.lane.b32.xlu0 %v2014, 64
        %v2405 = vpop.permute.xlu0 %2404
        %2406 = vrot.lane.b32.xlu0 %v2019, 64
        %v2407 = vpop.permute.xlu0 %2406
        %2424 = vmatprep.subr.mxu0 0.0
        %2425 = vmatpush1.msra.mxu0 %v2407
        %2426 = vmatprep.subr.mxu0 0.0
        %2427 = vmatpush1.msra.mxu0 %v2405
        %2428 = vmatprep.subr.mxu0 0.0
        %2429 = vmatpush1.msra.mxu0 %v2403
        %2430 = vmatprep.subr.mxu0 0.0
        %2431 = vmatpush1.msra.mxu0 %v2401
        %2432 = vmatprep.subr.mxu0 0.0
        %2433 = vmatpush1.msra.mxu0 %v2399
        %2434 = vmatprep.subr.mxu0 0.0
        %2435 = vmatpush1.msra.mxu0 %v2397
        %2436 = vmatprep.subr.mxu0 0.0
        %2437 = vmatpush1.msra.mxu0 %v2395
        %2438 = vmatprep.subr.mxu0 0.0
        %2439 = vmatpush1.msra.mxu0 %v2393
        %2440 = vmatprep.subr.mxu0 0.0
        %2441 = vmatpush1.msra.mxu0 %v2391
        %2442 = vmatprep.subr.mxu0 0.0
        %2443 = vmatpush1.msra.mxu0 %v2389
        %2444 = vmatprep.subr.mxu0 0.0
        %2445 = vmatpush1.msra.mxu0 %v2387
        %2446 = vmatprep.subr.mxu0 0.0
        %2447 = vmatpush1.msra.mxu0 %v2385
        %2448 = vmatprep.subr.mxu0 0.0
        %2449 = vmatpush1.msra.mxu0 %v2383
        %2450 = vmatprep.subr.mxu0 0.0
        %2451 = vmatpush1.msra.mxu0 %v2381
        %2452 = vmatprep.subr.mxu0 0.0
        %2453 = vmatpush1.msra.mxu0 %v2379
        %2454 = vmatprep.subr.mxu0 0.0
        %2455 = vmatpush1.msra.mxu0 %v2377
        %2456 = vmatprep.subr.mxu0 0.0
        %2457 = vmatpush2.msra.mxu0 0.0
        %2458 = vmatprep.subr.mxu0 0.0
        %2459 = vmatpush2.msra.mxu0 0.0
        %2460 = vmatprep.subr.mxu0 0.0
        %2461 = vmatpush2.msra.mxu0 0.0
        %2462 = vmatprep.subr.mxu0 0.0
        %2463 = vmatpush2.msra.mxu0 0.0
        %2464 = vmatprep.subr.mxu0 0.0
        %2465 = vmatpush2.msra.mxu0 0.0
        %2466 = vmatprep.subr.mxu0 0.0
        %2467 = vmatpush2.msra.mxu0 0.0
        %2468 = vmatprep.subr.mxu0 0.0
        %2469 = vmatpush2.msra.mxu0 0.0
        %2470 = vmatprep.subr.mxu0 0.0
        %2471 = vmatpush2.msra.mxu0 0.0
        %2472 = vmatprep.subr.mxu0 0.0
        %2473 = vmatpush2.msra.mxu0 0.0
        %2474 = vmatprep.subr.mxu0 0.0
        %2475 = vmatpush2.msra.mxu0 0.0
        %2476 = vmatprep.subr.mxu0 0.0
        %2477 = vmatpush2.msra.mxu0 0.0
        %2478 = vmatprep.subr.mxu0 0.0
        %2479 = vmatpush2.msra.mxu0 0.0
        %2480 = vmatprep.subr.mxu0 0.0
        %2481 = vmatpush2.msra.mxu0 0.0
        %2482 = vmatprep.subr.mxu0 0.0
        %2483 = vmatpush2.msra.mxu0 0.0
        %2484 = vmatprep.subr.mxu0 0.0
        %2485 = vmatpush2.msra.mxu0 0.0
        %2486 = vmatprep.subr.mxu0 0.0
        %2487 = vmatpush2.msra.mxu0 0.0
        %2488 = vmatprep.mubr.f32.mxu0 0.0
        %2489 = vmatmul.mubr.f32.gmra.mxu0 %v858
        %v2490 = vpop.f32.mrf.mxu0
        %v2491 = vadd.f32 0.0, %v2490
        %v2492 = vpop.f32.mrf.mxu0
        %2493 = vmatprep.mubr.f32.mxu0 0.0
        %2494 = vmatmul.mubr.f32.gmra.mxu0 %v859
        %v2495 = vpop.f32.mrf.mxu0
        %v2496 = vadd.f32 0.0, %v2495
        %v2497 = vpop.f32.mrf.mxu0
        %2498 = vmatprep.mubr.f32.mxu0 0.0
        %2499 = vmatmul.mubr.f32.gmra.mxu0 %v860
        %v2500 = vpop.f32.mrf.mxu0
        %v2501 = vadd.f32 0.0, %v2500
        %v2502 = vpop.f32.mrf.mxu0
        %2503 = vmatprep.mubr.f32.mxu0 0.0
        %2504 = vmatmul.mubr.f32.gmra.mxu0 %v861
        %v2505 = vpop.f32.mrf.mxu0
        %v2506 = vadd.f32 0.0, %v2505
        %v2507 = vpop.f32.mrf.mxu0
        %2508 = vmatprep.mubr.f32.mxu0 0.0
        %2509 = vmatmul.mubr.f32.gmra.mxu0 %v862
        %v2510 = vpop.f32.mrf.mxu0
        %v2511 = vadd.f32 0.0, %v2510
        %v2512 = vpop.f32.mrf.mxu0
        %2513 = vmatprep.mubr.f32.mxu0 0.0
        %2514 = vmatmul.mubr.f32.gmra.mxu0 %v863
        %v2515 = vpop.f32.mrf.mxu0
        %v2516 = vadd.f32 0.0, %v2515
        %v2517 = vpop.f32.mrf.mxu0
        %2518 = vmatprep.mubr.f32.mxu0 0.0
        %2519 = vmatmul.mubr.f32.gmra.mxu0 %v864
        %v2520 = vpop.f32.mrf.mxu0
        %v2521 = vadd.f32 0.0, %v2520
        %v2522 = vpop.f32.mrf.mxu0
        %2523 = vmatprep.mubr.f32.mxu0 0.0
        %2524 = vmatmul.mubr.f32.gmra.mxu0 %v865
        %v2525 = vpop.f32.mrf.mxu0
        %v2526 = vadd.f32 0.0, %v2525
        %v2527 = vpop.f32.mrf.mxu0
        %2528 = vmatprep.mubr.f32.mxu0 0.0
        %2529 = vmatmul.mubr.f32.gmra.mxu0 %v866
        %v2530 = vpop.f32.mrf.mxu0
        %v2531 = vadd.f32 0.0, %v2530
        %v2532 = vpop.f32.mrf.mxu0
        %2533 = vmatprep.mubr.f32.mxu0 0.0
        %2534 = vmatmul.mubr.f32.gmra.mxu0 %v867
        %v2535 = vpop.f32.mrf.mxu0
        %v2536 = vadd.f32 0.0, %v2535
        %v2537 = vpop.f32.mrf.mxu0
        %2538 = vmatprep.mubr.f32.mxu0 0.0
        %2539 = vmatmul.mubr.f32.gmra.mxu0 %v868
        %v2540 = vpop.f32.mrf.mxu0
        %v2541 = vadd.f32 0.0, %v2540
        %v2542 = vpop.f32.mrf.mxu0
        %2543 = vmatprep.mubr.f32.mxu0 0.0
        %2544 = vmatmul.mubr.f32.gmra.mxu0 %v869
        %v2545 = vpop.f32.mrf.mxu0
        %v2546 = vadd.f32 0.0, %v2545
        %v2547 = vpop.f32.mrf.mxu0
        %2548 = vmatprep.mubr.f32.mxu0 0.0
        %2549 = vmatmul.mubr.f32.gmra.mxu0 %v870
        %v2550 = vpop.f32.mrf.mxu0
        %v2551 = vadd.f32 0.0, %v2550
        %v2552 = vpop.f32.mrf.mxu0
        %2553 = vmatprep.mubr.f32.mxu0 0.0
        %2554 = vmatmul.mubr.f32.gmra.mxu0 %v871
        %v2555 = vpop.f32.mrf.mxu0
        %v2556 = vadd.f32 0.0, %v2555
        %v2557 = vpop.f32.mrf.mxu0
        %2558 = vmatprep.mubr.f32.mxu0 0.0
        %2559 = vmatmul.mubr.f32.gmra.mxu0 %v872
        %v2560 = vpop.f32.mrf.mxu0
        %v2561 = vadd.f32 0.0, %v2560
        %v2562 = vpop.f32.mrf.mxu0
        %2563 = vmatprep.mubr.f32.mxu0 0.0
        %2564 = vmatmul.mubr.f32.gmra.mxu0 %v873
        %v2565 = vpop.f32.mrf.mxu0
        %v2566 = vadd.f32 0.0, %v2565
        %v2567 = vpop.f32.mrf.mxu0
        %2568 = vdwg.mxu0
        %v2569 = vadd.f32 %v2298, %v2491
        %v2570 = vadd.f32 %v2303, %v2496
        %v2571 = vadd.f32 %v2308, %v2501
        %v2572 = vadd.f32 %v2313, %v2506
        %v2573 = vadd.f32 %v2318, %v2511
        %v2574 = vadd.f32 %v2323, %v2516
        %v2575 = vadd.f32 %v2328, %v2521
        %v2576 = vadd.f32 %v2333, %v2526
        %v2577 = vadd.f32 %v2338, %v2531
        %v2578 = vadd.f32 %v2343, %v2536
        %v2579 = vadd.f32 %v2348, %v2541
        %v2580 = vadd.f32 %v2353, %v2546
        %v2581 = vadd.f32 %v2358, %v2551
        %v2582 = vadd.f32 %v2363, %v2556
        %v2583 = vadd.f32 %v2368, %v2561
        %v2584 = vadd.f32 %v2373, %v2566
        %v2585 = vsel %vm276, %v2569, %v1781
        %v2586 = vsel %vm276, %v2570, %v1782
        %v2587 = vsel %vm276, %v2571, %v1783
        %v2588 = vsel %vm276, %v2572, %v1784
        %v2589 = vsel %vm276, %v2573, %v1785
        %v2590 = vsel %vm276, %v2574, %v1786
        %v2591 = vsel %vm276, %v2575, %v1787
        %v2592 = vsel %vm276, %v2576, %v1788
        %v2593 = vsel %vm276, %v2577, %v1789
        %v2594 = vsel %vm276, %v2578, %v1790
        %v2595 = vsel %vm276, %v2579, %v1791
        %v2596 = vsel %vm276, %v2580, %v1792
        %v2597 = vsel %vm276, %v2581, %v1793
        %v2598 = vsel %vm276, %v2582, %v1794
        %v2599 = vsel %vm276, %v2583, %v1795
        %v2600 = vsel %vm276, %v2584, %v1796
        %v2602 = vsel %vm1147, %v2585, 0
        %v2605 = vsel %vm1147, %v2586, 0
        %v2608 = vsel %vm1147, %v2587, 0
        %v2611 = vsel %vm1147, %v2588, 0
        %v2614 = vsel %vm1147, %v2589, 0
        %v2617 = vsel %vm1147, %v2590, 0
        %v2620 = vsel %vm1147, %v2591, 0
        %v2623 = vsel %vm1147, %v2592, 0
        %v2626 = vsel %vm1147, %v2593, 0
        %v2629 = vsel %vm1147, %v2594, 0
        %v2632 = vsel %vm1147, %v2595, 0
        %v2635 = vsel %vm1147, %v2596, 0
        %v2638 = vsel %vm1147, %v2597, 0
        %v2641 = vsel %vm1147, %v2598, 0
        %v2644 = vsel %vm1147, %v2599, 0
        %v2647 = vsel %vm1147, %v2600, 0
        %2649 = vmatprep.subr.mxu0 0.0
        %2650 = vmatpush1.msra.mxu0 0.0
        %2651 = vmatprep.subr.mxu0 0.0
        %2652 = vmatpush1.msra.mxu0 0.0
        %2653 = vmatprep.subr.mxu0 0.0
        %2654 = vmatpush1.msra.mxu0 0.0
        %2655 = vmatprep.subr.mxu0 0.0
        %2656 = vmatpush1.msra.mxu0 0.0
        %2657 = vmatprep.subr.mxu0 0.0
        %2658 = vmatpush1.msra.mxu0 0.0
        %2659 = vmatprep.subr.mxu0 0.0
        %2660 = vmatpush1.msra.mxu0 0.0
        %2661 = vmatprep.subr.mxu0 0.0
        %2662 = vmatpush1.msra.mxu0 0.0
        %2663 = vmatprep.subr.mxu0 0.0
        %2664 = vmatpush1.msra.mxu0 0.0
        %2665 = vmatprep.subr.mxu0 0.0
        %2666 = vmatpush1.msra.mxu0 %v234
        %2667 = vmatprep.subr.mxu0 0.0
        %2668 = vmatpush1.msra.mxu0 %v233
        %2669 = vmatprep.subr.mxu0 0.0
        %2670 = vmatpush1.msra.mxu0 %v232
        %2671 = vmatprep.subr.mxu0 0.0
        %2672 = vmatpush1.msra.mxu0 %v231
        %2673 = vmatprep.subr.mxu0 0.0
        %2674 = vmatpush1.msra.mxu0 %v230
        %2675 = vmatprep.subr.mxu0 0.0
        %2676 = vmatpush1.msra.mxu0 %v229
        %2677 = vmatprep.subr.mxu0 0.0
        %2678 = vmatpush1.msra.mxu0 %v228
        %2679 = vmatprep.subr.mxu0 0.0
        %2680 = vmatpush1.msra.mxu0 %v227
        %2681 = vmatprep.subr.mxu0 0.0
        %2682 = vmatpush2.msra.mxu0 0.0
        %2683 = vmatprep.subr.mxu0 0.0
        %2684 = vmatpush2.msra.mxu0 0.0
        %2685 = vmatprep.subr.mxu0 0.0
        %2686 = vmatpush2.msra.mxu0 0.0
        %2687 = vmatprep.subr.mxu0 0.0
        %2688 = vmatpush2.msra.mxu0 0.0
        %2689 = vmatprep.subr.mxu0 0.0
        %2690 = vmatpush2.msra.mxu0 0.0
        %2691 = vmatprep.subr.mxu0 0.0
        %2692 = vmatpush2.msra.mxu0 0.0
        %2693 = vmatprep.subr.mxu0 0.0
        %2694 = vmatpush2.msra.mxu0 0.0
        %2695 = vmatprep.subr.mxu0 0.0
        %2696 = vmatpush2.msra.mxu0 0.0
        %2697 = vmatprep.subr.mxu0 0.0
        %2698 = vmatpush2.msra.mxu0 0.0
        %2699 = vmatprep.subr.mxu0 0.0
        %2700 = vmatpush2.msra.mxu0 0.0
        %2701 = vmatprep.subr.mxu0 0.0
        %2702 = vmatpush2.msra.mxu0 0.0
        %2703 = vmatprep.subr.mxu0 0.0
        %2704 = vmatpush2.msra.mxu0 0.0
        %2705 = vmatprep.subr.mxu0 0.0
        %2706 = vmatpush2.msra.mxu0 0.0
        %2707 = vmatprep.subr.mxu0 0.0
        %2708 = vmatpush2.msra.mxu0 0.0
        %2709 = vmatprep.subr.mxu0 0.0
        %2710 = vmatpush2.msra.mxu0 0.0
        %2711 = vmatprep.subr.mxu0 0.0
        %2712 = vmatpush2.msra.mxu0 0.0
        %2713 = vmatprep.mubr.f32.mxu0 0.0
        %2714 = vmatmul.mubr.f32.gmra.mxu0 %v2602
        %v2715 = vpop.f32.mrf.mxu0
        %v2716 = vadd.f32 0.0, %v2715
        %v2717 = vpop.f32.mrf.mxu0
        %2718 = vmatprep.mubr.f32.mxu0 0.0
        %2719 = vmatmul.mubr.f32.gmra.mxu0 %v2605
        %v2720 = vpop.f32.mrf.mxu0
        %v2721 = vadd.f32 0.0, %v2720
        %v2722 = vpop.f32.mrf.mxu0
        %2723 = vmatprep.mubr.f32.mxu0 0.0
        %2724 = vmatmul.mubr.f32.gmra.mxu0 %v2608
        %v2725 = vpop.f32.mrf.mxu0
        %v2726 = vadd.f32 0.0, %v2725
        %v2727 = vpop.f32.mrf.mxu0
        %2728 = vmatprep.mubr.f32.mxu0 0.0
        %2729 = vmatmul.mubr.f32.gmra.mxu0 %v2611
        %v2730 = vpop.f32.mrf.mxu0
        %v2731 = vadd.f32 0.0, %v2730
        %v2732 = vpop.f32.mrf.mxu0
        %2733 = vmatprep.mubr.f32.mxu0 0.0
        %2734 = vmatmul.mubr.f32.gmra.mxu0 %v2614
        %v2735 = vpop.f32.mrf.mxu0
        %v2736 = vadd.f32 0.0, %v2735
        %v2737 = vpop.f32.mrf.mxu0
        %2738 = vmatprep.mubr.f32.mxu0 0.0
        %2739 = vmatmul.mubr.f32.gmra.mxu0 %v2617
        %v2740 = vpop.f32.mrf.mxu0
        %v2741 = vadd.f32 0.0, %v2740
        %v2742 = vpop.f32.mrf.mxu0
        %2743 = vmatprep.mubr.f32.mxu0 0.0
        %2744 = vmatmul.mubr.f32.gmra.mxu0 %v2620
        %v2745 = vpop.f32.mrf.mxu0
        %v2746 = vadd.f32 0.0, %v2745
        %v2747 = vpop.f32.mrf.mxu0
        %2748 = vmatprep.mubr.f32.mxu0 0.0
        %2749 = vmatmul.mubr.f32.gmra.mxu0 %v2623
        %v2750 = vpop.f32.mrf.mxu0
        %v2751 = vadd.f32 0.0, %v2750
        %v2752 = vpop.f32.mrf.mxu0
        %2753 = vmatprep.mubr.f32.mxu0 0.0
        %2754 = vmatmul.mubr.f32.gmra.mxu0 %v2626
        %v2755 = vpop.f32.mrf.mxu0
        %v2756 = vadd.f32 0.0, %v2755
        %v2757 = vpop.f32.mrf.mxu0
        %2758 = vmatprep.mubr.f32.mxu0 0.0
        %2759 = vmatmul.mubr.f32.gmra.mxu0 %v2629
        %v2760 = vpop.f32.mrf.mxu0
        %v2761 = vadd.f32 0.0, %v2760
        %v2762 = vpop.f32.mrf.mxu0
        %2763 = vmatprep.mubr.f32.mxu0 0.0
        %2764 = vmatmul.mubr.f32.gmra.mxu0 %v2632
        %v2765 = vpop.f32.mrf.mxu0
        %v2766 = vadd.f32 0.0, %v2765
        %v2767 = vpop.f32.mrf.mxu0
        %2768 = vmatprep.mubr.f32.mxu0 0.0
        %2769 = vmatmul.mubr.f32.gmra.mxu0 %v2635
        %v2770 = vpop.f32.mrf.mxu0
        %v2771 = vadd.f32 0.0, %v2770
        %v2772 = vpop.f32.mrf.mxu0
        %2773 = vmatprep.mubr.f32.mxu0 0.0
        %2774 = vmatmul.mubr.f32.gmra.mxu0 %v2638
        %v2775 = vpop.f32.mrf.mxu0
        %v2776 = vadd.f32 0.0, %v2775
        %v2777 = vpop.f32.mrf.mxu0
        %2778 = vmatprep.mubr.f32.mxu0 0.0
        %2779 = vmatmul.mubr.f32.gmra.mxu0 %v2641
        %v2780 = vpop.f32.mrf.mxu0
        %v2781 = vadd.f32 0.0, %v2780
        %v2782 = vpop.f32.mrf.mxu0
        %2783 = vmatprep.mubr.f32.mxu0 0.0
        %2784 = vmatmul.mubr.f32.gmra.mxu0 %v2644
        %v2785 = vpop.f32.mrf.mxu0
        %v2786 = vadd.f32 0.0, %v2785
        %v2787 = vpop.f32.mrf.mxu0
        %2788 = vmatprep.mubr.f32.mxu0 0.0
        %2789 = vmatmul.mubr.f32.gmra.mxu0 %v2647
        %v2790 = vpop.f32.mrf.mxu0
        %v2791 = vadd.f32 0.0, %v2790
        %v2792 = vpop.f32.mrf.mxu0
        %2793 = vdwg.mxu0
        %v2794 = vadd.f32 %v2716, %v255
        %v2795 = vadd.f32 %v2721, %v255
        %v2796 = vadd.f32 %v2726, %v255
        %v2797 = vadd.f32 %v2731, %v255
        %v2798 = vadd.f32 %v2736, %v255
        %v2799 = vadd.f32 %v2741, %v255
        %v2800 = vadd.f32 %v2746, %v255
        %v2801 = vadd.f32 %v2751, %v255
        %v2802 = vadd.f32 %v2756, %v255
        %v2803 = vadd.f32 %v2761, %v255
        %v2804 = vadd.f32 %v2766, %v255
        %v2805 = vadd.f32 %v2771, %v255
        %v2806 = vadd.f32 %v2776, %v255
        %v2807 = vadd.f32 %v2781, %v255
        %v2808 = vadd.f32 %v2786, %v255
        %v2809 = vadd.f32 %v2791, %v255
        %v2810 = vxor.u32 %v2794, 2147483648
        %v2811 = vxor.u32 %v2795, 2147483648
        %v2812 = vxor.u32 %v2796, 2147483648
        %v2813 = vxor.u32 %v2797, 2147483648
        %v2814 = vxor.u32 %v2798, 2147483648
        %v2815 = vxor.u32 %v2799, 2147483648
        %v2816 = vxor.u32 %v2800, 2147483648
        %v2817 = vxor.u32 %v2801, 2147483648
        %v2818 = vxor.u32 %v2802, 2147483648
        %v2819 = vxor.u32 %v2803, 2147483648
        %v2820 = vxor.u32 %v2804, 2147483648
        %v2821 = vxor.u32 %v2805, 2147483648
        %v2822 = vxor.u32 %v2806, 2147483648
        %v2823 = vxor.u32 %v2807, 2147483648
        %v2824 = vxor.u32 %v2808, 2147483648
        %v2825 = vxor.u32 %v2809, 2147483648
        %v2826 = vmul.f32 %v2810, 1.442695
        %v2827 = vpow.pop %v2826
        %v2828 = vmul.f32 %v2811, 1.442695
        %v2829 = vpow.pop %v2828
        %v2830 = vmul.f32 %v2812, 1.442695
        %v2831 = vpow.pop %v2830
        %v2832 = vmul.f32 %v2813, 1.442695
        %v2833 = vpow.pop %v2832
        %v2834 = vmul.f32 %v2814, 1.442695
        %v2835 = vpow.pop %v2834
        %v2836 = vmul.f32 %v2815, 1.442695
        %v2837 = vpow.pop %v2836
        %v2838 = vmul.f32 %v2816, 1.442695
        %v2839 = vpow.pop %v2838
        %v2840 = vmul.f32 %v2817, 1.442695
        %v2841 = vpow.pop %v2840
        %v2842 = vmul.f32 %v2818, 1.442695
        %v2843 = vpow.pop %v2842
        %v2844 = vmul.f32 %v2819, 1.442695
        %v2845 = vpow.pop %v2844
        %v2846 = vmul.f32 %v2820, 1.442695
        %v2847 = vpow.pop %v2846
        %v2848 = vmul.f32 %v2821, 1.442695
        %v2849 = vpow.pop %v2848
        %v2850 = vmul.f32 %v2822, 1.442695
        %v2851 = vpow.pop %v2850
        %v2852 = vmul.f32 %v2823, 1.442695
        %v2853 = vpow.pop %v2852
        %v2854 = vmul.f32 %v2824, 1.442695
        %v2855 = vpow.pop %v2854
        %v2856 = vmul.f32 %v2825, 1.442695
        %v2857 = vpow.pop %v2856
        %v2858 = vadd.f32 %v2827, 1.0
        %v2859 = vadd.f32 %v2829, 1.0
        %v2860 = vadd.f32 %v2831, 1.0
        %v2861 = vadd.f32 %v2833, 1.0
        %v2862 = vadd.f32 %v2835, 1.0
        %v2863 = vadd.f32 %v2837, 1.0
        %v2864 = vadd.f32 %v2839, 1.0
        %v2865 = vadd.f32 %v2841, 1.0
        %v2866 = vadd.f32 %v2843, 1.0
        %v2867 = vadd.f32 %v2845, 1.0
        %v2868 = vadd.f32 %v2847, 1.0
        %v2869 = vadd.f32 %v2849, 1.0
        %v2870 = vadd.f32 %v2851, 1.0
        %v2871 = vadd.f32 %v2853, 1.0
        %v2872 = vadd.f32 %v2855, 1.0
        %v2873 = vadd.f32 %v2857, 1.0
        %v2874 = vrcp.pop %v2858
        %v2875 = vmul.f32 1.0, %v2874
        %v2876 = vrcp.pop %v2859
        %v2877 = vmul.f32 1.0, %v2876
        %v2878 = vrcp.pop %v2860
        %v2879 = vmul.f32 1.0, %v2878
        %v2880 = vrcp.pop %v2861
        %v2881 = vmul.f32 1.0, %v2880
        %v2882 = vrcp.pop %v2862
        %v2883 = vmul.f32 1.0, %v2882
        %v2884 = vrcp.pop %v2863
        %v2885 = vmul.f32 1.0, %v2884
        %v2886 = vrcp.pop %v2864
        %v2887 = vmul.f32 1.0, %v2886
        %v2888 = vrcp.pop %v2865
        %v2889 = vmul.f32 1.0, %v2888
        %v2890 = vrcp.pop %v2866
        %v2891 = vmul.f32 1.0, %v2890
        %v2892 = vrcp.pop %v2867
        %v2893 = vmul.f32 1.0, %v2892
        %v2894 = vrcp.pop %v2868
        %v2895 = vmul.f32 1.0, %v2894
        %v2896 = vrcp.pop %v2869
        %v2897 = vmul.f32 1.0, %v2896
        %v2898 = vrcp.pop %v2870
        %v2899 = vmul.f32 1.0, %v2898
        %v2900 = vrcp.pop %v2871
        %v2901 = vmul.f32 1.0, %v2900
        %v2902 = vrcp.pop %v2872
        %v2903 = vmul.f32 1.0, %v2902
        %v2904 = vrcp.pop %v2873
        %v2905 = vmul.f32 1.0, %v2904
        %v2906 = vadd.f32 %v2716, %v1455
        %v2907 = vadd.f32 %v2721, %v1455
        %v2908 = vadd.f32 %v2726, %v1455
        %v2909 = vadd.f32 %v2731, %v1455
        %v2910 = vadd.f32 %v2736, %v1455
        %v2911 = vadd.f32 %v2741, %v1455
        %v2912 = vadd.f32 %v2746, %v1455
        %v2913 = vadd.f32 %v2751, %v1455
        %v2914 = vadd.f32 %v2756, %v1455
        %v2915 = vadd.f32 %v2761, %v1455
        %v2916 = vadd.f32 %v2766, %v1455
        %v2917 = vadd.f32 %v2771, %v1455
        %v2918 = vadd.f32 %v2776, %v1455
        %v2919 = vadd.f32 %v2781, %v1455
        %v2920 = vadd.f32 %v2786, %v1455
        %v2921 = vadd.f32 %v2791, %v1455
        %v2922 = vadd.f32 %v2716, %v1475
        %v2923 = vadd.f32 %v2721, %v1475
        %v2924 = vadd.f32 %v2726, %v1475
        %v2925 = vadd.f32 %v2731, %v1475
        %v2926 = vadd.f32 %v2736, %v1475
        %v2927 = vadd.f32 %v2741, %v1475
        %v2928 = vadd.f32 %v2746, %v1475
        %v2929 = vadd.f32 %v2751, %v1475
        %v2930 = vadd.f32 %v2756, %v1475
        %v2931 = vadd.f32 %v2761, %v1475
        %v2932 = vadd.f32 %v2766, %v1475
        %v2933 = vadd.f32 %v2771, %v1475
        %v2934 = vadd.f32 %v2776, %v1475
        %v2935 = vadd.f32 %v2781, %v1475
        %v2936 = vadd.f32 %v2786, %v1475
        %v2937 = vadd.f32 %v2791, %v1475
        %2954 = vrot.lane.b32.xlu0 %v2922, 32
        %v2955 = vpop.permute.xlu0 %2954
        %2956 = vrot.lane.b32.xlu0 %v2923, 32
        %v2957 = vpop.permute.xlu0 %2956
        %2958 = vrot.lane.b32.xlu0 %v2924, 32
        %v2959 = vpop.permute.xlu0 %2958
        %2960 = vrot.lane.b32.xlu0 %v2925, 32
        %v2961 = vpop.permute.xlu0 %2960
        %2962 = vrot.lane.b32.xlu0 %v2926, 32
        %v2963 = vpop.permute.xlu0 %2962
        %2964 = vrot.lane.b32.xlu0 %v2927, 32
        %v2965 = vpop.permute.xlu0 %2964
        %2966 = vrot.lane.b32.xlu0 %v2928, 32
        %v2967 = vpop.permute.xlu0 %2966
        %2968 = vrot.lane.b32.xlu0 %v2929, 32
        %v2969 = vpop.permute.xlu0 %2968
        %2970 = vrot.lane.b32.xlu0 %v2930, 32
        %v2971 = vpop.permute.xlu0 %2970
        %2972 = vrot.lane.b32.xlu0 %v2931, 32
        %v2973 = vpop.permute.xlu0 %2972
        %2974 = vrot.lane.b32.xlu0 %v2932, 32
        %v2975 = vpop.permute.xlu0 %2974
        %2976 = vrot.lane.b32.xlu0 %v2933, 32
        %v2977 = vpop.permute.xlu0 %2976
        %2978 = vrot.lane.b32.xlu0 %v2934, 32
        %v2979 = vpop.permute.xlu0 %2978
        %2980 = vrot.lane.b32.xlu0 %v2935, 32
        %v2981 = vpop.permute.xlu0 %2980
        %2982 = vrot.lane.b32.xlu0 %v2936, 32
        %v2983 = vpop.permute.xlu0 %2982
        %2984 = vrot.lane.b32.xlu0 %v2937, 32
        %v2985 = vpop.permute.xlu0 %2984
        %v3002 = vmul.f32 %v2875, %v2955
        %v3003 = vmul.f32 %v2877, %v2957
        %v3004 = vmul.f32 %v2879, %v2959
        %v3005 = vmul.f32 %v2881, %v2961
        %v3006 = vmul.f32 %v2883, %v2963
        %v3007 = vmul.f32 %v2885, %v2965
        %v3008 = vmul.f32 %v2887, %v2967
        %v3009 = vmul.f32 %v2889, %v2969
        %v3010 = vmul.f32 %v2891, %v2971
        %v3011 = vmul.f32 %v2893, %v2973
        %v3012 = vmul.f32 %v2895, %v2975
        %v3013 = vmul.f32 %v2897, %v2977
        %v3014 = vmul.f32 %v2899, %v2979
        %v3015 = vmul.f32 %v2901, %v2981
        %v3016 = vmul.f32 %v2903, %v2983
        %v3017 = vmul.f32 %v2905, %v2985
        %3034 = vrot.lane.b32.xlu0 %v3002, 64
        %v3035 = vpop.permute.xlu0 %3034
        %3036 = vrot.lane.b32.xlu0 %v3003, 64
        %v3037 = vpop.permute.xlu0 %3036
        %3038 = vrot.lane.b32.xlu0 %v3004, 64
        %v3039 = vpop.permute.xlu0 %3038
        %3040 = vrot.lane.b32.xlu0 %v3005, 64
        %v3041 = vpop.permute.xlu0 %3040
        %3042 = vrot.lane.b32.xlu0 %v3006, 64
        %v3043 = vpop.permute.xlu0 %3042
        %3044 = vrot.lane.b32.xlu0 %v3007, 64
        %v3045 = vpop.permute.xlu0 %3044
        %3046 = vrot.lane.b32.xlu0 %v3008, 64
        %v3047 = vpop.permute.xlu0 %3046
        %3048 = vrot.lane.b32.xlu0 %v3009, 64
        %v3049 = vpop.permute.xlu0 %3048
        %3050 = vrot.lane.b32.xlu0 %v3010, 64
        %v3051 = vpop.permute.xlu0 %3050
        %3052 = vrot.lane.b32.xlu0 %v3011, 64
        %v3053 = vpop.permute.xlu0 %3052
        %3054 = vrot.lane.b32.xlu0 %v3012, 64
        %v3055 = vpop.permute.xlu0 %3054
        %3056 = vrot.lane.b32.xlu0 %v3013, 64
        %v3057 = vpop.permute.xlu0 %3056
        %3058 = vrot.lane.b32.xlu0 %v3014, 64
        %v3059 = vpop.permute.xlu0 %3058
        %3060 = vrot.lane.b32.xlu0 %v3015, 64
        %v3061 = vpop.permute.xlu0 %3060
        %3062 = vrot.lane.b32.xlu0 %v3016, 64
        %v3063 = vpop.permute.xlu0 %3062
        %3064 = vrot.lane.b32.xlu0 %v3017, 64
        %v3065 = vpop.permute.xlu0 %3064
        %v3082 = vadd.f32 %v2906, %v3035
        %v3083 = vadd.f32 %v2907, %v3037
        %v3084 = vadd.f32 %v2908, %v3039
        %v3085 = vadd.f32 %v2909, %v3041
        %v3086 = vadd.f32 %v2910, %v3043
        %v3087 = vadd.f32 %v2911, %v3045
        %v3088 = vadd.f32 %v2912, %v3047
        %v3089 = vadd.f32 %v2913, %v3049
        %v3090 = vadd.f32 %v2914, %v3051
        %v3091 = vadd.f32 %v2915, %v3053
        %v3092 = vadd.f32 %v2916, %v3055
        %v3093 = vadd.f32 %v2917, %v3057
        %v3094 = vadd.f32 %v2918, %v3059
        %v3095 = vadd.f32 %v2919, %v3061
        %v3096 = vadd.f32 %v2920, %v3063
        %v3097 = vadd.f32 %v2921, %v3065
        %v3098 = vtanh.pop %v3082
        %v3099 = vtanh.pop %v3083
        %v3100 = vtanh.pop %v3084
        %v3101 = vtanh.pop %v3085
        %v3102 = vtanh.pop %v3086
        %v3103 = vtanh.pop %v3087
        %v3104 = vtanh.pop %v3088
        %v3105 = vtanh.pop %v3089
        %v3106 = vtanh.pop %v3090
        %v3107 = vtanh.pop %v3091
        %v3108 = vtanh.pop %v3092
        %v3109 = vtanh.pop %v3093
        %v3110 = vtanh.pop %v3094
        %v3111 = vtanh.pop %v3095
        %v3112 = vtanh.pop %v3096
        %v3113 = vtanh.pop %v3097
        %v3114 = vsub.f32 1.0, %v2875
        %v3115 = vsub.f32 1.0, %v2877
        %v3116 = vsub.f32 1.0, %v2879
        %v3117 = vsub.f32 1.0, %v2881
        %v3118 = vsub.f32 1.0, %v2883
        %v3119 = vsub.f32 1.0, %v2885
        %v3120 = vsub.f32 1.0, %v2887
        %v3121 = vsub.f32 1.0, %v2889
        %v3122 = vsub.f32 1.0, %v2891
        %v3123 = vsub.f32 1.0, %v2893
        %v3124 = vsub.f32 1.0, %v2895
        %v3125 = vsub.f32 1.0, %v2897
        %v3126 = vsub.f32 1.0, %v2899
        %v3127 = vsub.f32 1.0, %v2901
        %v3128 = vsub.f32 1.0, %v2903
        %v3129 = vsub.f32 1.0, %v2905
        %3146 = vrot.lane.b32.xlu0 %v3098, 96
        %v3147 = vpop.permute.xlu0 %3146
        %3148 = vrot.lane.b32.xlu0 %v3099, 96
        %v3149 = vpop.permute.xlu0 %3148
        %3150 = vrot.lane.b32.xlu0 %v3100, 96
        %v3151 = vpop.permute.xlu0 %3150
        %3152 = vrot.lane.b32.xlu0 %v3101, 96
        %v3153 = vpop.permute.xlu0 %3152
        %3154 = vrot.lane.b32.xlu0 %v3102, 96
        %v3155 = vpop.permute.xlu0 %3154
        %3156 = vrot.lane.b32.xlu0 %v3103, 96
        %v3157 = vpop.permute.xlu0 %3156
        %3158 = vrot.lane.b32.xlu0 %v3104, 96
        %v3159 = vpop.permute.xlu0 %3158
        %3160 = vrot.lane.b32.xlu0 %v3105, 96
        %v3161 = vpop.permute.xlu0 %3160
        %3162 = vrot.lane.b32.xlu0 %v3106, 96
        %v3163 = vpop.permute.xlu0 %3162
        %3164 = vrot.lane.b32.xlu0 %v3107, 96
        %v3165 = vpop.permute.xlu0 %3164
        %3166 = vrot.lane.b32.xlu0 %v3108, 96
        %v3167 = vpop.permute.xlu0 %3166
        %3168 = vrot.lane.b32.xlu0 %v3109, 96
        %v3169 = vpop.permute.xlu0 %3168
        %3170 = vrot.lane.b32.xlu0 %v3110, 96
        %v3171 = vpop.permute.xlu0 %3170
        %3172 = vrot.lane.b32.xlu0 %v3111, 96
        %v3173 = vpop.permute.xlu0 %3172
        %3174 = vrot.lane.b32.xlu0 %v3112, 96
        %v3175 = vpop.permute.xlu0 %3174
        %3176 = vrot.lane.b32.xlu0 %v3113, 96
        %v3177 = vpop.permute.xlu0 %3176
        %v3194 = vmul.f32 %v3114, %v3147
        %v3195 = vmul.f32 %v3115, %v3149
        %v3196 = vmul.f32 %v3116, %v3151
        %v3197 = vmul.f32 %v3117, %v3153
        %v3198 = vmul.f32 %v3118, %v3155
        %v3199 = vmul.f32 %v3119, %v3157
        %v3200 = vmul.f32 %v3120, %v3159
        %v3201 = vmul.f32 %v3121, %v3161
        %v3202 = vmul.f32 %v3122, %v3163
        %v3203 = vmul.f32 %v3123, %v3165
        %v3204 = vmul.f32 %v3124, %v3167
        %v3205 = vmul.f32 %v3125, %v3169
        %v3206 = vmul.f32 %v3126, %v3171
        %v3207 = vmul.f32 %v3127, %v3173
        %v3208 = vmul.f32 %v3128, %v3175
        %v3209 = vmul.f32 %v3129, %v3177
        %v3210 = vmul.f32 %v2875, %v1781
        %v3211 = vmul.f32 %v2877, %v1782
        %v3212 = vmul.f32 %v2879, %v1783
        %v3213 = vmul.f32 %v2881, %v1784
        %v3214 = vmul.f32 %v2883, %v1785
        %v3215 = vmul.f32 %v2885, %v1786
        %v3216 = vmul.f32 %v2887, %v1787
        %v3217 = vmul.f32 %v2889, %v1788
        %v3218 = vmul.f32 %v2891, %v1789
        %v3219 = vmul.f32 %v2893, %v1790
        %v3220 = vmul.f32 %v2895, %v1791
        %v3221 = vmul.f32 %v2897, %v1792
        %v3222 = vmul.f32 %v2899, %v1793
        %v3223 = vmul.f32 %v2901, %v1794
        %v3224 = vmul.f32 %v2903, %v1795
        %v3225 = vmul.f32 %v2905, %v1796
        %v3226 = vadd.f32 %v3194, %v3210
        %v3227 = vadd.f32 %v3195, %v3211
        %v3228 = vadd.f32 %v3196, %v3212
        %v3229 = vadd.f32 %v3197, %v3213
        %v3230 = vadd.f32 %v3198, %v3214
        %v3231 = vadd.f32 %v3199, %v3215
        %v3232 = vadd.f32 %v3200, %v3216
        %v3233 = vadd.f32 %v3201, %v3217
        %v3234 = vadd.f32 %v3202, %v3218
        %v3235 = vadd.f32 %v3203, %v3219
        %v3236 = vadd.f32 %v3204, %v3220
        %v3237 = vadd.f32 %v3205, %v3221
        %v3238 = vadd.f32 %v3206, %v3222
        %v3239 = vadd.f32 %v3207, %v3223
        %v3240 = vadd.f32 %v3208, %v3224
        %v3241 = vadd.f32 %v3209, %v3225
        %3258 = vrot.lane.b32.xlu0 %v3226, 96
        %v3259 = vpop.permute.xlu0 %3258
        %3260 = vrot.lane.b32.xlu0 %v3227, 96
        %v3261 = vpop.permute.xlu0 %3260
        %3262 = vrot.lane.b32.xlu0 %v3228, 96
        %v3263 = vpop.permute.xlu0 %3262
        %3264 = vrot.lane.b32.xlu0 %v3229, 96
        %v3265 = vpop.permute.xlu0 %3264
        %3266 = vrot.lane.b32.xlu0 %v3230, 96
        %v3267 = vpop.permute.xlu0 %3266
        %3268 = vrot.lane.b32.xlu0 %v3231, 96
        %v3269 = vpop.permute.xlu0 %3268
        %3270 = vrot.lane.b32.xlu0 %v3232, 96
        %v3271 = vpop.permute.xlu0 %3270
        %3272 = vrot.lane.b32.xlu0 %v3233, 96
        %v3273 = vpop.permute.xlu0 %3272
        %3274 = vrot.lane.b32.xlu0 %v3234, 96
        %v3275 = vpop.permute.xlu0 %3274
        %3276 = vrot.lane.b32.xlu0 %v3235, 96
        %v3277 = vpop.permute.xlu0 %3276
        %3278 = vrot.lane.b32.xlu0 %v3236, 96
        %v3279 = vpop.permute.xlu0 %3278
        %3280 = vrot.lane.b32.xlu0 %v3237, 96
        %v3281 = vpop.permute.xlu0 %3280
        %3282 = vrot.lane.b32.xlu0 %v3238, 96
        %v3283 = vpop.permute.xlu0 %3282
        %3284 = vrot.lane.b32.xlu0 %v3239, 96
        %v3285 = vpop.permute.xlu0 %3284
        %3286 = vrot.lane.b32.xlu0 %v3240, 96
        %v3287 = vpop.permute.xlu0 %3286
        %3288 = vrot.lane.b32.xlu0 %v3241, 96
        %v3289 = vpop.permute.xlu0 %3288
        %v3290 = vsel %vm276, %v3259, 0
        %v3292 = vsel %vm276, %v3261, 0
        %v3294 = vsel %vm276, %v3263, 0
        %v3296 = vsel %vm276, %v3265, 0
        %v3298 = vsel %vm276, %v3267, 0
        %v3300 = vsel %vm276, %v3269, 0
        %v3302 = vsel %vm276, %v3271, 0
        %v3304 = vsel %vm276, %v3273, 0
        %v3306 = vsel %vm276, %v3275, 0
        %v3308 = vsel %vm276, %v3277, 0
        %v3310 = vsel %vm276, %v3279, 0
        %v3312 = vsel %vm276, %v3281, 0
        %v3314 = vsel %vm276, %v3283, 0
        %v3316 = vsel %vm276, %v3285, 0
        %v3318 = vsel %vm276, %v3287, 0
        %v3320 = vsel %vm276, %v3289, 0
        %3322 = vmatprep.subr.mxu0 0.0
        %3323 = vmatpush1.msra.mxu0 0.0
        %3324 = vmatprep.subr.mxu0 0.0
        %3325 = vmatpush1.msra.mxu0 0.0
        %3326 = vmatprep.subr.mxu0 0.0
        %3327 = vmatpush1.msra.mxu0 0.0
        %3328 = vmatprep.subr.mxu0 0.0
        %3329 = vmatpush1.msra.mxu0 0.0
        %3330 = vmatprep.subr.mxu0 0.0
        %3331 = vmatpush1.msra.mxu0 0.0
        %3332 = vmatprep.subr.mxu0 0.0
        %3333 = vmatpush1.msra.mxu0 0.0
        %3334 = vmatprep.subr.mxu0 0.0
        %3335 = vmatpush1.msra.mxu0 0.0
        %3336 = vmatprep.subr.mxu0 0.0
        %3337 = vmatpush1.msra.mxu0 0.0
        %3338 = vmatprep.subr.mxu0 0.0
        %3339 = vmatpush1.msra.mxu0 0.0
        %3340 = vmatprep.subr.mxu0 0.0
        %3341 = vmatpush1.msra.mxu0 0.0
        %3342 = vmatprep.subr.mxu0 0.0
        %3343 = vmatpush1.msra.mxu0 0.0
        %3344 = vmatprep.subr.mxu0 0.0
        %3345 = vmatpush1.msra.mxu0 0.0
        %3346 = vmatprep.subr.mxu0 0.0
        %3347 = vmatpush1.msra.mxu0 %v238
        %3348 = vmatprep.subr.mxu0 0.0
        %3349 = vmatpush1.msra.mxu0 %v237
        %3350 = vmatprep.subr.mxu0 0.0
        %3351 = vmatpush1.msra.mxu0 %v236
        %3352 = vmatprep.subr.mxu0 0.0
        %3353 = vmatpush1.msra.mxu0 %v235
        %3354 = vmatprep.subr.mxu0 0.0
        %3355 = vmatpush2.msra.mxu0 0.0
        %3356 = vmatprep.subr.mxu0 0.0
        %3357 = vmatpush2.msra.mxu0 0.0
        %3358 = vmatprep.subr.mxu0 0.0
        %3359 = vmatpush2.msra.mxu0 0.0
        %3360 = vmatprep.subr.mxu0 0.0
        %3361 = vmatpush2.msra.mxu0 0.0
        %3362 = vmatprep.subr.mxu0 0.0
        %3363 = vmatpush2.msra.mxu0 0.0
        %3364 = vmatprep.subr.mxu0 0.0
        %3365 = vmatpush2.msra.mxu0 0.0
        %3366 = vmatprep.subr.mxu0 0.0
        %3367 = vmatpush2.msra.mxu0 0.0
        %3368 = vmatprep.subr.mxu0 0.0
        %3369 = vmatpush2.msra.mxu0 0.0
        %3370 = vmatprep.subr.mxu0 0.0
        %3371 = vmatpush2.msra.mxu0 0.0
        %3372 = vmatprep.subr.mxu0 0.0
        %3373 = vmatpush2.msra.mxu0 0.0
        %3374 = vmatprep.subr.mxu0 0.0
        %3375 = vmatpush2.msra.mxu0 0.0
        %3376 = vmatprep.subr.mxu0 0.0
        %3377 = vmatpush2.msra.mxu0 0.0
        %3378 = vmatprep.subr.mxu0 0.0
        %3379 = vmatpush2.msra.mxu0 0.0
        %3380 = vmatprep.subr.mxu0 0.0
        %3381 = vmatpush2.msra.mxu0 0.0
        %3382 = vmatprep.subr.mxu0 0.0
        %3383 = vmatpush2.msra.mxu0 0.0
        %3384 = vmatprep.subr.mxu0 0.0
        %3385 = vmatpush2.msra.mxu0 0.0
        %3386 = vmatprep.mubr.f32.mxu0 0.0
        %3387 = vmatmul.mubr.f32.gmra.mxu0 %v3290
        %v3388 = vpop.f32.mrf.mxu0
        %v3389 = vadd.f32 0.0, %v3388
        %v3390 = vpop.f32.mrf.mxu0
        %3391 = vmatprep.mubr.f32.mxu0 0.0
        %3392 = vmatmul.mubr.f32.gmra.mxu0 %v3292
        %v3393 = vpop.f32.mrf.mxu0
        %v3394 = vadd.f32 0.0, %v3393
        %v3395 = vpop.f32.mrf.mxu0
        %3396 = vmatprep.mubr.f32.mxu0 0.0
        %3397 = vmatmul.mubr.f32.gmra.mxu0 %v3294
        %v3398 = vpop.f32.mrf.mxu0
        %v3399 = vadd.f32 0.0, %v3398
        %v3400 = vpop.f32.mrf.mxu0
        %3401 = vmatprep.mubr.f32.mxu0 0.0
        %3402 = vmatmul.mubr.f32.gmra.mxu0 %v3296
        %v3403 = vpop.f32.mrf.mxu0
        %v3404 = vadd.f32 0.0, %v3403
        %v3405 = vpop.f32.mrf.mxu0
        %3406 = vmatprep.mubr.f32.mxu0 0.0
        %3407 = vmatmul.mubr.f32.gmra.mxu0 %v3298
        %v3408 = vpop.f32.mrf.mxu0
        %v3409 = vadd.f32 0.0, %v3408
        %v3410 = vpop.f32.mrf.mxu0
        %3411 = vmatprep.mubr.f32.mxu0 0.0
        %3412 = vmatmul.mubr.f32.gmra.mxu0 %v3300
        %v3413 = vpop.f32.mrf.mxu0
        %v3414 = vadd.f32 0.0, %v3413
        %v3415 = vpop.f32.mrf.mxu0
        %3416 = vmatprep.mubr.f32.mxu0 0.0
        %3417 = vmatmul.mubr.f32.gmra.mxu0 %v3302
        %v3418 = vpop.f32.mrf.mxu0
        %v3419 = vadd.f32 0.0, %v3418
        %v3420 = vpop.f32.mrf.mxu0
        %3421 = vmatprep.mubr.f32.mxu0 0.0
        %3422 = vmatmul.mubr.f32.gmra.mxu0 %v3304
        %v3423 = vpop.f32.mrf.mxu0
        %v3424 = vadd.f32 0.0, %v3423
        %v3425 = vpop.f32.mrf.mxu0
        %3426 = vmatprep.mubr.f32.mxu0 0.0
        %3427 = vmatmul.mubr.f32.gmra.mxu0 %v3306
        %v3428 = vpop.f32.mrf.mxu0
        %v3429 = vadd.f32 0.0, %v3428
        %v3430 = vpop.f32.mrf.mxu0
        %3431 = vmatprep.mubr.f32.mxu0 0.0
        %3432 = vmatmul.mubr.f32.gmra.mxu0 %v3308
        %v3433 = vpop.f32.mrf.mxu0
        %v3434 = vadd.f32 0.0, %v3433
        %v3435 = vpop.f32.mrf.mxu0
        %3436 = vmatprep.mubr.f32.mxu0 0.0
        %3437 = vmatmul.mubr.f32.gmra.mxu0 %v3310
        %v3438 = vpop.f32.mrf.mxu0
        %v3439 = vadd.f32 0.0, %v3438
        %v3440 = vpop.f32.mrf.mxu0
        %3441 = vmatprep.mubr.f32.mxu0 0.0
        %3442 = vmatmul.mubr.f32.gmra.mxu0 %v3312
        %v3443 = vpop.f32.mrf.mxu0
        %v3444 = vadd.f32 0.0, %v3443
        %v3445 = vpop.f32.mrf.mxu0
        %3446 = vmatprep.mubr.f32.mxu0 0.0
        %3447 = vmatmul.mubr.f32.gmra.mxu0 %v3314
        %v3448 = vpop.f32.mrf.mxu0
        %v3449 = vadd.f32 0.0, %v3448
        %v3450 = vpop.f32.mrf.mxu0
        %3451 = vmatprep.mubr.f32.mxu0 0.0
        %3452 = vmatmul.mubr.f32.gmra.mxu0 %v3316
        %v3453 = vpop.f32.mrf.mxu0
        %v3454 = vadd.f32 0.0, %v3453
        %v3455 = vpop.f32.mrf.mxu0
        %3456 = vmatprep.mubr.f32.mxu0 0.0
        %3457 = vmatmul.mubr.f32.gmra.mxu0 %v3318
        %v3458 = vpop.f32.mrf.mxu0
        %v3459 = vadd.f32 0.0, %v3458
        %v3460 = vpop.f32.mrf.mxu0
        %3461 = vmatprep.mubr.f32.mxu0 0.0
        %3462 = vmatmul.mubr.f32.gmra.mxu0 %v3320
        %v3463 = vpop.f32.mrf.mxu0
        %v3464 = vadd.f32 0.0, %v3463
        %v3465 = vpop.f32.mrf.mxu0
        %3466 = vdwg.mxu0
        %3483 = vrot.lane.b32.xlu0 %v3389, 96
        %v3484 = vpop.permute.xlu0 %3483
        %3485 = vrot.lane.b32.xlu0 %v3394, 96
        %v3486 = vpop.permute.xlu0 %3485
        %3487 = vrot.lane.b32.xlu0 %v3399, 96
        %v3488 = vpop.permute.xlu0 %3487
        %3489 = vrot.lane.b32.xlu0 %v3404, 96
        %v3490 = vpop.permute.xlu0 %3489
        %3491 = vrot.lane.b32.xlu0 %v3409, 96
        %v3492 = vpop.permute.xlu0 %3491
        %3493 = vrot.lane.b32.xlu0 %v3414, 96
        %v3494 = vpop.permute.xlu0 %3493
        %3495 = vrot.lane.b32.xlu0 %v3419, 96
        %v3496 = vpop.permute.xlu0 %3495
        %3497 = vrot.lane.b32.xlu0 %v3424, 96
        %v3498 = vpop.permute.xlu0 %3497
        %3499 = vrot.lane.b32.xlu0 %v3429, 96
        %v3500 = vpop.permute.xlu0 %3499
        %3501 = vrot.lane.b32.xlu0 %v3434, 96
        %v3502 = vpop.permute.xlu0 %3501
        %3503 = vrot.lane.b32.xlu0 %v3439, 96
        %v3504 = vpop.permute.xlu0 %3503
        %3505 = vrot.lane.b32.xlu0 %v3444, 96
        %v3506 = vpop.permute.xlu0 %3505
        %3507 = vrot.lane.b32.xlu0 %v3449, 96
        %v3508 = vpop.permute.xlu0 %3507
        %3509 = vrot.lane.b32.xlu0 %v3454, 96
        %v3510 = vpop.permute.xlu0 %3509
        %3511 = vrot.lane.b32.xlu0 %v3459, 96
        %v3512 = vpop.permute.xlu0 %3511
        %3513 = vrot.lane.b32.xlu0 %v3464, 96
        %v3514 = vpop.permute.xlu0 %3513
        %3531 = vmatprep.subr.mxu0 0.0
        %3532 = vmatpush1.msra.mxu0 %v3514
        %3533 = vmatprep.subr.mxu0 0.0
        %3534 = vmatpush1.msra.mxu0 %v3512
        %3535 = vmatprep.subr.mxu0 0.0
        %3536 = vmatpush1.msra.mxu0 %v3510
        %3537 = vmatprep.subr.mxu0 0.0
        %3538 = vmatpush1.msra.mxu0 %v3508
        %3539 = vmatprep.subr.mxu0 0.0
        %3540 = vmatpush1.msra.mxu0 %v3506
        %3541 = vmatprep.subr.mxu0 0.0
        %3542 = vmatpush1.msra.mxu0 %v3504
        %3543 = vmatprep.subr.mxu0 0.0
        %3544 = vmatpush1.msra.mxu0 %v3502
        %3545 = vmatprep.subr.mxu0 0.0
        %3546 = vmatpush1.msra.mxu0 %v3500
        %3547 = vmatprep.subr.mxu0 0.0
        %3548 = vmatpush1.msra.mxu0 %v3498
        %3549 = vmatprep.subr.mxu0 0.0
        %3550 = vmatpush1.msra.mxu0 %v3496
        %3551 = vmatprep.subr.mxu0 0.0
        %3552 = vmatpush1.msra.mxu0 %v3494
        %3553 = vmatprep.subr.mxu0 0.0
        %3554 = vmatpush1.msra.mxu0 %v3492
        %3555 = vmatprep.subr.mxu0 0.0
        %3556 = vmatpush1.msra.mxu0 %v3490
        %3557 = vmatprep.subr.mxu0 0.0
        %3558 = vmatpush1.msra.mxu0 %v3488
        %3559 = vmatprep.subr.mxu0 0.0
        %3560 = vmatpush1.msra.mxu0 %v3486
        %3561 = vmatprep.subr.mxu0 0.0
        %3562 = vmatpush1.msra.mxu0 %v3484
        %3563 = vmatprep.subr.mxu0 0.0
        %3564 = vmatpush2.msra.mxu0 0.0
        %3565 = vmatprep.subr.mxu0 0.0
        %3566 = vmatpush2.msra.mxu0 0.0
        %3567 = vmatprep.subr.mxu0 0.0
        %3568 = vmatpush2.msra.mxu0 0.0
        %3569 = vmatprep.subr.mxu0 0.0
        %3570 = vmatpush2.msra.mxu0 0.0
        %3571 = vmatprep.subr.mxu0 0.0
        %3572 = vmatpush2.msra.mxu0 0.0
        %3573 = vmatprep.subr.mxu0 0.0
        %3574 = vmatpush2.msra.mxu0 0.0
        %3575 = vmatprep.subr.mxu0 0.0
        %3576 = vmatpush2.msra.mxu0 0.0
        %3577 = vmatprep.subr.mxu0 0.0
        %3578 = vmatpush2.msra.mxu0 0.0
        %3579 = vmatprep.subr.mxu0 0.0
        %3580 = vmatpush2.msra.mxu0 0.0
        %3581 = vmatprep.subr.mxu0 0.0
        %3582 = vmatpush2.msra.mxu0 0.0
        %3583 = vmatprep.subr.mxu0 0.0
        %3584 = vmatpush2.msra.mxu0 0.0
        %3585 = vmatprep.subr.mxu0 0.0
        %3586 = vmatpush2.msra.mxu0 0.0
        %3587 = vmatprep.subr.mxu0 0.0
        %3588 = vmatpush2.msra.mxu0 0.0
        %3589 = vmatprep.subr.mxu0 0.0
        %3590 = vmatpush2.msra.mxu0 0.0
        %3591 = vmatprep.subr.mxu0 0.0
        %3592 = vmatpush2.msra.mxu0 0.0
        %3593 = vmatprep.subr.mxu0 0.0
        %3594 = vmatpush2.msra.mxu0 0.0
        %3595 = vmatprep.mubr.f32.mxu0 0.0
        %3596 = vmatmul.mubr.f32.gmra.mxu0 %v487
        %v3597 = vpop.f32.mrf.mxu0
        %v3598 = vadd.f32 0.0, %v3597
        %v3599 = vpop.f32.mrf.mxu0
        %3600 = vmatprep.mubr.f32.mxu0 0.0
        %3601 = vmatmul.mubr.f32.gmra.mxu0 %v488
        %v3602 = vpop.f32.mrf.mxu0
        %v3603 = vadd.f32 0.0, %v3602
        %v3604 = vpop.f32.mrf.mxu0
        %3605 = vmatprep.mubr.f32.mxu0 0.0
        %3606 = vmatmul.mubr.f32.gmra.mxu0 %v489
        %v3607 = vpop.f32.mrf.mxu0
        %v3608 = vadd.f32 0.0, %v3607
        %v3609 = vpop.f32.mrf.mxu0
        %3610 = vmatprep.mubr.f32.mxu0 0.0
        %3611 = vmatmul.mubr.f32.gmra.mxu0 %v490
        %v3612 = vpop.f32.mrf.mxu0
        %v3613 = vadd.f32 0.0, %v3612
        %v3614 = vpop.f32.mrf.mxu0
        %3615 = vmatprep.mubr.f32.mxu0 0.0
        %3616 = vmatmul.mubr.f32.gmra.mxu0 %v491
        %v3617 = vpop.f32.mrf.mxu0
        %v3618 = vadd.f32 0.0, %v3617
        %v3619 = vpop.f32.mrf.mxu0
        %3620 = vmatprep.mubr.f32.mxu0 0.0
        %3621 = vmatmul.mubr.f32.gmra.mxu0 %v492
        %v3622 = vpop.f32.mrf.mxu0
        %v3623 = vadd.f32 0.0, %v3622
        %v3624 = vpop.f32.mrf.mxu0
        %3625 = vmatprep.mubr.f32.mxu0 0.0
        %3626 = vmatmul.mubr.f32.gmra.mxu0 %v493
        %v3627 = vpop.f32.mrf.mxu0
        %v3628 = vadd.f32 0.0, %v3627
        %v3629 = vpop.f32.mrf.mxu0
        %3630 = vmatprep.mubr.f32.mxu0 0.0
        %3631 = vmatmul.mubr.f32.gmra.mxu0 %v494
        %v3632 = vpop.f32.mrf.mxu0
        %v3633 = vadd.f32 0.0, %v3632
        %v3634 = vpop.f32.mrf.mxu0
        %3635 = vmatprep.mubr.f32.mxu0 0.0
        %3636 = vmatmul.mubr.f32.gmra.mxu0 %v495
        %v3637 = vpop.f32.mrf.mxu0
        %v3638 = vadd.f32 0.0, %v3637
        %v3639 = vpop.f32.mrf.mxu0
        %3640 = vmatprep.mubr.f32.mxu0 0.0
        %3641 = vmatmul.mubr.f32.gmra.mxu0 %v496
        %v3642 = vpop.f32.mrf.mxu0
        %v3643 = vadd.f32 0.0, %v3642
        %v3644 = vpop.f32.mrf.mxu0
        %3645 = vmatprep.mubr.f32.mxu0 0.0
        %3646 = vmatmul.mubr.f32.gmra.mxu0 %v497
        %v3647 = vpop.f32.mrf.mxu0
        %v3648 = vadd.f32 0.0, %v3647
        %v3649 = vpop.f32.mrf.mxu0
        %3650 = vmatprep.mubr.f32.mxu0 0.0
        %3651 = vmatmul.mubr.f32.gmra.mxu0 %v498
        %v3652 = vpop.f32.mrf.mxu0
        %v3653 = vadd.f32 0.0, %v3652
        %v3654 = vpop.f32.mrf.mxu0
        %3655 = vmatprep.mubr.f32.mxu0 0.0
        %3656 = vmatmul.mubr.f32.gmra.mxu0 %v499
        %v3657 = vpop.f32.mrf.mxu0
        %v3658 = vadd.f32 0.0, %v3657
        %v3659 = vpop.f32.mrf.mxu0
        %3660 = vmatprep.mubr.f32.mxu0 0.0
        %3661 = vmatmul.mubr.f32.gmra.mxu0 %v500
        %v3662 = vpop.f32.mrf.mxu0
        %v3663 = vadd.f32 0.0, %v3662
        %v3664 = vpop.f32.mrf.mxu0
        %3665 = vmatprep.mubr.f32.mxu0 0.0
        %3666 = vmatmul.mubr.f32.gmra.mxu0 %v501
        %v3667 = vpop.f32.mrf.mxu0
        %v3668 = vadd.f32 0.0, %v3667
        %v3669 = vpop.f32.mrf.mxu0
        %3670 = vmatprep.mubr.f32.mxu0 0.0
        %3671 = vmatmul.mubr.f32.gmra.mxu0 %v502
        %v3672 = vpop.f32.mrf.mxu0
        %v3673 = vadd.f32 0.0, %v3672
        %v3674 = vpop.f32.mrf.mxu0
        %3675 = vdwg.mxu0
        %3676 = vmatprep.subr.mxu0 0.0
        %3677 = vmatpush1.msra.mxu0 %v3464
        %3678 = vmatprep.subr.mxu0 0.0
        %3679 = vmatpush1.msra.mxu0 %v3459
        %3680 = vmatprep.subr.mxu0 0.0
        %3681 = vmatpush1.msra.mxu0 %v3454
        %3682 = vmatprep.subr.mxu0 0.0
        %3683 = vmatpush1.msra.mxu0 %v3449
        %3684 = vmatprep.subr.mxu0 0.0
        %3685 = vmatpush1.msra.mxu0 %v3444
        %3686 = vmatprep.subr.mxu0 0.0
        %3687 = vmatpush1.msra.mxu0 %v3439
        %3688 = vmatprep.subr.mxu0 0.0
        %3689 = vmatpush1.msra.mxu0 %v3434
        %3690 = vmatprep.subr.mxu0 0.0
        %3691 = vmatpush1.msra.mxu0 %v3429
        %3692 = vmatprep.subr.mxu0 0.0
        %3693 = vmatpush1.msra.mxu0 %v3424
        %3694 = vmatprep.subr.mxu0 0.0
        %3695 = vmatpush1.msra.mxu0 %v3419
        %3696 = vmatprep.subr.mxu0 0.0
        %3697 = vmatpush1.msra.mxu0 %v3414
        %3698 = vmatprep.subr.mxu0 0.0
        %3699 = vmatpush1.msra.mxu0 %v3409
        %3700 = vmatprep.subr.mxu0 0.0
        %3701 = vmatpush1.msra.mxu0 %v3404
        %3702 = vmatprep.subr.mxu0 0.0
        %3703 = vmatpush1.msra.mxu0 %v3399
        %3704 = vmatprep.subr.mxu0 0.0
        %3705 = vmatpush1.msra.mxu0 %v3394
        %3706 = vmatprep.subr.mxu0 0.0
        %3707 = vmatpush1.msra.mxu0 %v3389
        %3708 = vmatprep.subr.mxu0 0.0
        %3709 = vmatpush2.msra.mxu0 0.0
        %3710 = vmatprep.subr.mxu0 0.0
        %3711 = vmatpush2.msra.mxu0 0.0
        %3712 = vmatprep.subr.mxu0 0.0
        %3713 = vmatpush2.msra.mxu0 0.0
        %3714 = vmatprep.subr.mxu0 0.0
        %3715 = vmatpush2.msra.mxu0 0.0
        %3716 = vmatprep.subr.mxu0 0.0
        %3717 = vmatpush2.msra.mxu0 0.0
        %3718 = vmatprep.subr.mxu0 0.0
        %3719 = vmatpush2.msra.mxu0 0.0
        %3720 = vmatprep.subr.mxu0 0.0
        %3721 = vmatpush2.msra.mxu0 0.0
        %3722 = vmatprep.subr.mxu0 0.0
        %3723 = vmatpush2.msra.mxu0 0.0
        %3724 = vmatprep.subr.mxu0 0.0
        %3725 = vmatpush2.msra.mxu0 0.0
        %3726 = vmatprep.subr.mxu0 0.0
        %3727 = vmatpush2.msra.mxu0 0.0
        %3728 = vmatprep.subr.mxu0 0.0
        %3729 = vmatpush2.msra.mxu0 0.0
        %3730 = vmatprep.subr.mxu0 0.0
        %3731 = vmatpush2.msra.mxu0 0.0
        %3732 = vmatprep.subr.mxu0 0.0
        %3733 = vmatpush2.msra.mxu0 0.0
        %3734 = vmatprep.subr.mxu0 0.0
        %3735 = vmatpush2.msra.mxu0 0.0
        %3736 = vmatprep.subr.mxu0 0.0
        %3737 = vmatpush2.msra.mxu0 0.0
        %3738 = vmatprep.subr.mxu0 0.0
        %3739 = vmatpush2.msra.mxu0 0.0
        %3740 = vmatprep.mubr.f32.mxu0 0.0
        %3741 = vmatmul.mubr.f32.gmra.mxu0 %v470
        %v3742 = vpop.f32.mrf.mxu0
        %v3743 = vadd.f32 %v3598, %v3742
        %v3744 = vpop.f32.mrf.mxu0
        %3745 = vmatprep.mubr.f32.mxu0 0.0
        %3746 = vmatmul.mubr.f32.gmra.mxu0 %v471
        %v3747 = vpop.f32.mrf.mxu0
        %v3748 = vadd.f32 %v3603, %v3747
        %v3749 = vpop.f32.mrf.mxu0
        %3750 = vmatprep.mubr.f32.mxu0 0.0
        %3751 = vmatmul.mubr.f32.gmra.mxu0 %v472
        %v3752 = vpop.f32.mrf.mxu0
        %v3753 = vadd.f32 %v3608, %v3752
        %v3754 = vpop.f32.mrf.mxu0
        %3755 = vmatprep.mubr.f32.mxu0 0.0
        %3756 = vmatmul.mubr.f32.gmra.mxu0 %v473
        %v3757 = vpop.f32.mrf.mxu0
        %v3758 = vadd.f32 %v3613, %v3757
        %v3759 = vpop.f32.mrf.mxu0
        %3760 = vmatprep.mubr.f32.mxu0 0.0
        %3761 = vmatmul.mubr.f32.gmra.mxu0 %v474
        %v3762 = vpop.f32.mrf.mxu0
        %v3763 = vadd.f32 %v3618, %v3762
        %v3764 = vpop.f32.mrf.mxu0
        %3765 = vmatprep.mubr.f32.mxu0 0.0
        %3766 = vmatmul.mubr.f32.gmra.mxu0 %v475
        %v3767 = vpop.f32.mrf.mxu0
        %v3768 = vadd.f32 %v3623, %v3767
        %v3769 = vpop.f32.mrf.mxu0
        %3770 = vmatprep.mubr.f32.mxu0 0.0
        %3771 = vmatmul.mubr.f32.gmra.mxu0 %v476
        %v3772 = vpop.f32.mrf.mxu0
        %v3773 = vadd.f32 %v3628, %v3772
        %v3774 = vpop.f32.mrf.mxu0
        %3775 = vmatprep.mubr.f32.mxu0 0.0
        %3776 = vmatmul.mubr.f32.gmra.mxu0 %v477
        %v3777 = vpop.f32.mrf.mxu0
        %v3778 = vadd.f32 %v3633, %v3777
        %v3779 = vpop.f32.mrf.mxu0
        %3780 = vmatprep.mubr.f32.mxu0 0.0
        %3781 = vmatmul.mubr.f32.gmra.mxu0 %v478
        %v3782 = vpop.f32.mrf.mxu0
        %v3783 = vadd.f32 %v3638, %v3782
        %v3784 = vpop.f32.mrf.mxu0
        %3785 = vmatprep.mubr.f32.mxu0 0.0
        %3786 = vmatmul.mubr.f32.gmra.mxu0 %v479
        %v3787 = vpop.f32.mrf.mxu0
        %v3788 = vadd.f32 %v3643, %v3787
        %v3789 = vpop.f32.mrf.mxu0
        %3790 = vmatprep.mubr.f32.mxu0 0.0
        %3791 = vmatmul.mubr.f32.gmra.mxu0 %v480
        %v3792 = vpop.f32.mrf.mxu0
        %v3793 = vadd.f32 %v3648, %v3792
        %v3794 = vpop.f32.mrf.mxu0
        %3795 = vmatprep.mubr.f32.mxu0 0.0
        %3796 = vmatmul.mubr.f32.gmra.mxu0 %v481
        %v3797 = vpop.f32.mrf.mxu0
        %v3798 = vadd.f32 %v3653, %v3797
        %v3799 = vpop.f32.mrf.mxu0
        %3800 = vmatprep.mubr.f32.mxu0 0.0
        %3801 = vmatmul.mubr.f32.gmra.mxu0 %v482
        %v3802 = vpop.f32.mrf.mxu0
        %v3803 = vadd.f32 %v3658, %v3802
        %v3804 = vpop.f32.mrf.mxu0
        %3805 = vmatprep.mubr.f32.mxu0 0.0
        %3806 = vmatmul.mubr.f32.gmra.mxu0 %v483
        %v3807 = vpop.f32.mrf.mxu0
        %v3808 = vadd.f32 %v3663, %v3807
        %v3809 = vpop.f32.mrf.mxu0
        %3810 = vmatprep.mubr.f32.mxu0 0.0
        %3811 = vmatmul.mubr.f32.gmra.mxu0 %v484
        %v3812 = vpop.f32.mrf.mxu0
        %v3813 = vadd.f32 %v3668, %v3812
        %v3814 = vpop.f32.mrf.mxu0
        %3815 = vmatprep.mubr.f32.mxu0 0.0
        %3816 = vmatmul.mubr.f32.gmra.mxu0 %v485
        %v3817 = vpop.f32.mrf.mxu0
        %v3818 = vadd.f32 %v3673, %v3817
        %v3819 = vpop.f32.mrf.mxu0
        %3820 = vdwg.mxu0
        %3821 = vrot.lane.b32.xlu0 %v3389, 64
        %v3822 = vpop.permute.xlu0 %3821
        %3823 = vrot.lane.b32.xlu0 %v3394, 64
        %v3824 = vpop.permute.xlu0 %3823
        %3825 = vrot.lane.b32.xlu0 %v3399, 64
        %v3826 = vpop.permute.xlu0 %3825
        %3827 = vrot.lane.b32.xlu0 %v3404, 64
        %v3828 = vpop.permute.xlu0 %3827
        %3829 = vrot.lane.b32.xlu0 %v3409, 64
        %v3830 = vpop.permute.xlu0 %3829
        %3831 = vrot.lane.b32.xlu0 %v3414, 64
        %v3832 = vpop.permute.xlu0 %3831
        %3833 = vrot.lane.b32.xlu0 %v3419, 64
        %v3834 = vpop.permute.xlu0 %3833
        %3835 = vrot.lane.b32.xlu0 %v3424, 64
        %v3836 = vpop.permute.xlu0 %3835
        %3837 = vrot.lane.b32.xlu0 %v3429, 64
        %v3838 = vpop.permute.xlu0 %3837
        %3839 = vrot.lane.b32.xlu0 %v3434, 64
        %v3840 = vpop.permute.xlu0 %3839
        %3841 = vrot.lane.b32.xlu0 %v3439, 64
        %v3842 = vpop.permute.xlu0 %3841
        %3843 = vrot.lane.b32.xlu0 %v3444, 64
        %v3844 = vpop.permute.xlu0 %3843
        %3845 = vrot.lane.b32.xlu0 %v3449, 64
        %v3846 = vpop.permute.xlu0 %3845
        %3847 = vrot.lane.b32.xlu0 %v3454, 64
        %v3848 = vpop.permute.xlu0 %3847
        %3849 = vrot.lane.b32.xlu0 %v3459, 64
        %v3850 = vpop.permute.xlu0 %3849
        %3851 = vrot.lane.b32.xlu0 %v3464, 64
        %v3852 = vpop.permute.xlu0 %3851
        %3869 = vmatprep.subr.mxu0 0.0
        %3870 = vmatpush1.msra.mxu0 %v3852
        %3871 = vmatprep.subr.mxu0 0.0
        %3872 = vmatpush1.msra.mxu0 %v3850
        %3873 = vmatprep.subr.mxu0 0.0
        %3874 = vmatpush1.msra.mxu0 %v3848
        %3875 = vmatprep.subr.mxu0 0.0
        %3876 = vmatpush1.msra.mxu0 %v3846
        %3877 = vmatprep.subr.mxu0 0.0
        %3878 = vmatpush1.msra.mxu0 %v3844
        %3879 = vmatprep.subr.mxu0 0.0
        %3880 = vmatpush1.msra.mxu0 %v3842
        %3881 = vmatprep.subr.mxu0 0.0
        %3882 = vmatpush1.msra.mxu0 %v3840
        %3883 = vmatprep.subr.mxu0 0.0
        %3884 = vmatpush1.msra.mxu0 %v3838
        %3885 = vmatprep.subr.mxu0 0.0
        %3886 = vmatpush1.msra.mxu0 %v3836
        %3887 = vmatprep.subr.mxu0 0.0
        %3888 = vmatpush1.msra.mxu0 %v3834
        %3889 = vmatprep.subr.mxu0 0.0
        %3890 = vmatpush1.msra.mxu0 %v3832
        %3891 = vmatprep.subr.mxu0 0.0
        %3892 = vmatpush1.msra.mxu0 %v3830
        %3893 = vmatprep.subr.mxu0 0.0
        %3894 = vmatpush1.msra.mxu0 %v3828
        %3895 = vmatprep.subr.mxu0 0.0
        %3896 = vmatpush1.msra.mxu0 %v3826
        %3897 = vmatprep.subr.mxu0 0.0
        %3898 = vmatpush1.msra.mxu0 %v3824
        %3899 = vmatprep.subr.mxu0 0.0
        %3900 = vmatpush1.msra.mxu0 %v3822
        %3901 = vmatprep.subr.mxu0 0.0
        %3902 = vmatpush2.msra.mxu0 0.0
        %3903 = vmatprep.subr.mxu0 0.0
        %3904 = vmatpush2.msra.mxu0 0.0
        %3905 = vmatprep.subr.mxu0 0.0
        %3906 = vmatpush2.msra.mxu0 0.0
        %3907 = vmatprep.subr.mxu0 0.0
        %3908 = vmatpush2.msra.mxu0 0.0
        %3909 = vmatprep.subr.mxu0 0.0
        %3910 = vmatpush2.msra.mxu0 0.0
        %3911 = vmatprep.subr.mxu0 0.0
        %3912 = vmatpush2.msra.mxu0 0.0
        %3913 = vmatprep.subr.mxu0 0.0
        %3914 = vmatpush2.msra.mxu0 0.0
        %3915 = vmatprep.subr.mxu0 0.0
        %3916 = vmatpush2.msra.mxu0 0.0
        %3917 = vmatprep.subr.mxu0 0.0
        %3918 = vmatpush2.msra.mxu0 0.0
        %3919 = vmatprep.subr.mxu0 0.0
        %3920 = vmatpush2.msra.mxu0 0.0
        %3921 = vmatprep.subr.mxu0 0.0
        %3922 = vmatpush2.msra.mxu0 0.0
        %3923 = vmatprep.subr.mxu0 0.0
        %3924 = vmatpush2.msra.mxu0 0.0
        %3925 = vmatprep.subr.mxu0 0.0
        %3926 = vmatpush2.msra.mxu0 0.0
        %3927 = vmatprep.subr.mxu0 0.0
        %3928 = vmatpush2.msra.mxu0 0.0
        %3929 = vmatprep.subr.mxu0 0.0
        %3930 = vmatpush2.msra.mxu0 0.0
        %3931 = vmatprep.subr.mxu0 0.0
        %3932 = vmatpush2.msra.mxu0 0.0
        %3933 = vmatprep.mubr.f32.mxu0 0.0
        %3934 = vmatmul.mubr.f32.gmra.mxu0 %v858
        %v3935 = vpop.f32.mrf.mxu0
        %v3936 = vadd.f32 0.0, %v3935
        %v3937 = vpop.f32.mrf.mxu0
        %3938 = vmatprep.mubr.f32.mxu0 0.0
        %3939 = vmatmul.mubr.f32.gmra.mxu0 %v859
        %v3940 = vpop.f32.mrf.mxu0
        %v3941 = vadd.f32 0.0, %v3940
        %v3942 = vpop.f32.mrf.mxu0
        %3943 = vmatprep.mubr.f32.mxu0 0.0
        %3944 = vmatmul.mubr.f32.gmra.mxu0 %v860
        %v3945 = vpop.f32.mrf.mxu0
        %v3946 = vadd.f32 0.0, %v3945
        %v3947 = vpop.f32.mrf.mxu0
        %3948 = vmatprep.mubr.f32.mxu0 0.0
        %3949 = vmatmul.mubr.f32.gmra.mxu0 %v861
        %v3950 = vpop.f32.mrf.mxu0
        %v3951 = vadd.f32 0.0, %v3950
        %v3952 = vpop.f32.mrf.mxu0
        %3953 = vmatprep.mubr.f32.mxu0 0.0
        %3954 = vmatmul.mubr.f32.gmra.mxu0 %v862
        %v3955 = vpop.f32.mrf.mxu0
        %v3956 = vadd.f32 0.0, %v3955
        %v3957 = vpop.f32.mrf.mxu0
        %3958 = vmatprep.mubr.f32.mxu0 0.0
        %3959 = vmatmul.mubr.f32.gmra.mxu0 %v863
        %v3960 = vpop.f32.mrf.mxu0
        %v3961 = vadd.f32 0.0, %v3960
        %v3962 = vpop.f32.mrf.mxu0
        %3963 = vmatprep.mubr.f32.mxu0 0.0
        %3964 = vmatmul.mubr.f32.gmra.mxu0 %v864
        %v3965 = vpop.f32.mrf.mxu0
        %v3966 = vadd.f32 0.0, %v3965
        %v3967 = vpop.f32.mrf.mxu0
        %3968 = vmatprep.mubr.f32.mxu0 0.0
        %3969 = vmatmul.mubr.f32.gmra.mxu0 %v865
        %v3970 = vpop.f32.mrf.mxu0
        %v3971 = vadd.f32 0.0, %v3970
        %v3972 = vpop.f32.mrf.mxu0
        %3973 = vmatprep.mubr.f32.mxu0 0.0
        %3974 = vmatmul.mubr.f32.gmra.mxu0 %v866
        %v3975 = vpop.f32.mrf.mxu0
        %v3976 = vadd.f32 0.0, %v3975
        %v3977 = vpop.f32.mrf.mxu0
        %3978 = vmatprep.mubr.f32.mxu0 0.0
        %3979 = vmatmul.mubr.f32.gmra.mxu0 %v867
        %v3980 = vpop.f32.mrf.mxu0
        %v3981 = vadd.f32 0.0, %v3980
        %v3982 = vpop.f32.mrf.mxu0
        %3983 = vmatprep.mubr.f32.mxu0 0.0
        %3984 = vmatmul.mubr.f32.gmra.mxu0 %v868
        %v3985 = vpop.f32.mrf.mxu0
        %v3986 = vadd.f32 0.0, %v3985
        %v3987 = vpop.f32.mrf.mxu0
        %3988 = vmatprep.mubr.f32.mxu0 0.0
        %3989 = vmatmul.mubr.f32.gmra.mxu0 %v869
        %v3990 = vpop.f32.mrf.mxu0
        %v3991 = vadd.f32 0.0, %v3990
        %v3992 = vpop.f32.mrf.mxu0
        %3993 = vmatprep.mubr.f32.mxu0 0.0
        %3994 = vmatmul.mubr.f32.gmra.mxu0 %v870
        %v3995 = vpop.f32.mrf.mxu0
        %v3996 = vadd.f32 0.0, %v3995
        %v3997 = vpop.f32.mrf.mxu0
        %3998 = vmatprep.mubr.f32.mxu0 0.0
        %3999 = vmatmul.mubr.f32.gmra.mxu0 %v871
        %v4000 = vpop.f32.mrf.mxu0
        %v4001 = vadd.f32 0.0, %v4000
        %v4002 = vpop.f32.mrf.mxu0
        %4003 = vmatprep.mubr.f32.mxu0 0.0
        %4004 = vmatmul.mubr.f32.gmra.mxu0 %v872
        %v4005 = vpop.f32.mrf.mxu0
        %v4006 = vadd.f32 0.0, %v4005
        %v4007 = vpop.f32.mrf.mxu0
        %4008 = vmatprep.mubr.f32.mxu0 0.0
        %4009 = vmatmul.mubr.f32.gmra.mxu0 %v873
        %v4010 = vpop.f32.mrf.mxu0
        %v4011 = vadd.f32 0.0, %v4010
        %v4012 = vpop.f32.mrf.mxu0
        %4013 = vdwg.mxu0
        %v4014 = vadd.f32 %v3743, %v3936
        %v4015 = vadd.f32 %v3748, %v3941
        %v4016 = vadd.f32 %v3753, %v3946
        %v4017 = vadd.f32 %v3758, %v3951
        %v4018 = vadd.f32 %v3763, %v3956
        %v4019 = vadd.f32 %v3768, %v3961
        %v4020 = vadd.f32 %v3773, %v3966
        %v4021 = vadd.f32 %v3778, %v3971
        %v4022 = vadd.f32 %v3783, %v3976
        %v4023 = vadd.f32 %v3788, %v3981
        %v4024 = vadd.f32 %v3793, %v3986
        %v4025 = vadd.f32 %v3798, %v3991
        %v4026 = vadd.f32 %v3803, %v3996
        %v4027 = vadd.f32 %v3808, %v4001
        %v4028 = vadd.f32 %v3813, %v4006
        %v4029 = vadd.f32 %v3818, %v4011
        %v4030 = vsel %vm276, %v4014, %v3226
        %v4031 = vsel %vm276, %v4015, %v3227
        %v4032 = vsel %vm276, %v4016, %v3228
        %v4033 = vsel %vm276, %v4017, %v3229
        %v4034 = vsel %vm276, %v4018, %v3230
        %v4035 = vsel %vm276, %v4019, %v3231
        %v4036 = vsel %vm276, %v4020, %v3232
        %v4037 = vsel %vm276, %v4021, %v3233
        %v4038 = vsel %vm276, %v4022, %v3234
        %v4039 = vsel %vm276, %v4023, %v3235
        %v4040 = vsel %vm276, %v4024, %v3236
        %v4041 = vsel %vm276, %v4025, %v3237
        %v4042 = vsel %vm276, %v4026, %v3238
        %v4043 = vsel %vm276, %v4027, %v3239
        %v4044 = vsel %vm276, %v4028, %v3240
        %v4045 = vsel %vm276, %v4029, %v3241
        %v4047 = vsel %vm1147, %v4030, 0
        %v4050 = vsel %vm1147, %v4031, 0
        %v4053 = vsel %vm1147, %v4032, 0
        %v4056 = vsel %vm1147, %v4033, 0
        %v4059 = vsel %vm1147, %v4034, 0
        %v4062 = vsel %vm1147, %v4035, 0
        %v4065 = vsel %vm1147, %v4036, 0
        %v4068 = vsel %vm1147, %v4037, 0
        %v4071 = vsel %vm1147, %v4038, 0
        %v4074 = vsel %vm1147, %v4039, 0
        %v4077 = vsel %vm1147, %v4040, 0
        %v4080 = vsel %vm1147, %v4041, 0
        %v4083 = vsel %vm1147, %v4042, 0
        %v4086 = vsel %vm1147, %v4043, 0
        %v4089 = vsel %vm1147, %v4044, 0
        %v4092 = vsel %vm1147, %v4045, 0
        %4094 = vmatprep.subr.mxu0 0.0
        %4095 = vmatpush1.msra.mxu0 0.0
        %4096 = vmatprep.subr.mxu0 0.0
        %4097 = vmatpush1.msra.mxu0 0.0
        %4098 = vmatprep.subr.mxu0 0.0
        %4099 = vmatpush1.msra.mxu0 0.0
        %4100 = vmatprep.subr.mxu0 0.0
        %4101 = vmatpush1.msra.mxu0 0.0
        %4102 = vmatprep.subr.mxu0 0.0
        %4103 = vmatpush1.msra.mxu0 0.0
        %4104 = vmatprep.subr.mxu0 0.0
        %4105 = vmatpush1.msra.mxu0 0.0
        %4106 = vmatprep.subr.mxu0 0.0
        %4107 = vmatpush1.msra.mxu0 0.0
        %4108 = vmatprep.subr.mxu0 0.0
        %4109 = vmatpush1.msra.mxu0 0.0
        %4110 = vmatprep.subr.mxu0 0.0
        %4111 = vmatpush1.msra.mxu0 %v234
        %4112 = vmatprep.subr.mxu0 0.0
        %4113 = vmatpush1.msra.mxu0 %v233
        %4114 = vmatprep.subr.mxu0 0.0
        %4115 = vmatpush1.msra.mxu0 %v232
        %4116 = vmatprep.subr.mxu0 0.0
        %4117 = vmatpush1.msra.mxu0 %v231
        %4118 = vmatprep.subr.mxu0 0.0
        %4119 = vmatpush1.msra.mxu0 %v230
        %4120 = vmatprep.subr.mxu0 0.0
        %4121 = vmatpush1.msra.mxu0 %v229
        %4122 = vmatprep.subr.mxu0 0.0
        %4123 = vmatpush1.msra.mxu0 %v228
        %4124 = vmatprep.subr.mxu0 0.0
        %4125 = vmatpush1.msra.mxu0 %v227
        %4126 = vmatprep.subr.mxu0 0.0
        %4127 = vmatpush2.msra.mxu0 0.0
        %4128 = vmatprep.subr.mxu0 0.0
        %4129 = vmatpush2.msra.mxu0 0.0
        %4130 = vmatprep.subr.mxu0 0.0
        %4131 = vmatpush2.msra.mxu0 0.0
        %4132 = vmatprep.subr.mxu0 0.0
        %4133 = vmatpush2.msra.mxu0 0.0
        %4134 = vmatprep.subr.mxu0 0.0
        %4135 = vmatpush2.msra.mxu0 0.0
        %4136 = vmatprep.subr.mxu0 0.0
        %4137 = vmatpush2.msra.mxu0 0.0
        %4138 = vmatprep.subr.mxu0 0.0
        %4139 = vmatpush2.msra.mxu0 0.0
        %4140 = vmatprep.subr.mxu0 0.0
        %4141 = vmatpush2.msra.mxu0 0.0
        %4142 = vmatprep.subr.mxu0 0.0
        %4143 = vmatpush2.msra.mxu0 0.0
        %4144 = vmatprep.subr.mxu0 0.0
        %4145 = vmatpush2.msra.mxu0 0.0
        %4146 = vmatprep.subr.mxu0 0.0
        %4147 = vmatpush2.msra.mxu0 0.0
        %4148 = vmatprep.subr.mxu0 0.0
        %4149 = vmatpush2.msra.mxu0 0.0
        %4150 = vmatprep.subr.mxu0 0.0
        %4151 = vmatpush2.msra.mxu0 0.0
        %4152 = vmatprep.subr.mxu0 0.0
        %4153 = vmatpush2.msra.mxu0 0.0
        %4154 = vmatprep.subr.mxu0 0.0
        %4155 = vmatpush2.msra.mxu0 0.0
        %4156 = vmatprep.subr.mxu0 0.0
        %4157 = vmatpush2.msra.mxu0 0.0
        %4158 = vmatprep.mubr.f32.mxu0 0.0
        %4159 = vmatmul.mubr.f32.gmra.mxu0 %v4047
        %v4160 = vpop.f32.mrf.mxu0
        %v4161 = vadd.f32 0.0, %v4160
        %v4162 = vpop.f32.mrf.mxu0
        %4163 = vmatprep.mubr.f32.mxu0 0.0
        %4164 = vmatmul.mubr.f32.gmra.mxu0 %v4050
        %v4165 = vpop.f32.mrf.mxu0
        %v4166 = vadd.f32 0.0, %v4165
        %v4167 = vpop.f32.mrf.mxu0
        %4168 = vmatprep.mubr.f32.mxu0 0.0
        %4169 = vmatmul.mubr.f32.gmra.mxu0 %v4053
        %v4170 = vpop.f32.mrf.mxu0
        %v4171 = vadd.f32 0.0, %v4170
        %v4172 = vpop.f32.mrf.mxu0
        %4173 = vmatprep.mubr.f32.mxu0 0.0
        %4174 = vmatmul.mubr.f32.gmra.mxu0 %v4056
        %v4175 = vpop.f32.mrf.mxu0
        %v4176 = vadd.f32 0.0, %v4175
        %v4177 = vpop.f32.mrf.mxu0
        %4178 = vmatprep.mubr.f32.mxu0 0.0
        %4179 = vmatmul.mubr.f32.gmra.mxu0 %v4059
        %v4180 = vpop.f32.mrf.mxu0
        %v4181 = vadd.f32 0.0, %v4180
        %v4182 = vpop.f32.mrf.mxu0
        %4183 = vmatprep.mubr.f32.mxu0 0.0
        %4184 = vmatmul.mubr.f32.gmra.mxu0 %v4062
        %v4185 = vpop.f32.mrf.mxu0
        %v4186 = vadd.f32 0.0, %v4185
        %v4187 = vpop.f32.mrf.mxu0
        %4188 = vmatprep.mubr.f32.mxu0 0.0
        %4189 = vmatmul.mubr.f32.gmra.mxu0 %v4065
        %v4190 = vpop.f32.mrf.mxu0
        %v4191 = vadd.f32 0.0, %v4190
        %v4192 = vpop.f32.mrf.mxu0
        %4193 = vmatprep.mubr.f32.mxu0 0.0
        %4194 = vmatmul.mubr.f32.gmra.mxu0 %v4068
        %v4195 = vpop.f32.mrf.mxu0
        %v4196 = vadd.f32 0.0, %v4195
        %v4197 = vpop.f32.mrf.mxu0
        %4198 = vmatprep.mubr.f32.mxu0 0.0
        %4199 = vmatmul.mubr.f32.gmra.mxu0 %v4071
        %v4200 = vpop.f32.mrf.mxu0
        %v4201 = vadd.f32 0.0, %v4200
        %v4202 = vpop.f32.mrf.mxu0
        %4203 = vmatprep.mubr.f32.mxu0 0.0
        %4204 = vmatmul.mubr.f32.gmra.mxu0 %v4074
        %v4205 = vpop.f32.mrf.mxu0
        %v4206 = vadd.f32 0.0, %v4205
        %v4207 = vpop.f32.mrf.mxu0
        %4208 = vmatprep.mubr.f32.mxu0 0.0
        %4209 = vmatmul.mubr.f32.gmra.mxu0 %v4077
        %v4210 = vpop.f32.mrf.mxu0
        %v4211 = vadd.f32 0.0, %v4210
        %v4212 = vpop.f32.mrf.mxu0
        %4213 = vmatprep.mubr.f32.mxu0 0.0
        %4214 = vmatmul.mubr.f32.gmra.mxu0 %v4080
        %v4215 = vpop.f32.mrf.mxu0
        %v4216 = vadd.f32 0.0, %v4215
        %v4217 = vpop.f32.mrf.mxu0
        %4218 = vmatprep.mubr.f32.mxu0 0.0
        %4219 = vmatmul.mubr.f32.gmra.mxu0 %v4083
        %v4220 = vpop.f32.mrf.mxu0
        %v4221 = vadd.f32 0.0, %v4220
        %v4222 = vpop.f32.mrf.mxu0
        %4223 = vmatprep.mubr.f32.mxu0 0.0
        %4224 = vmatmul.mubr.f32.gmra.mxu0 %v4086
        %v4225 = vpop.f32.mrf.mxu0
        %v4226 = vadd.f32 0.0, %v4225
        %v4227 = vpop.f32.mrf.mxu0
        %4228 = vmatprep.mubr.f32.mxu0 0.0
        %4229 = vmatmul.mubr.f32.gmra.mxu0 %v4089
        %v4230 = vpop.f32.mrf.mxu0
        %v4231 = vadd.f32 0.0, %v4230
        %v4232 = vpop.f32.mrf.mxu0
        %4233 = vmatprep.mubr.f32.mxu0 0.0
        %4234 = vmatmul.mubr.f32.gmra.mxu0 %v4092
        %v4235 = vpop.f32.mrf.mxu0
        %v4236 = vadd.f32 0.0, %v4235
        %v4237 = vpop.f32.mrf.mxu0
        %4238 = vdwg.mxu0
        %v4239 = vadd.f32 %v4161, %v255
        %v4240 = vadd.f32 %v4166, %v255
        %v4241 = vadd.f32 %v4171, %v255
        %v4242 = vadd.f32 %v4176, %v255
        %v4243 = vadd.f32 %v4181, %v255
        %v4244 = vadd.f32 %v4186, %v255
        %v4245 = vadd.f32 %v4191, %v255
        %v4246 = vadd.f32 %v4196, %v255
        %v4247 = vadd.f32 %v4201, %v255
        %v4248 = vadd.f32 %v4206, %v255
        %v4249 = vadd.f32 %v4211, %v255
        %v4250 = vadd.f32 %v4216, %v255
        %v4251 = vadd.f32 %v4221, %v255
        %v4252 = vadd.f32 %v4226, %v255
        %v4253 = vadd.f32 %v4231, %v255
        %v4254 = vadd.f32 %v4236, %v255
        %v4255 = vxor.u32 %v4239, 2147483648
        %v4256 = vxor.u32 %v4240, 2147483648
        %v4257 = vxor.u32 %v4241, 2147483648
        %v4258 = vxor.u32 %v4242, 2147483648
        %v4259 = vxor.u32 %v4243, 2147483648
        %v4260 = vxor.u32 %v4244, 2147483648
        %v4261 = vxor.u32 %v4245, 2147483648
        %v4262 = vxor.u32 %v4246, 2147483648
        %v4263 = vxor.u32 %v4247, 2147483648
        %v4264 = vxor.u32 %v4248, 2147483648
        %v4265 = vxor.u32 %v4249, 2147483648
        %v4266 = vxor.u32 %v4250, 2147483648
        %v4267 = vxor.u32 %v4251, 2147483648
        %v4268 = vxor.u32 %v4252, 2147483648
        %v4269 = vxor.u32 %v4253, 2147483648
        %v4270 = vxor.u32 %v4254, 2147483648
        %v4271 = vmul.f32 %v4255, 1.442695
        %v4272 = vpow.pop %v4271
        %v4273 = vmul.f32 %v4256, 1.442695
        %v4274 = vpow.pop %v4273
        %v4275 = vmul.f32 %v4257, 1.442695
        %v4276 = vpow.pop %v4275
        %v4277 = vmul.f32 %v4258, 1.442695
        %v4278 = vpow.pop %v4277
        %v4279 = vmul.f32 %v4259, 1.442695
        %v4280 = vpow.pop %v4279
        %v4281 = vmul.f32 %v4260, 1.442695
        %v4282 = vpow.pop %v4281
        %v4283 = vmul.f32 %v4261, 1.442695
        %v4284 = vpow.pop %v4283
        %v4285 = vmul.f32 %v4262, 1.442695
        %v4286 = vpow.pop %v4285
        %v4287 = vmul.f32 %v4263, 1.442695
        %v4288 = vpow.pop %v4287
        %v4289 = vmul.f32 %v4264, 1.442695
        %v4290 = vpow.pop %v4289
        %v4291 = vmul.f32 %v4265, 1.442695
        %v4292 = vpow.pop %v4291
        %v4293 = vmul.f32 %v4266, 1.442695
        %v4294 = vpow.pop %v4293
        %v4295 = vmul.f32 %v4267, 1.442695
        %v4296 = vpow.pop %v4295
        %v4297 = vmul.f32 %v4268, 1.442695
        %v4298 = vpow.pop %v4297
        %v4299 = vmul.f32 %v4269, 1.442695
        %v4300 = vpow.pop %v4299
        %v4301 = vmul.f32 %v4270, 1.442695
        %v4302 = vpow.pop %v4301
        %v4303 = vadd.f32 %v4272, 1.0
        %v4304 = vadd.f32 %v4274, 1.0
        %v4305 = vadd.f32 %v4276, 1.0
        %v4306 = vadd.f32 %v4278, 1.0
        %v4307 = vadd.f32 %v4280, 1.0
        %v4308 = vadd.f32 %v4282, 1.0
        %v4309 = vadd.f32 %v4284, 1.0
        %v4310 = vadd.f32 %v4286, 1.0
        %v4311 = vadd.f32 %v4288, 1.0
        %v4312 = vadd.f32 %v4290, 1.0
        %v4313 = vadd.f32 %v4292, 1.0
        %v4314 = vadd.f32 %v4294, 1.0
        %v4315 = vadd.f32 %v4296, 1.0
        %v4316 = vadd.f32 %v4298, 1.0
        %v4317 = vadd.f32 %v4300, 1.0
        %v4318 = vadd.f32 %v4302, 1.0
        %v4319 = vrcp.pop %v4303
        %v4320 = vmul.f32 1.0, %v4319
        %v4321 = vrcp.pop %v4304
        %v4322 = vmul.f32 1.0, %v4321
        %v4323 = vrcp.pop %v4305
        %v4324 = vmul.f32 1.0, %v4323
        %v4325 = vrcp.pop %v4306
        %v4326 = vmul.f32 1.0, %v4325
        %v4327 = vrcp.pop %v4307
        %v4328 = vmul.f32 1.0, %v4327
        %v4329 = vrcp.pop %v4308
        %v4330 = vmul.f32 1.0, %v4329
        %v4331 = vrcp.pop %v4309
        %v4332 = vmul.f32 1.0, %v4331
        %v4333 = vrcp.pop %v4310
        %v4334 = vmul.f32 1.0, %v4333
        %v4335 = vrcp.pop %v4311
        %v4336 = vmul.f32 1.0, %v4335
        %v4337 = vrcp.pop %v4312
        %v4338 = vmul.f32 1.0, %v4337
        %v4339 = vrcp.pop %v4313
        %v4340 = vmul.f32 1.0, %v4339
        %v4341 = vrcp.pop %v4314
        %v4342 = vmul.f32 1.0, %v4341
        %v4343 = vrcp.pop %v4315
        %v4344 = vmul.f32 1.0, %v4343
        %v4345 = vrcp.pop %v4316
        %v4346 = vmul.f32 1.0, %v4345
        %v4347 = vrcp.pop %v4317
        %v4348 = vmul.f32 1.0, %v4347
        %v4349 = vrcp.pop %v4318
        %v4350 = vmul.f32 1.0, %v4349
        %v4351 = vadd.f32 %v4161, %v1455
        %v4352 = vadd.f32 %v4166, %v1455
        %v4353 = vadd.f32 %v4171, %v1455
        %v4354 = vadd.f32 %v4176, %v1455
        %v4355 = vadd.f32 %v4181, %v1455
        %v4356 = vadd.f32 %v4186, %v1455
        %v4357 = vadd.f32 %v4191, %v1455
        %v4358 = vadd.f32 %v4196, %v1455
        %v4359 = vadd.f32 %v4201, %v1455
        %v4360 = vadd.f32 %v4206, %v1455
        %v4361 = vadd.f32 %v4211, %v1455
        %v4362 = vadd.f32 %v4216, %v1455
        %v4363 = vadd.f32 %v4221, %v1455
        %v4364 = vadd.f32 %v4226, %v1455
        %v4365 = vadd.f32 %v4231, %v1455
        %v4366 = vadd.f32 %v4236, %v1455
        %v4367 = vadd.f32 %v4161, %v1475
        %v4368 = vadd.f32 %v4166, %v1475
        %v4369 = vadd.f32 %v4171, %v1475
        %v4370 = vadd.f32 %v4176, %v1475
        %v4371 = vadd.f32 %v4181, %v1475
        %v4372 = vadd.f32 %v4186, %v1475
        %v4373 = vadd.f32 %v4191, %v1475
        %v4374 = vadd.f32 %v4196, %v1475
        %v4375 = vadd.f32 %v4201, %v1475
        %v4376 = vadd.f32 %v4206, %v1475
        %v4377 = vadd.f32 %v4211, %v1475
        %v4378 = vadd.f32 %v4216, %v1475
        %v4379 = vadd.f32 %v4221, %v1475
        %v4380 = vadd.f32 %v4226, %v1475
        %v4381 = vadd.f32 %v4231, %v1475
        %v4382 = vadd.f32 %v4236, %v1475
        %4399 = vrot.lane.b32.xlu0 %v4367, 32
        %v4400 = vpop.permute.xlu0 %4399
        %4401 = vrot.lane.b32.xlu0 %v4368, 32
        %v4402 = vpop.permute.xlu0 %4401
        %4403 = vrot.lane.b32.xlu0 %v4369, 32
        %v4404 = vpop.permute.xlu0 %4403
        %4405 = vrot.lane.b32.xlu0 %v4370, 32
        %v4406 = vpop.permute.xlu0 %4405
        %4407 = vrot.lane.b32.xlu0 %v4371, 32
        %v4408 = vpop.permute.xlu0 %4407
        %4409 = vrot.lane.b32.xlu0 %v4372, 32
        %v4410 = vpop.permute.xlu0 %4409
        %4411 = vrot.lane.b32.xlu0 %v4373, 32
        %v4412 = vpop.permute.xlu0 %4411
        %4413 = vrot.lane.b32.xlu0 %v4374, 32
        %v4414 = vpop.permute.xlu0 %4413
        %4415 = vrot.lane.b32.xlu0 %v4375, 32
        %v4416 = vpop.permute.xlu0 %4415
        %4417 = vrot.lane.b32.xlu0 %v4376, 32
        %v4418 = vpop.permute.xlu0 %4417
        %4419 = vrot.lane.b32.xlu0 %v4377, 32
        %v4420 = vpop.permute.xlu0 %4419
        %4421 = vrot.lane.b32.xlu0 %v4378, 32
        %v4422 = vpop.permute.xlu0 %4421
        %4423 = vrot.lane.b32.xlu0 %v4379, 32
        %v4424 = vpop.permute.xlu0 %4423
        %4425 = vrot.lane.b32.xlu0 %v4380, 32
        %v4426 = vpop.permute.xlu0 %4425
        %4427 = vrot.lane.b32.xlu0 %v4381, 32
        %v4428 = vpop.permute.xlu0 %4427
        %4429 = vrot.lane.b32.xlu0 %v4382, 32
        %v4430 = vpop.permute.xlu0 %4429
        %v4447 = vmul.f32 %v4320, %v4400
        %v4448 = vmul.f32 %v4322, %v4402
        %v4449 = vmul.f32 %v4324, %v4404
        %v4450 = vmul.f32 %v4326, %v4406
        %v4451 = vmul.f32 %v4328, %v4408
        %v4452 = vmul.f32 %v4330, %v4410
        %v4453 = vmul.f32 %v4332, %v4412
        %v4454 = vmul.f32 %v4334, %v4414
        %v4455 = vmul.f32 %v4336, %v4416
        %v4456 = vmul.f32 %v4338, %v4418
        %v4457 = vmul.f32 %v4340, %v4420
        %v4458 = vmul.f32 %v4342, %v4422
        %v4459 = vmul.f32 %v4344, %v4424
        %v4460 = vmul.f32 %v4346, %v4426
        %v4461 = vmul.f32 %v4348, %v4428
        %v4462 = vmul.f32 %v4350, %v4430
        %4479 = vrot.lane.b32.xlu0 %v4447, 64
        %v4480 = vpop.permute.xlu0 %4479
        %4481 = vrot.lane.b32.xlu0 %v4448, 64
        %v4482 = vpop.permute.xlu0 %4481
        %4483 = vrot.lane.b32.xlu0 %v4449, 64
        %v4484 = vpop.permute.xlu0 %4483
        %4485 = vrot.lane.b32.xlu0 %v4450, 64
        %v4486 = vpop.permute.xlu0 %4485
        %4487 = vrot.lane.b32.xlu0 %v4451, 64
        %v4488 = vpop.permute.xlu0 %4487
        %4489 = vrot.lane.b32.xlu0 %v4452, 64
        %v4490 = vpop.permute.xlu0 %4489
        %4491 = vrot.lane.b32.xlu0 %v4453, 64
        %v4492 = vpop.permute.xlu0 %4491
        %4493 = vrot.lane.b32.xlu0 %v4454, 64
        %v4494 = vpop.permute.xlu0 %4493
        %4495 = vrot.lane.b32.xlu0 %v4455, 64
        %v4496 = vpop.permute.xlu0 %4495
        %4497 = vrot.lane.b32.xlu0 %v4456, 64
        %v4498 = vpop.permute.xlu0 %4497
        %4499 = vrot.lane.b32.xlu0 %v4457, 64
        %v4500 = vpop.permute.xlu0 %4499
        %4501 = vrot.lane.b32.xlu0 %v4458, 64
        %v4502 = vpop.permute.xlu0 %4501
        %4503 = vrot.lane.b32.xlu0 %v4459, 64
        %v4504 = vpop.permute.xlu0 %4503
        %4505 = vrot.lane.b32.xlu0 %v4460, 64
        %v4506 = vpop.permute.xlu0 %4505
        %4507 = vrot.lane.b32.xlu0 %v4461, 64
        %v4508 = vpop.permute.xlu0 %4507
        %4509 = vrot.lane.b32.xlu0 %v4462, 64
        %v4510 = vpop.permute.xlu0 %4509
        %v4527 = vadd.f32 %v4351, %v4480
        %v4528 = vadd.f32 %v4352, %v4482
        %v4529 = vadd.f32 %v4353, %v4484
        %v4530 = vadd.f32 %v4354, %v4486
        %v4531 = vadd.f32 %v4355, %v4488
        %v4532 = vadd.f32 %v4356, %v4490
        %v4533 = vadd.f32 %v4357, %v4492
        %v4534 = vadd.f32 %v4358, %v4494
        %v4535 = vadd.f32 %v4359, %v4496
        %v4536 = vadd.f32 %v4360, %v4498
        %v4537 = vadd.f32 %v4361, %v4500
        %v4538 = vadd.f32 %v4362, %v4502
        %v4539 = vadd.f32 %v4363, %v4504
        %v4540 = vadd.f32 %v4364, %v4506
        %v4541 = vadd.f32 %v4365, %v4508
        %v4542 = vadd.f32 %v4366, %v4510
        %v4543 = vtanh.pop %v4527
        %v4544 = vtanh.pop %v4528
        %v4545 = vtanh.pop %v4529
        %v4546 = vtanh.pop %v4530
        %v4547 = vtanh.pop %v4531
        %v4548 = vtanh.pop %v4532
        %v4549 = vtanh.pop %v4533
        %v4550 = vtanh.pop %v4534
        %v4551 = vtanh.pop %v4535
        %v4552 = vtanh.pop %v4536
        %v4553 = vtanh.pop %v4537
        %v4554 = vtanh.pop %v4538
        %v4555 = vtanh.pop %v4539
        %v4556 = vtanh.pop %v4540
        %v4557 = vtanh.pop %v4541
        %v4558 = vtanh.pop %v4542
        %v4559 = vsub.f32 1.0, %v4320
        %v4560 = vsub.f32 1.0, %v4322
        %v4561 = vsub.f32 1.0, %v4324
        %v4562 = vsub.f32 1.0, %v4326
        %v4563 = vsub.f32 1.0, %v4328
        %v4564 = vsub.f32 1.0, %v4330
        %v4565 = vsub.f32 1.0, %v4332
        %v4566 = vsub.f32 1.0, %v4334
        %v4567 = vsub.f32 1.0, %v4336
        %v4568 = vsub.f32 1.0, %v4338
        %v4569 = vsub.f32 1.0, %v4340
        %v4570 = vsub.f32 1.0, %v4342
        %v4571 = vsub.f32 1.0, %v4344
        %v4572 = vsub.f32 1.0, %v4346
        %v4573 = vsub.f32 1.0, %v4348
        %v4574 = vsub.f32 1.0, %v4350
        %4591 = vrot.lane.b32.xlu0 %v4543, 96
        %v4592 = vpop.permute.xlu0 %4591
        %4593 = vrot.lane.b32.xlu0 %v4544, 96
        %v4594 = vpop.permute.xlu0 %4593
        %4595 = vrot.lane.b32.xlu0 %v4545, 96
        %v4596 = vpop.permute.xlu0 %4595
        %4597 = vrot.lane.b32.xlu0 %v4546, 96
        %v4598 = vpop.permute.xlu0 %4597
        %4599 = vrot.lane.b32.xlu0 %v4547, 96
        %v4600 = vpop.permute.xlu0 %4599
        %4601 = vrot.lane.b32.xlu0 %v4548, 96
        %v4602 = vpop.permute.xlu0 %4601
        %4603 = vrot.lane.b32.xlu0 %v4549, 96
        %v4604 = vpop.permute.xlu0 %4603
        %4605 = vrot.lane.b32.xlu0 %v4550, 96
        %v4606 = vpop.permute.xlu0 %4605
        %4607 = vrot.lane.b32.xlu0 %v4551, 96
        %v4608 = vpop.permute.xlu0 %4607
        %4609 = vrot.lane.b32.xlu0 %v4552, 96
        %v4610 = vpop.permute.xlu0 %4609
        %4611 = vrot.lane.b32.xlu0 %v4553, 96
        %v4612 = vpop.permute.xlu0 %4611
        %4613 = vrot.lane.b32.xlu0 %v4554, 96
        %v4614 = vpop.permute.xlu0 %4613
        %4615 = vrot.lane.b32.xlu0 %v4555, 96
        %v4616 = vpop.permute.xlu0 %4615
        %4617 = vrot.lane.b32.xlu0 %v4556, 96
        %v4618 = vpop.permute.xlu0 %4617
        %4619 = vrot.lane.b32.xlu0 %v4557, 96
        %v4620 = vpop.permute.xlu0 %4619
        %4621 = vrot.lane.b32.xlu0 %v4558, 96
        %v4622 = vpop.permute.xlu0 %4621
        %v4639 = vmul.f32 %v4559, %v4592
        %v4640 = vmul.f32 %v4560, %v4594
        %v4641 = vmul.f32 %v4561, %v4596
        %v4642 = vmul.f32 %v4562, %v4598
        %v4643 = vmul.f32 %v4563, %v4600
        %v4644 = vmul.f32 %v4564, %v4602
        %v4645 = vmul.f32 %v4565, %v4604
        %v4646 = vmul.f32 %v4566, %v4606
        %v4647 = vmul.f32 %v4567, %v4608
        %v4648 = vmul.f32 %v4568, %v4610
        %v4649 = vmul.f32 %v4569, %v4612
        %v4650 = vmul.f32 %v4570, %v4614
        %v4651 = vmul.f32 %v4571, %v4616
        %v4652 = vmul.f32 %v4572, %v4618
        %v4653 = vmul.f32 %v4573, %v4620
        %v4654 = vmul.f32 %v4574, %v4622
        %v4655 = vmul.f32 %v4320, %v3226
        %v4656 = vmul.f32 %v4322, %v3227
        %v4657 = vmul.f32 %v4324, %v3228
        %v4658 = vmul.f32 %v4326, %v3229
        %v4659 = vmul.f32 %v4328, %v3230
        %v4660 = vmul.f32 %v4330, %v3231
        %v4661 = vmul.f32 %v4332, %v3232
        %v4662 = vmul.f32 %v4334, %v3233
        %v4663 = vmul.f32 %v4336, %v3234
        %v4664 = vmul.f32 %v4338, %v3235
        %v4665 = vmul.f32 %v4340, %v3236
        %v4666 = vmul.f32 %v4342, %v3237
        %v4667 = vmul.f32 %v4344, %v3238
        %v4668 = vmul.f32 %v4346, %v3239
        %v4669 = vmul.f32 %v4348, %v3240
        %v4670 = vmul.f32 %v4350, %v3241
        %v4671 = vadd.f32 %v4639, %v4655
        %v4672 = vadd.f32 %v4640, %v4656
        %v4673 = vadd.f32 %v4641, %v4657
        %v4674 = vadd.f32 %v4642, %v4658
        %v4675 = vadd.f32 %v4643, %v4659
        %v4676 = vadd.f32 %v4644, %v4660
        %v4677 = vadd.f32 %v4645, %v4661
        %v4678 = vadd.f32 %v4646, %v4662
        %v4679 = vadd.f32 %v4647, %v4663
        %v4680 = vadd.f32 %v4648, %v4664
        %v4681 = vadd.f32 %v4649, %v4665
        %v4682 = vadd.f32 %v4650, %v4666
        %v4683 = vadd.f32 %v4651, %v4667
        %v4684 = vadd.f32 %v4652, %v4668
        %v4685 = vadd.f32 %v4653, %v4669
        %v4686 = vadd.f32 %v4654, %v4670
        %v4687 = vsel %vm276, %v211, %v4671
        %v4688 = vsel %vm276, %v212, %v4672
        %v4689 = vsel %vm276, %v213, %v4673
        %v4690 = vsel %vm276, %v214, %v4674
        %v4691 = vsel %vm276, %v215, %v4675
        %v4692 = vsel %vm276, %v216, %v4676
        %v4693 = vsel %vm276, %v217, %v4677
        %v4694 = vsel %vm276, %v218, %v4678
        %v4695 = vsel %vm276, %v219, %v4679
        %v4696 = vsel %vm276, %v220, %v4680
        %v4697 = vsel %vm276, %v221, %v4681
        %v4698 = vsel %vm276, %v222, %v4682
        %v4699 = vsel %vm276, %v223, %v4683
        %v4700 = vsel %vm276, %v224, %v4684
        %v4701 = vsel %vm276, %v225, %v4685
        %v4702 = vsel %vm276, %v226, %v4686
        %v4704 = vsel %vm1147, %v4687, 0
        %v4707 = vsel %vm1147, %v4688, 0
        %v4710 = vsel %vm1147, %v4689, 0
        %v4713 = vsel %vm1147, %v4690, 0
        %v4716 = vsel %vm1147, %v4691, 0
        %v4719 = vsel %vm1147, %v4692, 0
        %v4722 = vsel %vm1147, %v4693, 0
        %v4725 = vsel %vm1147, %v4694, 0
        %v4728 = vsel %vm1147, %v4695, 0
        %v4731 = vsel %vm1147, %v4696, 0
        %v4734 = vsel %vm1147, %v4697, 0
        %v4737 = vsel %vm1147, %v4698, 0
        %v4740 = vsel %vm1147, %v4699, 0
        %v4743 = vsel %vm1147, %v4700, 0
        %v4746 = vsel %vm1147, %v4701, 0
        %v4749 = vsel %vm1147, %v4702, 0
        %4751 = vmatprep.subr.mxu0 0.0
        %4752 = vmatpush1.msra.mxu0 0.0
        %4753 = vmatprep.subr.mxu0 0.0
        %4754 = vmatpush1.msra.mxu0 0.0
        %4755 = vmatprep.subr.mxu0 0.0
        %4756 = vmatpush1.msra.mxu0 0.0
        %4757 = vmatprep.subr.mxu0 0.0
        %4758 = vmatpush1.msra.mxu0 0.0
        %4759 = vmatprep.subr.mxu0 0.0
        %4760 = vmatpush1.msra.mxu0 0.0
        %4761 = vmatprep.subr.mxu0 0.0
        %4762 = vmatpush1.msra.mxu0 0.0
        %4763 = vmatprep.subr.mxu0 0.0
        %4764 = vmatpush1.msra.mxu0 0.0
        %4765 = vmatprep.subr.mxu0 0.0
        %4766 = vmatpush1.msra.mxu0 0.0
        %4767 = vmatprep.subr.mxu0 0.0
        %4768 = vmatpush1.msra.mxu0 %v246
        %4769 = vmatprep.subr.mxu0 0.0
        %4770 = vmatpush1.msra.mxu0 %v245
        %4771 = vmatprep.subr.mxu0 0.0
        %4772 = vmatpush1.msra.mxu0 %v244
        %4773 = vmatprep.subr.mxu0 0.0
        %4774 = vmatpush1.msra.mxu0 %v243
        %4775 = vmatprep.subr.mxu0 0.0
        %4776 = vmatpush1.msra.mxu0 %v242
        %4777 = vmatprep.subr.mxu0 0.0
        %4778 = vmatpush1.msra.mxu0 %v241
        %4779 = vmatprep.subr.mxu0 0.0
        %4780 = vmatpush1.msra.mxu0 %v240
        %4781 = vmatprep.subr.mxu0 0.0
        %4782 = vmatpush1.msra.mxu0 %v239
        %4783 = vmatprep.subr.mxu0 0.0
        %4784 = vmatpush2.msra.mxu0 0.0
        %4785 = vmatprep.subr.mxu0 0.0
        %4786 = vmatpush2.msra.mxu0 0.0
        %4787 = vmatprep.subr.mxu0 0.0
        %4788 = vmatpush2.msra.mxu0 0.0
        %4789 = vmatprep.subr.mxu0 0.0
        %4790 = vmatpush2.msra.mxu0 0.0
        %4791 = vmatprep.subr.mxu0 0.0
        %4792 = vmatpush2.msra.mxu0 0.0
        %4793 = vmatprep.subr.mxu0 0.0
        %4794 = vmatpush2.msra.mxu0 0.0
        %4795 = vmatprep.subr.mxu0 0.0
        %4796 = vmatpush2.msra.mxu0 0.0
        %4797 = vmatprep.subr.mxu0 0.0
        %4798 = vmatpush2.msra.mxu0 0.0
        %4799 = vmatprep.subr.mxu0 0.0
        %4800 = vmatpush2.msra.mxu0 0.0
        %4801 = vmatprep.subr.mxu0 0.0
        %4802 = vmatpush2.msra.mxu0 0.0
        %4803 = vmatprep.subr.mxu0 0.0
        %4804 = vmatpush2.msra.mxu0 0.0
        %4805 = vmatprep.subr.mxu0 0.0
        %4806 = vmatpush2.msra.mxu0 0.0
        %4807 = vmatprep.subr.mxu0 0.0
        %4808 = vmatpush2.msra.mxu0 0.0
        %4809 = vmatprep.subr.mxu0 0.0
        %4810 = vmatpush2.msra.mxu0 0.0
        %4811 = vmatprep.subr.mxu0 0.0
        %4812 = vmatpush2.msra.mxu0 0.0
        %4813 = vmatprep.subr.mxu0 0.0
        %4814 = vmatpush2.msra.mxu0 0.0
        %4815 = vmatprep.mubr.f32.mxu0 0.0
        %4816 = vmatmul.mubr.f32.gmra.mxu0 %v4704
        %v4817 = vpop.f32.mrf.mxu0
        %v4818 = vadd.f32 %v270, %v4817
        %v4819 = vpop.f32.mrf.mxu0
        %4820 = vmatprep.mubr.f32.mxu0 0.0
        %4821 = vmatmul.mubr.f32.gmra.mxu0 %v4707
        %v4822 = vpop.f32.mrf.mxu0
        %v4823 = vadd.f32 %v270, %v4822
        %v4824 = vpop.f32.mrf.mxu0
        %4825 = vmatprep.mubr.f32.mxu0 0.0
        %4826 = vmatmul.mubr.f32.gmra.mxu0 %v4710
        %v4827 = vpop.f32.mrf.mxu0
        %v4828 = vadd.f32 %v270, %v4827
        %v4829 = vpop.f32.mrf.mxu0
        %4830 = vmatprep.mubr.f32.mxu0 0.0
        %4831 = vmatmul.mubr.f32.gmra.mxu0 %v4713
        %v4832 = vpop.f32.mrf.mxu0
        %v4833 = vadd.f32 %v270, %v4832
        %v4834 = vpop.f32.mrf.mxu0
        %4835 = vmatprep.mubr.f32.mxu0 0.0
        %4836 = vmatmul.mubr.f32.gmra.mxu0 %v4716
        %v4837 = vpop.f32.mrf.mxu0
        %v4838 = vadd.f32 %v270, %v4837
        %v4839 = vpop.f32.mrf.mxu0
        %4840 = vmatprep.mubr.f32.mxu0 0.0
        %4841 = vmatmul.mubr.f32.gmra.mxu0 %v4719
        %v4842 = vpop.f32.mrf.mxu0
        %v4843 = vadd.f32 %v270, %v4842
        %v4844 = vpop.f32.mrf.mxu0
        %4845 = vmatprep.mubr.f32.mxu0 0.0
        %4846 = vmatmul.mubr.f32.gmra.mxu0 %v4722
        %v4847 = vpop.f32.mrf.mxu0
        %v4848 = vadd.f32 %v270, %v4847
        %v4849 = vpop.f32.mrf.mxu0
        %4850 = vmatprep.mubr.f32.mxu0 0.0
        %4851 = vmatmul.mubr.f32.gmra.mxu0 %v4725
        %v4852 = vpop.f32.mrf.mxu0
        %v4853 = vadd.f32 %v270, %v4852
        %v4854 = vpop.f32.mrf.mxu0
        %4855 = vmatprep.mubr.f32.mxu0 0.0
        %4856 = vmatmul.mubr.f32.gmra.mxu0 %v4728
        %v4857 = vpop.f32.mrf.mxu0
        %v4858 = vadd.f32 %v270, %v4857
        %v4859 = vpop.f32.mrf.mxu0
        %4860 = vmatprep.mubr.f32.mxu0 0.0
        %4861 = vmatmul.mubr.f32.gmra.mxu0 %v4731
        %v4862 = vpop.f32.mrf.mxu0
        %v4863 = vadd.f32 %v270, %v4862
        %v4864 = vpop.f32.mrf.mxu0
        %4865 = vmatprep.mubr.f32.mxu0 0.0
        %4866 = vmatmul.mubr.f32.gmra.mxu0 %v4734
        %v4867 = vpop.f32.mrf.mxu0
        %v4868 = vadd.f32 %v270, %v4867
        %v4869 = vpop.f32.mrf.mxu0
        %4870 = vmatprep.mubr.f32.mxu0 0.0
        %4871 = vmatmul.mubr.f32.gmra.mxu0 %v4737
        %v4872 = vpop.f32.mrf.mxu0
        %v4873 = vadd.f32 %v270, %v4872
        %v4874 = vpop.f32.mrf.mxu0
        %4875 = vmatprep.mubr.f32.mxu0 0.0
        %4876 = vmatmul.mubr.f32.gmra.mxu0 %v4740
        %v4877 = vpop.f32.mrf.mxu0
        %v4878 = vadd.f32 %v270, %v4877
        %v4879 = vpop.f32.mrf.mxu0
        %4880 = vmatprep.mubr.f32.mxu0 0.0
        %4881 = vmatmul.mubr.f32.gmra.mxu0 %v4743
        %v4882 = vpop.f32.mrf.mxu0
        %v4883 = vadd.f32 %v270, %v4882
        %v4884 = vpop.f32.mrf.mxu0
        %4885 = vmatprep.mubr.f32.mxu0 0.0
        %4886 = vmatmul.mubr.f32.gmra.mxu0 %v4746
        %v4887 = vpop.f32.mrf.mxu0
        %v4888 = vadd.f32 %v270, %v4887
        %v4889 = vpop.f32.mrf.mxu0
        %4890 = vmatprep.mubr.f32.mxu0 0.0
        %4891 = vmatmul.mubr.f32.gmra.mxu0 %v4749
        %v4892 = vpop.f32.mrf.mxu0
        %v4893 = vadd.f32 %v270, %v4892
        %v4894 = vpop.f32.mrf.mxu0
        %4895 = vdwg.mxu0
        %v4896 = vmax.f32 %v4818, 0.0
        %v4897 = vmax.f32 %v4823, 0.0
        %v4898 = vmax.f32 %v4828, 0.0
        %v4899 = vmax.f32 %v4833, 0.0
        %v4900 = vmax.f32 %v4838, 0.0
        %v4901 = vmax.f32 %v4843, 0.0
        %v4902 = vmax.f32 %v4848, 0.0
        %v4903 = vmax.f32 %v4853, 0.0
        %v4904 = vmax.f32 %v4858, 0.0
        %v4905 = vmax.f32 %v4863, 0.0
        %v4906 = vmax.f32 %v4868, 0.0
        %v4907 = vmax.f32 %v4873, 0.0
        %v4908 = vmax.f32 %v4878, 0.0
        %v4909 = vmax.f32 %v4883, 0.0
        %v4910 = vmax.f32 %v4888, 0.0
        %v4911 = vmax.f32 %v4893, 0.0
        %v4913 = vsel %vm276, %v4896, 0
        %v4916 = vsel %vm276, %v4897, 0
        %v4919 = vsel %vm276, %v4898, 0
        %v4922 = vsel %vm276, %v4899, 0
        %v4925 = vsel %vm276, %v4900, 0
        %v4928 = vsel %vm276, %v4901, 0
        %v4931 = vsel %vm276, %v4902, 0
        %v4934 = vsel %vm276, %v4903, 0
        %v4937 = vsel %vm276, %v4904, 0
        %v4940 = vsel %vm276, %v4905, 0
        %v4943 = vsel %vm276, %v4906, 0
        %v4946 = vsel %vm276, %v4907, 0
        %v4949 = vsel %vm276, %v4908, 0
        %v4952 = vsel %vm276, %v4909, 0
        %v4955 = vsel %vm276, %v4910, 0
        %v4958 = vsel %vm276, %v4911, 0
        %4960 = vmatprep.subr.mxu0 0.0
        %4961 = vmatpush1.msra.mxu0 0.0
        %4962 = vmatprep.subr.mxu0 0.0
        %4963 = vmatpush1.msra.mxu0 0.0
        %4964 = vmatprep.subr.mxu0 0.0
        %4965 = vmatpush1.msra.mxu0 0.0
        %4966 = vmatprep.subr.mxu0 0.0
        %4967 = vmatpush1.msra.mxu0 0.0
        %4968 = vmatprep.subr.mxu0 0.0
        %4969 = vmatpush1.msra.mxu0 0.0
        %4970 = vmatprep.subr.mxu0 0.0
        %4971 = vmatpush1.msra.mxu0 0.0
        %4972 = vmatprep.subr.mxu0 0.0
        %4973 = vmatpush1.msra.mxu0 0.0
        %4974 = vmatprep.subr.mxu0 0.0
        %4975 = vmatpush1.msra.mxu0 0.0
        %4976 = vmatprep.subr.mxu0 0.0
        %4977 = vmatpush1.msra.mxu0 0.0
        %4978 = vmatprep.subr.mxu0 0.0
        %4979 = vmatpush1.msra.mxu0 0.0
        %4980 = vmatprep.subr.mxu0 0.0
        %4981 = vmatpush1.msra.mxu0 0.0
        %4982 = vmatprep.subr.mxu0 0.0
        %4983 = vmatpush1.msra.mxu0 0.0
        %4984 = vmatprep.subr.mxu0 0.0
        %4985 = vmatpush1.msra.mxu0 %v250
        %4986 = vmatprep.subr.mxu0 0.0
        %4987 = vmatpush1.msra.mxu0 %v249
        %4988 = vmatprep.subr.mxu0 0.0
        %4989 = vmatpush1.msra.mxu0 %v248
        %4990 = vmatprep.subr.mxu0 0.0
        %4991 = vmatpush1.msra.mxu0 %v247
        %4992 = vmatprep.subr.mxu0 0.0
        %4993 = vmatpush2.msra.mxu0 0.0
        %4994 = vmatprep.subr.mxu0 0.0
        %4995 = vmatpush2.msra.mxu0 0.0
        %4996 = vmatprep.subr.mxu0 0.0
        %4997 = vmatpush2.msra.mxu0 0.0
        %4998 = vmatprep.subr.mxu0 0.0
        %4999 = vmatpush2.msra.mxu0 0.0
        %5000 = vmatprep.subr.mxu0 0.0
        %5001 = vmatpush2.msra.mxu0 0.0
        %5002 = vmatprep.subr.mxu0 0.0
        %5003 = vmatpush2.msra.mxu0 0.0
        %5004 = vmatprep.subr.mxu0 0.0
        %5005 = vmatpush2.msra.mxu0 0.0
        %5006 = vmatprep.subr.mxu0 0.0
        %5007 = vmatpush2.msra.mxu0 0.0
        %5008 = vmatprep.subr.mxu0 0.0
        %5009 = vmatpush2.msra.mxu0 0.0
        %5010 = vmatprep.subr.mxu0 0.0
        %5011 = vmatpush2.msra.mxu0 0.0
        %5012 = vmatprep.subr.mxu0 0.0
        %5013 = vmatpush2.msra.mxu0 0.0
        %5014 = vmatprep.subr.mxu0 0.0
        %5015 = vmatpush2.msra.mxu0 0.0
        %5016 = vmatprep.subr.mxu0 0.0
        %5017 = vmatpush2.msra.mxu0 0.0
        %5018 = vmatprep.subr.mxu0 0.0
        %5019 = vmatpush2.msra.mxu0 0.0
        %5020 = vmatprep.subr.mxu0 0.0
        %5021 = vmatpush2.msra.mxu0 0.0
        %5022 = vmatprep.subr.mxu0 0.0
        %5023 = vmatpush2.msra.mxu0 0.0
        %5024 = vmatprep.mubr.f32.mxu0 0.0
        %5025 = vmatmul.mubr.f32.gmra.mxu0 %v4913
        %v5026 = vpop.f32.mrf.mxu0
        %v5027 = vadd.f32 %v275, %v5026
        %v5028 = vpop.f32.mrf.mxu0
        %5029 = vmatprep.mubr.f32.mxu0 0.0
        %5030 = vmatmul.mubr.f32.gmra.mxu0 %v4916
        %v5031 = vpop.f32.mrf.mxu0
        %v5032 = vadd.f32 %v275, %v5031
        %v5033 = vpop.f32.mrf.mxu0
        %5034 = vmatprep.mubr.f32.mxu0 0.0
        %5035 = vmatmul.mubr.f32.gmra.mxu0 %v4919
        %v5036 = vpop.f32.mrf.mxu0
        %v5037 = vadd.f32 %v275, %v5036
        %v5038 = vpop.f32.mrf.mxu0
        %5039 = vmatprep.mubr.f32.mxu0 0.0
        %5040 = vmatmul.mubr.f32.gmra.mxu0 %v4922
        %v5041 = vpop.f32.mrf.mxu0
        %v5042 = vadd.f32 %v275, %v5041
        %v5043 = vpop.f32.mrf.mxu0
        %5044 = vmatprep.mubr.f32.mxu0 0.0
        %5045 = vmatmul.mubr.f32.gmra.mxu0 %v4925
        %v5046 = vpop.f32.mrf.mxu0
        %v5047 = vadd.f32 %v275, %v5046
        %v5048 = vpop.f32.mrf.mxu0
        %5049 = vmatprep.mubr.f32.mxu0 0.0
        %5050 = vmatmul.mubr.f32.gmra.mxu0 %v4928
        %v5051 = vpop.f32.mrf.mxu0
        %v5052 = vadd.f32 %v275, %v5051
        %v5053 = vpop.f32.mrf.mxu0
        %5054 = vmatprep.mubr.f32.mxu0 0.0
        %5055 = vmatmul.mubr.f32.gmra.mxu0 %v4931
        %v5056 = vpop.f32.mrf.mxu0
        %v5057 = vadd.f32 %v275, %v5056
        %v5058 = vpop.f32.mrf.mxu0
        %5059 = vmatprep.mubr.f32.mxu0 0.0
        %5060 = vmatmul.mubr.f32.gmra.mxu0 %v4934
        %v5061 = vpop.f32.mrf.mxu0
        %v5062 = vadd.f32 %v275, %v5061
        %v5063 = vpop.f32.mrf.mxu0
        %5064 = vmatprep.mubr.f32.mxu0 0.0
        %5065 = vmatmul.mubr.f32.gmra.mxu0 %v4937
        %v5066 = vpop.f32.mrf.mxu0
        %v5067 = vadd.f32 %v275, %v5066
        %v5068 = vpop.f32.mrf.mxu0
        %5069 = vmatprep.mubr.f32.mxu0 0.0
        %5070 = vmatmul.mubr.f32.gmra.mxu0 %v4940
        %v5071 = vpop.f32.mrf.mxu0
        %v5072 = vadd.f32 %v275, %v5071
        %v5073 = vpop.f32.mrf.mxu0
        %5074 = vmatprep.mubr.f32.mxu0 0.0
        %5075 = vmatmul.mubr.f32.gmra.mxu0 %v4943
        %v5076 = vpop.f32.mrf.mxu0
        %v5077 = vadd.f32 %v275, %v5076
        %v5078 = vpop.f32.mrf.mxu0
        %5079 = vmatprep.mubr.f32.mxu0 0.0
        %5080 = vmatmul.mubr.f32.gmra.mxu0 %v4946
        %v5081 = vpop.f32.mrf.mxu0
        %v5082 = vadd.f32 %v275, %v5081
        %v5083 = vpop.f32.mrf.mxu0
        %5084 = vmatprep.mubr.f32.mxu0 0.0
        %5085 = vmatmul.mubr.f32.gmra.mxu0 %v4949
        %v5086 = vpop.f32.mrf.mxu0
        %v5087 = vadd.f32 %v275, %v5086
        %v5088 = vpop.f32.mrf.mxu0
        %5089 = vmatprep.mubr.f32.mxu0 0.0
        %5090 = vmatmul.mubr.f32.gmra.mxu0 %v4952
        %v5091 = vpop.f32.mrf.mxu0
        %v5092 = vadd.f32 %v275, %v5091
        %v5093 = vpop.f32.mrf.mxu0
        %5094 = vmatprep.mubr.f32.mxu0 0.0
        %5095 = vmatmul.mubr.f32.gmra.mxu0 %v4955
        %v5096 = vpop.f32.mrf.mxu0
        %v5097 = vadd.f32 %v275, %v5096
        %v5098 = vpop.f32.mrf.mxu0
        %5099 = vmatprep.mubr.f32.mxu0 0.0
        %5100 = vmatmul.mubr.f32.gmra.mxu0 %v4958
        %v5101 = vpop.f32.mrf.mxu0
        %v5102 = vadd.f32 %v275, %v5101
        %v5103 = vpop.f32.mrf.mxu0
        %5104 = vdwg.mxu0
        %5105 = vst.msk [vmem:[%s210] sm:$0xff] %vm276, %v5027
        %5106 = vst.msk [vmem:[%s210 + $0x8] sm:$0xff] %vm276, %v5032
        %5107 = vst.msk [vmem:[%s210 + $0x10] sm:$0xff] %vm276, %v5037
        %5108 = vst.msk [vmem:[%s210 + $0x18] sm:$0xff] %vm276, %v5042
        %5109 = vst.msk [vmem:[%s210 + $0x20] sm:$0xff] %vm276, %v5047
        %5110 = vst.msk [vmem:[%s210 + $0x28] sm:$0xff] %vm276, %v5052
        %5111 = vst.msk [vmem:[%s210 + $0x30] sm:$0xff] %vm276, %v5057
        %5112 = vst.msk [vmem:[%s210 + $0x38] sm:$0xff] %vm276, %v5062
        %5113 = vst.msk [vmem:[%s210 + $0x40] sm:$0xff] %vm276, %v5067
        %5114 = vst.msk [vmem:[%s210 + $0x48] sm:$0xff] %vm276, %v5072
        %5115 = vst.msk [vmem:[%s210 + $0x50] sm:$0xff] %vm276, %v5077
        %5116 = vst.msk [vmem:[%s210 + $0x58] sm:$0xff] %vm276, %v5082
        %5117 = vst.msk [vmem:[%s210 + $0x60] sm:$0xff] %vm276, %v5087
        %5118 = vst.msk [vmem:[%s210 + $0x68] sm:$0xff] %vm276, %v5092
        %5119 = vst.msk [vmem:[%s210 + $0x70] sm:$0xff] %vm276, %v5097
        %5120 = vst.msk [vmem:[%s210 + $0x78] sm:$0xff] %vm276, %v5102
        %p5121 = scmp.lt.s32.totalorder %s17, 1
        %s5122 = scalar_select %p5121, %s17, 1
        %s5123 = smul.addr %s5122, 16
        %s5124 = smul.addr %s5123, 8
        %s5125 = scalar_lea.vmem %s3, %s5124
        // Predicated region
        $region37: #{tpu_custom_call.1} parent=31 // pred_check
          %p5126 = pneg %p108
        $region38: #{tpu_custom_call.1} parent=31 // pred_check_branch
          %5128 = sbr.rel (%p5126) target = $region40
        $region39: #{tpu_custom_call.1} parent=31 // pred_region
          _
        $region40: #{tpu_custom_call.1} parent=31 // pred_fallthru
          _
      $region32: #{tpu_custom_call.1} parent=5 // pred_fallthru
        _
      %p5129 = scmp.le.s32.totalorder 2, %s12
      // Predicated region
      $region41: #{tpu_custom_call.1} parent=5 // pred_check
        %p5130 = pneg %p5129
      $region42: #{tpu_custom_call.1} parent=5 // pred_check_branch
        %5132 = sbr.rel (%p5130) target = $region44
      $region43: #{tpu_custom_call.1} parent=5 // pred_region
        %s5133 = ssub.s32 %s12, 2
        // Predicated region
        $region45: #{tpu_custom_call.1} parent=43 // pred_check
          %p5134 = pneg %p114
        $region46: #{tpu_custom_call.1} parent=43 // pred_check_branch
          %5136 = sbr.rel (%p5134) target = $region48
        $region47: #{tpu_custom_call.1} parent=43 // pred_region
          %p5137 = scmp.lt.s32.totalorder %s18, 1
          %s5138 = scalar_select %p5137, %s18, 1
          %s5139 = smul.addr %s5138, 16
          %s5140 = smul.addr %s5139, 8
          %s5141 = scalar_lea.vmem %s3, %s5140
        $region48: #{tpu_custom_call.1} parent=43 // pred_fallthru
          _
      $region44: #{tpu_custom_call.1} parent=5 // pred_fallthru
        _
    $region6: #{tpu_custom_call.1} parent=1 // loop_footer
      %s16 = sadd.s32 1, %s12
    $region7: #{tpu_custom_call.1} parent=1 // loop_footer_branch
      %11 = sbr.rel target = $region3
    $region8: #{tpu_custom_call.1} parent=1 // loop_exit
      _
    %5142 = vsyncpa [#allocation3], 1
    %s5143 = scalar_lea.sflag [#allocation3], 1
    %5144 = vsyncpa %s5143, 1

</llo_original>
